<compile_context>
chip_gen: v7x
topology: tpu7x:2x2x1
jax: 0.10.0
libtpu: 0.0.40
codegen_flags: <defaults>
</compile_context>

<pallas_src>
import jax
import jax.numpy as jnp
from jax import lax
from jax.experimental import pallas as pl
from jax.experimental.pallas import tpu as pltpu


def _crf_llh_kernel(em_ref, tags_ref, mask_ref, start_ref, end_ref,
                    expt_ref, tmaxc_ref, trans_sm,
                    llh_ref, den_sc, num_sc, lt_sc, prevtag_sc):
    """One (batch-block, time-chunk) grid cell.

    em_ref   : (ts, T, B)  emissions chunk (batch on lanes)
    tags_ref : (ts, B) int32      mask_ref: (ts, B) f32 (0/1 prefix mask)
    start_ref: (T, 1)             end_ref : (T, 1)
    expt_ref : (T, T)  exp(trans.T - colmax)      tmaxc_ref: (T, 1) colmax
    trans_sm : (T*T,) f32 in SMEM, trans_sm[p*T + c] = transitions[p, c]
    llh_ref  : (1, B)  written on the last time chunk
    scratch  : den (T,B) forward log-alphas, num (1,B) gold-path score,
               lt (1,B) last valid tag, prevtag (1,B) last tag of previous chunk.
    """
    s_idx = pl.program_id(1)
    n_s = pl.num_programs(1)
    ts, T, B = em_ref.shape

    exp_trans_t = expt_ref[...]                                   # (T, T)
    tmax_col = tmaxc_ref[...]                                     # (T, 1)
    start_col = start_ref[...]                                    # (T, 1)

    iota_t = lax.broadcasted_iota(jnp.int32, (T, B), 0)           # hoisted

    # ---- init carries at the first time chunk of this batch block ----
    @pl.when(s_idx == 0)
    def _():
        em0 = em_ref[0].astype(jnp.float32)                       # (T, B)
        tag0 = tags_ref[pl.ds(0, 1), :]                           # (1, B)
        oh0 = (tag0 == iota_t).astype(jnp.float32)                # (T, B)
        den_sc[...] = start_col + em0
        num_sc[...] = jnp.sum(oh0 * (start_col + em0), axis=0, keepdims=True)
        lt_sc[...] = tag0
        prevtag_sc[...] = tag0     # value irrelevant at chunk 0 (gated below)

    # ---- hoisted gold-path transition term: whole chunk, no matmul in the loop ----
    tags_c = tags_ref[...]                                        # (ts, B) int32
    mask_c = mask_ref[...]                                        # (ts, B) f32
    row = lax.broadcasted_iota(jnp.int32, (ts, B), 0)
    # global step 0 has no incoming transition
    g = jnp.where((row == 0) & (s_idx == 0), 0.0, mask_c)
    rolled = pltpu.roll(tags_c, shift=1, axis=0)
    tags_prev = jnp.where(row == 0, prevtag_sc[...], rolled)      # (ts, B)
    flat = tags_prev * T + tags_c
    tsel = jnp.zeros((ts, B), jnp.float32)
    # T^2 scalar compare+selects from SMEM (fine for typical NER tag sets; for
    # very large T one would switch this to an MXU-based gather).
    for k in range(T * T):
        tsel = jnp.where(flat == k, trans_sm[k], tsel)
    trans_add = jnp.sum(tsel * g, axis=0, keepdims=True)          # (1, B)

    # ---- serial forward recursion over this chunk ----
    def body(i, carry):
        den, num, lt = carry
        m = mask_ref[pl.ds(i, 1), :]                              # (1, B)
        em_i = em_ref[i].astype(jnp.float32)                      # (T, B)
        tag_i = tags_ref[pl.ds(i, 1), :]                          # (1, B)
        oh_i = (tag_i == iota_t).astype(jnp.float32)              # (T, B)

        # numerator emission gather + last-tag track: ride idle VPU/XLU slots,
        # do not feed the den critical path.
        num = num + jnp.sum(oh_i * em_i, axis=0, keepdims=True) * m
        lt = jnp.where(m > 0.0, tag_i, lt)

        # denominator recursion (critical path): exp-domain MXU logsumexp,
        # per-column transition max -> overflow/underflow safe.
        mx = jnp.max(den, axis=0, keepdims=True)                  # (1, B)
        alpha = jnp.exp(den - mx)                                 # (T, B)
        raw = jnp.dot(exp_trans_t, alpha, preferred_element_type=jnp.float32)
        nxt = jnp.log(raw) + mx + tmax_col + em_i                 # (T, B)
        den = jnp.where(m > 0.0, nxt, den)
        return den, num, lt

    unroll = True if ts <= 16 else 4

    def run_chunk(lo):
        den0 = den_sc[...]
        num0 = num_sc[...] + trans_add
        lt0 = lt_sc[...]
        den_f, num_f, lt_f = lax.fori_loop(lo, ts, body, (den0, num0, lt0),
                                           unroll=unroll)
        den_sc[...] = den_f
        num_sc[...] = num_f
        lt_sc[...] = lt_f

    @pl.when(s_idx == 0)
    def _():
        run_chunk(1)          # global step 0 fully handled by the init block

    @pl.when(s_idx > 0)
    def _():
        run_chunk(0)

    # carry the boundary tag for the next chunk's row-0 transition
    prevtag_sc[...] = tags_ref[pl.ds(ts - 1, 1), :]

    # ---- finalize on the last time chunk of this batch block ----
    @pl.when(s_idx == n_s - 1)
    def _():
        end_col = end_ref[...]                                    # (T, 1)
        end_oh = (lt_sc[...] == iota_t).astype(jnp.float32)       # (T, B)
        numer = num_sc[...] + jnp.sum(end_col * end_oh, axis=0, keepdims=True)
        denf = den_sc[...] + end_col
        mxf = jnp.max(denf, axis=0, keepdims=True)
        logz = mxf + jnp.log(jnp.sum(jnp.exp(denf - mxf), axis=0, keepdims=True))
        llh_ref[...] = numer - logz


def crf_forward(emissions, tags, mask, start_transitions, end_transitions,
                transitions, reduction="mean", time_block=128):
    """Equivalent of CRF.forward (batch_first=False).

    emissions: (S, B, T) float (f32 or bf16); tags: (S, B) int;
    mask: (S, B) {0,1} contiguous prefix mask with mask[0] all ones.
    """
    S, B, T = emissions.shape
    mask_f = mask.astype(jnp.float32)
    mask_total = jnp.sum(mask_f)                     # for token_mean

    # TODO(synk): layout plumbing — prefer producing (S, T, B) upstream to avoid
    # this extra HBM pass over the largest tensor.
    em_tb = jnp.transpose(emissions, (0, 2, 1))      # (S, T, B): batch -> lanes
    tags_i = tags.astype(jnp.int32)
    mask_p = mask_f

    # ---- batch tiling (lanes).  Prefer >= 2 grid steps on the "parallel" axis
    # so the v7x megacore can split the batch across both TensorCores.  B <= 128
    # gives a single batch block (half a v7x chip idles; fine on v5e/v6e).
    if B % 128 == 0 and B >= 256:
        tb = max(128, min(512, (B // 2) // 128 * 128))
    else:
        tb = B
    n_b = B // tb

    # ---- time chunking, bounded by a conservative VMEM budget (double-buffered
    # emissions + tags + mask).  Larger chunks amortize per-grid-step overhead.
    itemsize = jnp.dtype(emissions.dtype).itemsize
    ts_req = max(8, (int(time_block) // 8) * 8)
    per_step_bytes = T * tb * itemsize + tb * 4 + tb * 4
    budget_bytes = 20 * 1024 * 1024
    ts_cap = max(8, (budget_bytes // (2 * per_step_bytes)) // 8 * 8)
    ts_req = min(ts_req, ts_cap)
    if S <= ts_req:
        ts, s_pad = S, S
    else:
        ts = ts_req
        s_pad = ((S + ts - 1) // ts) * ts
    if s_pad != S:
        p = s_pad - S
        em_tb = jnp.pad(em_tb, ((0, p), (0, 0), (0, 0)))
        tags_i = jnp.pad(tags_i, ((0, p), (0, 0)))
        mask_p = jnp.pad(mask_p, ((0, p), (0, 0)))   # padded steps masked off
    n_s = s_pad // ts

    # ---- transition preprocessing (once, in the wrapper) ----
    trans_f = transitions.astype(jnp.float32)
    trans_t = trans_f.T                              # [cur, prev]
    tmax_col = jnp.max(trans_t, axis=1, keepdims=True)          # (T, 1) per-cur max
    exp_trans_t = jnp.exp(trans_t - tmax_col)                   # rows in (0, 1]
    start_col = start_transitions.reshape(T, 1).astype(jnp.float32)
    end_col = end_transitions.reshape(T, 1).astype(jnp.float32)
    trans_flat = trans_f.reshape(-1)                 # SMEM table, [p*T + c]

    llh = pl.pallas_call(
        _crf_llh_kernel,
        out_shape=jax.ShapeDtypeStruct((1, B), jnp.float32),
        grid_spec=pltpu.PrefetchScalarGridSpec(
            num_scalar_prefetch=0,
            grid=(n_b, n_s),
            in_specs=[
                pl.BlockSpec((ts, T, tb), lambda b, s: (s, 0, b)),   # emissions
                pl.BlockSpec((ts, tb), lambda b, s: (s, b)),         # tags
                pl.BlockSpec((ts, tb), lambda b, s: (s, b)),         # mask
                pl.BlockSpec((T, 1), lambda b, s: (0, 0)),           # start
                pl.BlockSpec((T, 1), lambda b, s: (0, 0)),           # end
                pl.BlockSpec((T, T), lambda b, s: (0, 0)),           # exp(trans.T - colmax)
                pl.BlockSpec((T, 1), lambda b, s: (0, 0)),           # colmax
                pl.BlockSpec(memory_space=pltpu.MemorySpace.SMEM),   # trans scalars
            ],
            out_specs=pl.BlockSpec((1, tb), lambda b, s: (0, b)),
            scratch_shapes=[
                pltpu.VMEM((T, tb), jnp.float32),    # den  (forward log-alphas)
                pltpu.VMEM((1, tb), jnp.float32),    # num  (gold-path score)
                pltpu.VMEM((1, tb), jnp.int32),      # last valid tag
                pltpu.VMEM((1, tb), jnp.int32),      # previous-chunk boundary tag
            ],
        ),
        compiler_params=pltpu.CompilerParams(
            dimension_semantics=("parallel", "arbitrary"),
            vmem_limit_bytes=40 * 1024 * 1024,
        ),
    )(em_tb, tags_i, mask_p, start_col, end_col, exp_trans_t, tmax_col, trans_flat)

    llh = llh[0]                                     # (B,)
    if reduction == "none":
        return llh
    if reduction == "sum":
        return jnp.sum(llh)
    if reduction == "mean":
        return jnp.mean(llh)
    return jnp.sum(llh) / mask_total                 # token_mean


# ---------------- pure-JAX reference (mirrors the PyTorch module) ----------------
def crf_llh_ref(emissions, tags, mask, start_t, end_t, trans):
    S, B, T = emissions.shape
    maskf = mask.astype(jnp.float32)
    # numerator (_compute_score)
    score = start_t[tags[0]] + emissions[0, jnp.arange(B), tags[0]]
    for i in range(1, S):
        score = score + trans[tags[i - 1], tags[i]] * maskf[i]
        score = score + emissions[i, jnp.arange(B), tags[i]] * maskf[i]
    seq_ends = jnp.sum(mask.astype(jnp.int32), axis=0) - 1
    last_tags = tags[seq_ends, jnp.arange(B)]
    score = score + end_t[last_tags]
    # denominator (_compute_normalizer)
    s = start_t + emissions[0]
    for i in range(1, S):
        nxt = jax.nn.logsumexp(
            s[:, :, None] + trans[None, :, :] + emissions[i][:, None, :], axis=1)
        s = jnp.where(maskf[i][:, None] > 0, nxt, s)
    s = s + end_t
    return score - jax.nn.logsumexp(s, axis=1)


if __name__ == "__main__":
    # small but non-trivial: S=20 with time_block=8 exercises the streaming grid
    # (3 time chunks) AND the sequence-padding path (S padded 20 -> 24).
    S, B, T = 20, 4, 5
    key = jax.random.PRNGKey(0)
    k_em, k_tag, k_s, k_e, k_t = jax.random.split(key, 5)

    emissions = jax.random.normal(k_em, (S, B, T), dtype=jnp.float32)
    tags = jax.random.randint(k_tag, (S, B), 0, T, dtype=jnp.int32)

    # variable-length prefix mask; first timestep must be all on (module requirement)
    lengths = jnp.array([20, 13, 9, 5], dtype=jnp.int32)
    mask = (jnp.arange(S)[:, None] < lengths[None, :]).astype(jnp.uint8)

    # nn.init.uniform_(-0.1, 0.1) equivalents
    start_transitions = jax.random.uniform(k_s, (T,), jnp.float32, -0.1, 0.1)
    end_transitions = jax.random.uniform(k_e, (T,), jnp.float32, -0.1, 0.1)
    transitions = jax.random.uniform(k_t, (T, T), jnp.float32, -0.1, 0.1)

    llh_none = crf_forward(emissions, tags, mask, start_transitions,
                           end_transitions, transitions,
                           reduction="none", time_block=8)
    llh_none = jax.block_until_ready(llh_none)

    ref = crf_llh_ref(emissions, tags, mask, start_transitions,
                      end_transitions, transitions)
    assert jnp.allclose(llh_none, ref, atol=1e-4, rtol=1e-4), (llh_none, ref)

    out = crf_forward(emissions, tags, mask, start_transitions,
                      end_transitions, transitions,
                      reduction="mean", time_block=8)
    out = jax.block_until_ready(out)
    assert jnp.allclose(out, jnp.mean(ref), atol=1e-4, rtol=1e-4), (out, jnp.mean(ref))

    # TODO(synk): CRF.decode (Viterbi / n-best backtrace) is not part of forward()
    # and is not implemented here.
    print("KERNEL_OK")
</pallas_src>

<mosaic_0001>
module attributes {stable_mosaic.version = 11 : i64} {
  func.func @_crf_llh_kernel(%arg0: i32, %arg1: i32, %arg2: memref<8x5x4xf32, #tpu.memory_space<vmem>>, %arg3: memref<8x4xi32, #tpu.memory_space<vmem>>, %arg4: memref<8x4xf32, #tpu.memory_space<vmem>>, %arg5: memref<5x1xf32, #tpu.memory_space<vmem>>, %arg6: memref<5x1xf32, #tpu.memory_space<vmem>>, %arg7: memref<5x5xf32, #tpu.memory_space<vmem>>, %arg8: memref<5x1xf32, #tpu.memory_space<vmem>>, %arg9: memref<25xf32, #tpu.memory_space<smem>>, %arg10: memref<1x4xf32, #tpu.memory_space<vmem>>, %arg11: memref<5x4xf32, #tpu.memory_space<vmem>>, %arg12: memref<1x4xf32, #tpu.memory_space<vmem>>, %arg13: memref<1x4xi32, #tpu.memory_space<vmem>>, %arg14: memref<1x4xi32, #tpu.memory_space<vmem>>) attributes {dimension_semantics = [#tpu.dimension_semantics<parallel>, #tpu.dimension_semantics<arbitrary>], iteration_bounds = array<i64: 1, 3>, scalar_prefetch = 0 : i64, scratch_operands = 4 : i64, tpu.core_type = #tpu.core_type<tc>, window_params = [{transform_indices = @transform_0, window_bounds = array<i64: 8, 5, 4>}, {transform_indices = @transform_1, window_bounds = array<i64: 8, 4>}, {transform_indices = @transform_2, window_bounds = array<i64: 8, 4>}, {pipeline_mode = #tpu.pipeline_mode<synchronous>, transform_indices = @transform_3, window_bounds = array<i64: 5, 1>}, {pipeline_mode = #tpu.pipeline_mode<synchronous>, transform_indices = @transform_4, window_bounds = array<i64: 5, 1>}, {pipeline_mode = #tpu.pipeline_mode<synchronous>, transform_indices = @transform_5, window_bounds = array<i64: 5, 5>}, {pipeline_mode = #tpu.pipeline_mode<synchronous>, transform_indices = @transform_6, window_bounds = array<i64: 5, 1>}, {transform_indices = @transform_7, window_bounds = array<i64: 25>}, {transform_indices = @transform_8, window_bounds = array<i64: 1, 4>}]} {
    %c0 = arith.constant 0 : index
    %c0_0 = arith.constant 0 : index
    %0 = vector.load %arg7[%c0, %c0_0] : memref<5x5xf32, #tpu.memory_space<vmem>>, vector<5x5xf32>
    %c0_1 = arith.constant 0 : index
    %c0_2 = arith.constant 0 : index
    %1 = vector.load %arg8[%c0_1, %c0_2] : memref<5x1xf32, #tpu.memory_space<vmem>>, vector<5x1xf32>
    %c0_3 = arith.constant 0 : index
    %c0_4 = arith.constant 0 : index
    %2 = vector.load %arg5[%c0_3, %c0_4] : memref<5x1xf32, #tpu.memory_space<vmem>>, vector<5x1xf32>
    %3 = tpu.iota {dimensions = array<i32: 0>} : vector<5x4xi32>
    %c0_i32 = arith.constant 0 : i32
    %4 = arith.cmpi eq, %arg1, %c0_i32 : i32
    %5 = arith.extui %4 : i1 to i32
    %c0_i32_5 = arith.constant 0 : i32
    %6 = arith.cmpi ne, %5, %c0_i32_5 : i32
    scf.if %6 {
      %c0_31 = arith.constant 0 : index
      %c0_32 = arith.constant 0 : index
      %c0_33 = arith.constant 0 : index
      %167 = vector.load %arg2[%c0_31, %c0_32, %c0_33] : memref<8x5x4xf32, #tpu.memory_space<vmem>>, vector<1x5x4xf32>
      %168 = vector.shape_cast %167 : vector<1x5x4xf32> to vector<5x4xf32>
      %c0_34 = arith.constant 0 : index
      %c0_35 = arith.constant 0 : index
      %169 = vector.load %arg3[%c0_34, %c0_35] : memref<8x4xi32, #tpu.memory_space<vmem>>, vector<1x4xi32>
      %170 = vector.broadcast %169 : vector<1x4xi32> to vector<5x4xi32>
      %171 = arith.cmpi eq, %170, %3 : vector<5x4xi32>
      %172 = arith.extui %171 : vector<5x4xi1> to vector<5x4xi32>
      %173 = arith.sitofp %172 : vector<5x4xi32> to vector<5x4xf32>
      %174 = vector.broadcast %2 : vector<5x1xf32> to vector<5x4xf32>
      %175 = arith.addf %174, %168 : vector<5x4xf32>
      %c0_36 = arith.constant 0 : index
      %c0_37 = arith.constant 0 : index
      %176 = vector.load %arg11[%c0_36, %c0_37] : memref<5x4xf32, #tpu.memory_space<vmem>>, vector<5x4xf32>
      tpu.vector_store %arg11[%c0_36, %c0_37], %175 {strides = array<i32>} : memref<5x4xf32, #tpu.memory_space<vmem>>, vector<5x4xf32>,
      %177 = vector.broadcast %2 : vector<5x1xf32> to vector<5x4xf32>
      %178 = arith.addf %177, %168 : vector<5x4xf32>
      %179 = arith.mulf %173, %178 : vector<5x4xf32>
      %cst_38 = arith.constant dense<0.000000e+00> : vector<4xf32>
      %180 = vector.multi_reduction <add>, %179, %cst_38 [0] : vector<5x4xf32> to vector<4xf32>
      %181 = vector.shape_cast %180 : vector<4xf32> to vector<1x4xf32>
      %c0_39 = arith.constant 0 : index
      %c0_40 = arith.constant 0 : index
      %182 = vector.load %arg12[%c0_39, %c0_40] : memref<1x4xf32, #tpu.memory_space<vmem>>, vector<1x4xf32>
      tpu.vector_store %arg12[%c0_39, %c0_40], %181 {strides = array<i32>} : memref<1x4xf32, #tpu.memory_space<vmem>>, vector<1x4xf32>,
      %c0_41 = arith.constant 0 : index
      %c0_42 = arith.constant 0 : index
      %183 = vector.load %arg13[%c0_41, %c0_42] : memref<1x4xi32, #tpu.memory_space<vmem>>, vector<1x4xi32>
      tpu.vector_store %arg13[%c0_41, %c0_42], %169 {strides = array<i32>} : memref<1x4xi32, #tpu.memory_space<vmem>>, vector<1x4xi32>,
      %c0_43 = arith.constant 0 : index
      %c0_44 = arith.constant 0 : index
      %184 = vector.load %arg14[%c0_43, %c0_44] : memref<1x4xi32, #tpu.memory_space<vmem>>, vector<1x4xi32>
      tpu.vector_store %arg14[%c0_43, %c0_44], %169 {strides = array<i32>} : memref<1x4xi32, #tpu.memory_space<vmem>>, vector<1x4xi32>,
    } else {
    }
    %c0_6 = arith.constant 0 : index
    %c0_7 = arith.constant 0 : index
    %7 = vector.load %arg3[%c0_6, %c0_7] : memref<8x4xi32, #tpu.memory_space<vmem>>, vector<8x4xi32>
    %c0_8 = arith.constant 0 : index
    %c0_9 = arith.constant 0 : index
    %8 = vector.load %arg4[%c0_8, %c0_9] : memref<8x4xf32, #tpu.memory_space<vmem>>, vector<8x4xf32>
    %9 = tpu.iota {dimensions = array<i32: 0>} : vector<8x4xi32>
    %c0_i32_10 = arith.constant 0 : i32
    %10 = vector.broadcast %c0_i32_10 : i32 to vector<8x4xi32>
    %11 = arith.cmpi eq, %9, %10 : vector<8x4xi32>
    %c0_i32_11 = arith.constant 0 : i32
    %12 = arith.cmpi eq, %arg1, %c0_i32_11 : i32
    %13 = vector.broadcast %12 : i1 to vector<8x4xi1>
    %14 = arith.andi %11, %13 : vector<8x4xi1>
    %cst = arith.constant 0.000000e+00 : f32
    %15 = vector.broadcast %cst : f32 to vector<8x4xf32>
    %16 = arith.select %14, %15, %8 : vector<8x4xi1>, vector<8x4xf32>
    %c1_i32 = arith.constant 1 : i32
    %17 = tpu.dynamic_rotate %7 by %c1_i32 dim 0 : vector<8x4xi32>, i32 -> vector<8x4xi32>
    %c0_i32_12 = arith.constant 0 : i32
    %18 = vector.broadcast %c0_i32_12 : i32 to vector<8x4xi32>
    %19 = arith.cmpi eq, %9, %18 : vector<8x4xi32>
    %c0_13 = arith.constant 0 : index
    %c0_14 = arith.constant 0 : index
    %20 = vector.load %arg14[%c0_13, %c0_14] : memref<1x4xi32, #tpu.memory_space<vmem>>, vector<1x4xi32>
    %21 = vector.shape_cast %20 : vector<1x4xi32> to vector<1x4xi32>
    %22 = vector.broadcast %21 : vector<1x4xi32> to vector<8x4xi32>
    %23 = arith.select %19, %22, %17 : vector<8x4xi1>, vector<8x4xi32>
    %c5_i32 = arith.constant 5 : i32
    %24 = vector.broadcast %c5_i32 : i32 to vector<8x4xi32>
    %25 = arith.muli %23, %24 : vector<8x4xi32>
    %26 = arith.addi %25, %7 : vector<8x4xi32>
    %cst_15 = arith.constant 0.000000e+00 : f32
    %27 = vector.broadcast %cst_15 : f32 to vector<8x4xf32>
    %c0_i32_16 = arith.constant 0 : i32
    %28 = vector.broadcast %c0_i32_16 : i32 to vector<8x4xi32>
    %29 = arith.cmpi eq, %26, %28 : vector<8x4xi32>
    %c0_17 = arith.constant 0 : index
    %30 = memref.load %arg9[%c0_17] : memref<25xf32, #tpu.memory_space<smem>>
    %31 = vector.broadcast %30 : f32 to vector<8x4xf32>
    %32 = arith.select %29, %31, %27 : vector<8x4xi1>, vector<8x4xf32>
    %c1_i32_18 = arith.constant 1 : i32
    %33 = vector.broadcast %c1_i32_18 : i32 to vector<8x4xi32>
    %34 = arith.cmpi eq, %26, %33 : vector<8x4xi32>
    %c1 = arith.constant 1 : index
    %35 = memref.load %arg9[%c1] : memref<25xf32, #tpu.memory_space<smem>>
    %36 = vector.broadcast %35 : f32 to vector<8x4xf32>
    %37 = arith.select %34, %36, %32 : vector<8x4xi1>, vector<8x4xf32>
    %c2_i32 = arith.constant 2 : i32
    %38 = vector.broadcast %c2_i32 : i32 to vector<8x4xi32>
    %39 = arith.cmpi eq, %26, %38 : vector<8x4xi32>
    %c2 = arith.constant 2 : index
    %40 = memref.load %arg9[%c2] : memref<25xf32, #tpu.memory_space<smem>>
    %41 = vector.broadcast %40 : f32 to vector<8x4xf32>
    %42 = arith.select %39, %41, %37 : vector<8x4xi1>, vector<8x4xf32>
    %c3_i32 = arith.constant 3 : i32
    %43 = vector.broadcast %c3_i32 : i32 to vector<8x4xi32>
    %44 = arith.cmpi eq, %26, %43 : vector<8x4xi32>
    %c3 = arith.constant 3 : index
    %45 = memref.load %arg9[%c3] : memref<25xf32, #tpu.memory_space<smem>>
    %46 = vector.broadcast %45 : f32 to vector<8x4xf32>
    %47 = arith.select %44, %46, %42 : vector<8x4xi1>, vector<8x4xf32>
    %c4_i32 = arith.constant 4 : i32
    %48 = vector.broadcast %c4_i32 : i32 to vector<8x4xi32>
    %49 = arith.cmpi eq, %26, %48 : vector<8x4xi32>
    %c4 = arith.constant 4 : index
    %50 = memref.load %arg9[%c4] : memref<25xf32, #tpu.memory_space<smem>>
    %51 = vector.broadcast %50 : f32 to vector<8x4xf32>
    %52 = arith.select %49, %51, %47 : vector<8x4xi1>, vector<8x4xf32>
    %c5_i32_19 = arith.constant 5 : i32
    %53 = vector.broadcast %c5_i32_19 : i32 to vector<8x4xi32>
    %54 = arith.cmpi eq, %26, %53 : vector<8x4xi32>
    %c5 = arith.constant 5 : index
    %55 = memref.load %arg9[%c5] : memref<25xf32, #tpu.memory_space<smem>>
    %56 = vector.broadcast %55 : f32 to vector<8x4xf32>
    %57 = arith.select %54, %56, %52 : vector<8x4xi1>, vector<8x4xf32>
    %c6_i32 = arith.constant 6 : i32
    %58 = vector.broadcast %c6_i32 : i32 to vector<8x4xi32>
    %59 = arith.cmpi eq, %26, %58 : vector<8x4xi32>
    %c6 = arith.constant 6 : index
    %60 = memref.load %arg9[%c6] : memref<25xf32, #tpu.memory_space<smem>>
    %61 = vector.broadcast %60 : f32 to vector<8x4xf32>
    %62 = arith.select %59, %61, %57 : vector<8x4xi1>, vector<8x4xf32>
    %c7_i32 = arith.constant 7 : i32
    %63 = vector.broadcast %c7_i32 : i32 to vector<8x4xi32>
    %64 = arith.cmpi eq, %26, %63 : vector<8x4xi32>
    %c7 = arith.constant 7 : index
    %65 = memref.load %arg9[%c7] : memref<25xf32, #tpu.memory_space<smem>>
    %66 = vector.broadcast %65 : f32 to vector<8x4xf32>
    %67 = arith.select %64, %66, %62 : vector<8x4xi1>, vector<8x4xf32>
    %c8_i32 = arith.constant 8 : i32
    %68 = vector.broadcast %c8_i32 : i32 to vector<8x4xi32>
    %69 = arith.cmpi eq, %26, %68 : vector<8x4xi32>
    %c8 = arith.constant 8 : index
    %70 = memref.load %arg9[%c8] : memref<25xf32, #tpu.memory_space<smem>>
    %71 = vector.broadcast %70 : f32 to vector<8x4xf32>
    %72 = arith.select %69, %71, %67 : vector<8x4xi1>, vector<8x4xf32>
    %c9_i32 = arith.constant 9 : i32
    %73 = vector.broadcast %c9_i32 : i32 to vector<8x4xi32>
    %74 = arith.cmpi eq, %26, %73 : vector<8x4xi32>
    %c9 = arith.constant 9 : index
    %75 = memref.load %arg9[%c9] : memref<25xf32, #tpu.memory_space<smem>>
    %76 = vector.broadcast %75 : f32 to vector<8x4xf32>
    %77 = arith.select %74, %76, %72 : vector<8x4xi1>, vector<8x4xf32>
    %c10_i32 = arith.constant 10 : i32
    %78 = vector.broadcast %c10_i32 : i32 to vector<8x4xi32>
    %79 = arith.cmpi eq, %26, %78 : vector<8x4xi32>
    %c10 = arith.constant 10 : index
    %80 = memref.load %arg9[%c10] : memref<25xf32, #tpu.memory_space<smem>>
    %81 = vector.broadcast %80 : f32 to vector<8x4xf32>
    %82 = arith.select %79, %81, %77 : vector<8x4xi1>, vector<8x4xf32>
    %c11_i32 = arith.constant 11 : i32
    %83 = vector.broadcast %c11_i32 : i32 to vector<8x4xi32>
    %84 = arith.cmpi eq, %26, %83 : vector<8x4xi32>
    %c11 = arith.constant 11 : index
    %85 = memref.load %arg9[%c11] : memref<25xf32, #tpu.memory_space<smem>>
    %86 = vector.broadcast %85 : f32 to vector<8x4xf32>
    %87 = arith.select %84, %86, %82 : vector<8x4xi1>, vector<8x4xf32>
    %c12_i32 = arith.constant 12 : i32
    %88 = vector.broadcast %c12_i32 : i32 to vector<8x4xi32>
    %89 = arith.cmpi eq, %26, %88 : vector<8x4xi32>
    %c12 = arith.constant 12 : index
    %90 = memref.load %arg9[%c12] : memref<25xf32, #tpu.memory_space<smem>>
    %91 = vector.broadcast %90 : f32 to vector<8x4xf32>
    %92 = arith.select %89, %91, %87 : vector<8x4xi1>, vector<8x4xf32>
    %c13_i32 = arith.constant 13 : i32
    %93 = vector.broadcast %c13_i32 : i32 to vector<8x4xi32>
    %94 = arith.cmpi eq, %26, %93 : vector<8x4xi32>
    %c13 = arith.constant 13 : index
    %95 = memref.load %arg9[%c13] : memref<25xf32, #tpu.memory_space<smem>>
    %96 = vector.broadcast %95 : f32 to vector<8x4xf32>
    %97 = arith.select %94, %96, %92 : vector<8x4xi1>, vector<8x4xf32>
    %c14_i32 = arith.constant 14 : i32
    %98 = vector.broadcast %c14_i32 : i32 to vector<8x4xi32>
    %99 = arith.cmpi eq, %26, %98 : vector<8x4xi32>
    %c14 = arith.constant 14 : index
    %100 = memref.load %arg9[%c14] : memref<25xf32, #tpu.memory_space<smem>>
    %101 = vector.broadcast %100 : f32 to vector<8x4xf32>
    %102 = arith.select %99, %101, %97 : vector<8x4xi1>, vector<8x4xf32>
    %c15_i32 = arith.constant 15 : i32
    %103 = vector.broadcast %c15_i32 : i32 to vector<8x4xi32>
    %104 = arith.cmpi eq, %26, %103 : vector<8x4xi32>
    %c15 = arith.constant 15 : index
    %105 = memref.load %arg9[%c15] : memref<25xf32, #tpu.memory_space<smem>>
    %106 = vector.broadcast %105 : f32 to vector<8x4xf32>
    %107 = arith.select %104, %106, %102 : vector<8x4xi1>, vector<8x4xf32>
    %c16_i32 = arith.constant 16 : i32
    %108 = vector.broadcast %c16_i32 : i32 to vector<8x4xi32>
    %109 = arith.cmpi eq, %26, %108 : vector<8x4xi32>
    %c16 = arith.constant 16 : index
    %110 = memref.load %arg9[%c16] : memref<25xf32, #tpu.memory_space<smem>>
    %111 = vector.broadcast %110 : f32 to vector<8x4xf32>
    %112 = arith.select %109, %111, %107 : vector<8x4xi1>, vector<8x4xf32>
    %c17_i32 = arith.constant 17 : i32
    %113 = vector.broadcast %c17_i32 : i32 to vector<8x4xi32>
    %114 = arith.cmpi eq, %26, %113 : vector<8x4xi32>
    %c17 = arith.constant 17 : index
    %115 = memref.load %arg9[%c17] : memref<25xf32, #tpu.memory_space<smem>>
    %116 = vector.broadcast %115 : f32 to vector<8x4xf32>
    %117 = arith.select %114, %116, %112 : vector<8x4xi1>, vector<8x4xf32>
    %c18_i32 = arith.constant 18 : i32
    %118 = vector.broadcast %c18_i32 : i32 to vector<8x4xi32>
    %119 = arith.cmpi eq, %26, %118 : vector<8x4xi32>
    %c18 = arith.constant 18 : index
    %120 = memref.load %arg9[%c18] : memref<25xf32, #tpu.memory_space<smem>>
    %121 = vector.broadcast %120 : f32 to vector<8x4xf32>
    %122 = arith.select %119, %121, %117 : vector<8x4xi1>, vector<8x4xf32>
    %c19_i32 = arith.constant 19 : i32
    %123 = vector.broadcast %c19_i32 : i32 to vector<8x4xi32>
    %124 = arith.cmpi eq, %26, %123 : vector<8x4xi32>
    %c19 = arith.constant 19 : index
    %125 = memref.load %arg9[%c19] : memref<25xf32, #tpu.memory_space<smem>>
    %126 = vector.broadcast %125 : f32 to vector<8x4xf32>
    %127 = arith.select %124, %126, %122 : vector<8x4xi1>, vector<8x4xf32>
    %c20_i32 = arith.constant 20 : i32
    %128 = vector.broadcast %c20_i32 : i32 to vector<8x4xi32>
    %129 = arith.cmpi eq, %26, %128 : vector<8x4xi32>
    %c20 = arith.constant 20 : index
    %130 = memref.load %arg9[%c20] : memref<25xf32, #tpu.memory_space<smem>>
    %131 = vector.broadcast %130 : f32 to vector<8x4xf32>
    %132 = arith.select %129, %131, %127 : vector<8x4xi1>, vector<8x4xf32>
    %c21_i32 = arith.constant 21 : i32
    %133 = vector.broadcast %c21_i32 : i32 to vector<8x4xi32>
    %134 = arith.cmpi eq, %26, %133 : vector<8x4xi32>
    %c21 = arith.constant 21 : index
    %135 = memref.load %arg9[%c21] : memref<25xf32, #tpu.memory_space<smem>>
    %136 = vector.broadcast %135 : f32 to vector<8x4xf32>
    %137 = arith.select %134, %136, %132 : vector<8x4xi1>, vector<8x4xf32>
    %c22_i32 = arith.constant 22 : i32
    %138 = vector.broadcast %c22_i32 : i32 to vector<8x4xi32>
    %139 = arith.cmpi eq, %26, %138 : vector<8x4xi32>
    %c22 = arith.constant 22 : index
    %140 = memref.load %arg9[%c22] : memref<25xf32, #tpu.memory_space<smem>>
    %141 = vector.broadcast %140 : f32 to vector<8x4xf32>
    %142 = arith.select %139, %141, %137 : vector<8x4xi1>, vector<8x4xf32>
    %c23_i32 = arith.constant 23 : i32
    %143 = vector.broadcast %c23_i32 : i32 to vector<8x4xi32>
    %144 = arith.cmpi eq, %26, %143 : vector<8x4xi32>
    %c23 = arith.constant 23 : index
    %145 = memref.load %arg9[%c23] : memref<25xf32, #tpu.memory_space<smem>>
    %146 = vector.broadcast %145 : f32 to vector<8x4xf32>
    %147 = arith.select %144, %146, %142 : vector<8x4xi1>, vector<8x4xf32>
    %c24_i32 = arith.constant 24 : i32
    %148 = vector.broadcast %c24_i32 : i32 to vector<8x4xi32>
    %149 = arith.cmpi eq, %26, %148 : vector<8x4xi32>
    %c24 = arith.constant 24 : index
    %150 = memref.load %arg9[%c24] : memref<25xf32, #tpu.memory_space<smem>>
    %151 = vector.broadcast %150 : f32 to vector<8x4xf32>
    %152 = arith.select %149, %151, %147 : vector<8x4xi1>, vector<8x4xf32>
    %153 = arith.mulf %152, %16 : vector<8x4xf32>
    %cst_20 = arith.constant dense<0.000000e+00> : vector<4xf32>
    %154 = vector.multi_reduction <add>, %153, %cst_20 [0] : vector<8x4xf32> to vector<4xf32>
    %155 = vector.shape_cast %154 : vector<4xf32> to vector<1x4xf32>
    %c0_i32_21 = arith.constant 0 : i32
    %156 = arith.cmpi eq, %arg1, %c0_i32_21 : i32
    %157 = arith.extui %156 : i1 to i32
    %c0_i32_22 = arith.constant 0 : i32
    %158 = arith.cmpi ne, %157, %c0_i32_22 : i32
    scf.if %158 {
      %c0_31 = arith.constant 0 : index
      %c0_32 = arith.constant 0 : index
      %167 = vector.load %arg11[%c0_31, %c0_32] : memref<5x4xf32, #tpu.memory_space<vmem>>, vector<5x4xf32>
      %c0_33 = arith.constant 0 : index
      %c0_34 = arith.constant 0 : index
      %168 = vector.load %arg12[%c0_33, %c0_34] : memref<1x4xf32, #tpu.memory_space<vmem>>, vector<1x4xf32>
      %169 = arith.addf %168, %155 : vector<1x4xf32>
      %c0_35 = arith.constant 0 : index
      %c0_36 = arith.constant 0 : index
      %170 = vector.load %arg13[%c0_35, %c0_36] : memref<1x4xi32, #tpu.memory_space<vmem>>, vector<1x4xi32>
      %c1_i32_37 = arith.constant 1 : i32
      %171 = arith.index_cast %c1_i32_37 : i32 to index
      %c0_38 = arith.constant 0 : index
      %172 = vector.load %arg4[%171, %c0_38] : memref<8x4xf32, #tpu.memory_space<vmem>>, vector<1x4xf32>
      %173 = arith.index_cast %c1_i32_37 : i32 to index
      %c0_39 = arith.constant 0 : index
      %c0_40 = arith.constant 0 : index
      %174 = vector.load %arg2[%173, %c0_39, %c0_40] : memref<8x5x4xf32, #tpu.memory_space<vmem>>, vector<1x5x4xf32>
      %175 = vector.shape_cast %174 : vector<1x5x4xf32> to vector<5x4xf32>
      %176 = arith.index_cast %c1_i32_37 : i32 to index
      %c0_41 = arith.constant 0 : index
      %177 = vector.load %arg3[%176, %c0_41] : memref<8x4xi32, #tpu.memory_space<vmem>>, vector<1x4xi32>
      %178 = vector.broadcast %177 : vector<1x4xi32> to vector<5x4xi32>
      %179 = arith.cmpi eq, %178, %3 : vector<5x4xi32>
      %180 = arith.extui %179 : vector<5x4xi1> to vector<5x4xi32>
      %181 = arith.sitofp %180 : vector<5x4xi32> to vector<5x4xf32>
      %182 = arith.mulf %181, %175 : vector<5x4xf32>
      %cst_42 = arith.constant dense<0.000000e+00> : vector<4xf32>
      %183 = vector.multi_reduction <add>, %182, %cst_42 [0] : vector<5x4xf32> to vector<4xf32>
      %184 = vector.shape_cast %183 : vector<4xf32> to vector<1x4xf32>
      %185 = arith.mulf %184, %172 : vector<1x4xf32>
      %186 = arith.addf %169, %185 : vector<1x4xf32>
      %cst_43 = arith.constant 0.000000e+00 : f32
      %187 = vector.broadcast %cst_43 : f32 to vector<1x4xf32>
      %188 = arith.cmpf ogt, %172, %187 : vector<1x4xf32>
      %189 = arith.select %188, %177, %170 : vector<1x4xi1>, vector<1x4xi32>
      %cst_44 = arith.constant dense<0xFF800000> : vector<4xf32>
      %190 = vector.multi_reduction <maximumf>, %167, %cst_44 [0] : vector<5x4xf32> to vector<4xf32>
      %191 = vector.shape_cast %190 : vector<4xf32> to vector<1x4xf32>
      %192 = vector.broadcast %191 : vector<1x4xf32> to vector<5x4xf32>
      %193 = arith.subf %167, %192 : vector<5x4xf32>
      %194 = math.exp %193 : vector<5x4xf32>
      %cst_45 = arith.constant dense<0.000000e+00> : vector<5x4xf32>
      %195 = tpu.matmul %0, %194, %cst_45 {dimension_numbers = #tpu.dot_dimension_numbers<[1], [0], [0], [1], [0, 0, 1, 1], [], []>} : vector<5x5xf32>, vector<5x4xf32>, vector<5x4xf32> -> vector<5x4xf32>
      %196 = math.log %195 : vector<5x4xf32>
      %197 = vector.broadcast %191 : vector<1x4xf32> to vector<5x4xf32>
      %198 = arith.addf %196, %197 : vector<5x4xf32>
      %199 = vector.broadcast %1 : vector<5x1xf32> to vector<5x4xf32>
      %200 = arith.addf %198, %199 : vector<5x4xf32>
      %201 = arith.addf %200, %175 : vector<5x4xf32>
      %cst_46 = arith.constant 0.000000e+00 : f32
      %202 = vector.broadcast %cst_46 : f32 to vector<1x4xf32>
      %203 = arith.cmpf ogt, %172, %202 : vector<1x4xf32>
      %204 = vector.shape_cast %203 : vector<1x4xi1> to vector<1x4xi1>
      %205 = vector.broadcast %204 : vector<1x4xi1> to vector<5x4xi1>
      %206 = arith.select %205, %201, %167 : vector<5x4xi1>, vector<5x4xf32>
      %c2_i32_47 = arith.constant 2 : i32
      %207 = arith.index_cast %c2_i32_47 : i32 to index
      %c0_48 = arith.constant 0 : index
      %208 = vector.load %arg4[%207, %c0_48] : memref<8x4xf32, #tpu.memory_space<vmem>>, vector<1x4xf32>
      %209 = arith.index_cast %c2_i32_47 : i32 to index
      %c0_49 = arith.constant 0 : index
      %c0_50 = arith.constant 0 : index
      %210 = vector.load %arg2[%209, %c0_49, %c0_50] : memref<8x5x4xf32, #tpu.memory_space<vmem>>, vector<1x5x4xf32>
      %211 = vector.shape_cast %210 : vector<1x5x4xf32> to vector<5x4xf32>
      %212 = arith.index_cast %c2_i32_47 : i32 to index
      %c0_51 = arith.constant 0 : index
      %213 = vector.load %arg3[%212, %c0_51] : memref<8x4xi32, #tpu.memory_space<vmem>>, vector<1x4xi32>
      %214 = vector.broadcast %213 : vector<1x4xi32> to vector<5x4xi32>
      %215 = arith.cmpi eq, %214, %3 : vector<5x4xi32>
      %216 = arith.extui %215 : vector<5x4xi1> to vector<5x4xi32>
      %217 = arith.sitofp %216 : vector<5x4xi32> to vector<5x4xf32>
      %218 = arith.mulf %217, %211 : vector<5x4xf32>
      %cst_52 = arith.constant dense<0.000000e+00> : vector<4xf32>
      %219 = vector.multi_reduction <add>, %218, %cst_52 [0] : vector<5x4xf32> to vector<4xf32>
      %220 = vector.shape_cast %219 : vector<4xf32> to vector<1x4xf32>
      %221 = arith.mulf %220, %208 : vector<1x4xf32>
      %222 = arith.addf %186, %221 : vector<1x4xf32>
      %cst_53 = arith.constant 0.000000e+00 : f32
      %223 = vector.broadcast %cst_53 : f32 to vector<1x4xf32>
      %224 = arith.cmpf ogt, %208, %223 : vector<1x4xf32>
      %225 = arith.select %224, %213, %189 : vector<1x4xi1>, vector<1x4xi32>
      %cst_54 = arith.constant dense<0xFF800000> : vector<4xf32>
      %226 = vector.multi_reduction <maximumf>, %206, %cst_54 [0] : vector<5x4xf32> to vector<4xf32>
      %227 = vector.shape_cast %226 : vector<4xf32> to vector<1x4xf32>
      %228 = vector.broadcast %227 : vector<1x4xf32> to vector<5x4xf32>
      %229 = arith.subf %206, %228 : vector<5x4xf32>
      %230 = math.exp %229 : vector<5x4xf32>
      %cst_55 = arith.constant dense<0.000000e+00> : vector<5x4xf32>
      %231 = tpu.matmul %0, %230, %cst_55 {dimension_numbers = #tpu.dot_dimension_numbers<[1], [0], [0], [1], [0, 0, 1, 1], [], []>} : vector<5x5xf32>, vector<5x4xf32>, vector<5x4xf32> -> vector<5x4xf32>
      %232 = math.log %231 : vector<5x4xf32>
      %233 = vector.broadcast %227 : vector<1x4xf32> to vector<5x4xf32>
      %234 = arith.addf %232, %233 : vector<5x4xf32>
      %235 = vector.broadcast %1 : vector<5x1xf32> to vector<5x4xf32>
      %236 = arith.addf %234, %235 : vector<5x4xf32>
      %237 = arith.addf %236, %211 : vector<5x4xf32>
      %cst_56 = arith.constant 0.000000e+00 : f32
      %238 = vector.broadcast %cst_56 : f32 to vector<1x4xf32>
      %239 = arith.cmpf ogt, %208, %238 : vector<1x4xf32>
      %240 = vector.shape_cast %239 : vector<1x4xi1> to vector<1x4xi1>
      %241 = vector.broadcast %240 : vector<1x4xi1> to vector<5x4xi1>
      %242 = arith.select %241, %237, %206 : vector<5x4xi1>, vector<5x4xf32>
      %c3_i32_57 = arith.constant 3 : i32
      %243 = arith.index_cast %c3_i32_57 : i32 to index
      %c0_58 = arith.constant 0 : index
      %244 = vector.load %arg4[%243, %c0_58] : memref<8x4xf32, #tpu.memory_space<vmem>>, vector<1x4xf32>
      %245 = arith.index_cast %c3_i32_57 : i32 to index
      %c0_59 = arith.constant 0 : index
      %c0_60 = arith.constant 0 : index
      %246 = vector.load %arg2[%245, %c0_59, %c0_60] : memref<8x5x4xf32, #tpu.memory_space<vmem>>, vector<1x5x4xf32>
      %247 = vector.shape_cast %246 : vector<1x5x4xf32> to vector<5x4xf32>
      %248 = arith.index_cast %c3_i32_57 : i32 to index
      %c0_61 = arith.constant 0 : index
      %249 = vector.load %arg3[%248, %c0_61] : memref<8x4xi32, #tpu.memory_space<vmem>>, vector<1x4xi32>
      %250 = vector.broadcast %249 : vector<1x4xi32> to vector<5x4xi32>
      %251 = arith.cmpi eq, %250, %3 : vector<5x4xi32>
      %252 = arith.extui %251 : vector<5x4xi1> to vector<5x4xi32>
      %253 = arith.sitofp %252 : vector<5x4xi32> to vector<5x4xf32>
      %254 = arith.mulf %253, %247 : vector<5x4xf32>
      %cst_62 = arith.constant dense<0.000000e+00> : vector<4xf32>
      %255 = vector.multi_reduction <add>, %254, %cst_62 [0] : vector<5x4xf32> to vector<4xf32>
      %256 = vector.shape_cast %255 : vector<4xf32> to vector<1x4xf32>
      %257 = arith.mulf %256, %244 : vector<1x4xf32>
      %258 = arith.addf %222, %257 : vector<1x4xf32>
      %cst_63 = arith.constant 0.000000e+00 : f32
      %259 = vector.broadcast %cst_63 : f32 to vector<1x4xf32>
      %260 = arith.cmpf ogt, %244, %259 : vector<1x4xf32>
      %261 = arith.select %260, %249, %225 : vector<1x4xi1>, vector<1x4xi32>
      %cst_64 = arith.constant dense<0xFF800000> : vector<4xf32>
      %262 = vector.multi_reduction <maximumf>, %242, %cst_64 [0] : vector<5x4xf32> to vector<4xf32>
      %263 = vector.shape_cast %262 : vector<4xf32> to vector<1x4xf32>
      %264 = vector.broadcast %263 : vector<1x4xf32> to vector<5x4xf32>
      %265 = arith.subf %242, %264 : vector<5x4xf32>
      %266 = math.exp %265 : vector<5x4xf32>
      %cst_65 = arith.constant dense<0.000000e+00> : vector<5x4xf32>
      %267 = tpu.matmul %0, %266, %cst_65 {dimension_numbers = #tpu.dot_dimension_numbers<[1], [0], [0], [1], [0, 0, 1, 1], [], []>} : vector<5x5xf32>, vector<5x4xf32>, vector<5x4xf32> -> vector<5x4xf32>
      %268 = math.log %267 : vector<5x4xf32>
      %269 = vector.broadcast %263 : vector<1x4xf32> to vector<5x4xf32>
      %270 = arith.addf %268, %269 : vector<5x4xf32>
      %271 = vector.broadcast %1 : vector<5x1xf32> to vector<5x4xf32>
      %272 = arith.addf %270, %271 : vector<5x4xf32>
      %273 = arith.addf %272, %247 : vector<5x4xf32>
      %cst_66 = arith.constant 0.000000e+00 : f32
      %274 = vector.broadcast %cst_66 : f32 to vector<1x4xf32>
      %275 = arith.cmpf ogt, %244, %274 : vector<1x4xf32>
      %276 = vector.shape_cast %275 : vector<1x4xi1> to vector<1x4xi1>
      %277 = vector.broadcast %276 : vector<1x4xi1> to vector<5x4xi1>
      %278 = arith.select %277, %273, %242 : vector<5x4xi1>, vector<5x4xf32>
      %c4_i32_67 = arith.constant 4 : i32
      %279 = arith.index_cast %c4_i32_67 : i32 to index
      %c0_68 = arith.constant 0 : index
      %280 = vector.load %arg4[%279, %c0_68] : memref<8x4xf32, #tpu.memory_space<vmem>>, vector<1x4xf32>
      %281 = arith.index_cast %c4_i32_67 : i32 to index
      %c0_69 = arith.constant 0 : index
      %c0_70 = arith.constant 0 : index
      %282 = vector.load %arg2[%281, %c0_69, %c0_70] : memref<8x5x4xf32, #tpu.memory_space<vmem>>, vector<1x5x4xf32>
      %283 = vector.shape_cast %282 : vector<1x5x4xf32> to vector<5x4xf32>
      %284 = arith.index_cast %c4_i32_67 : i32 to index
      %c0_71 = arith.constant 0 : index
      %285 = vector.load %arg3[%284, %c0_71] : memref<8x4xi32, #tpu.memory_space<vmem>>, vector<1x4xi32>
      %286 = vector.broadcast %285 : vector<1x4xi32> to vector<5x4xi32>
      %287 = arith.cmpi eq, %286, %3 : vector<5x4xi32>
      %288 = arith.extui %287 : vector<5x4xi1> to vector<5x4xi32>
      %289 = arith.sitofp %288 : vector<5x4xi32> to vector<5x4xf32>
      %290 = arith.mulf %289, %283 : vector<5x4xf32>
      %cst_72 = arith.constant dense<0.000000e+00> : vector<4xf32>
      %291 = vector.multi_reduction <add>, %290, %cst_72 [0] : vector<5x4xf32> to vector<4xf32>
      %292 = vector.shape_cast %291 : vector<4xf32> to vector<1x4xf32>
      %293 = arith.mulf %292, %280 : vector<1x4xf32>
      %294 = arith.addf %258, %293 : vector<1x4xf32>
      %cst_73 = arith.constant 0.000000e+00 : f32
      %295 = vector.broadcast %cst_73 : f32 to vector<1x4xf32>
      %296 = arith.cmpf ogt, %280, %295 : vector<1x4xf32>
      %297 = arith.select %296, %285, %261 : vector<1x4xi1>, vector<1x4xi32>
      %cst_74 = arith.constant dense<0xFF800000> : vector<4xf32>
      %298 = vector.multi_reduction <maximumf>, %278, %cst_74 [0] : vector<5x4xf32> to vector<4xf32>
      %299 = vector.shape_cast %298 : vector<4xf32> to vector<1x4xf32>
      %300 = vector.broadcast %299 : vector<1x4xf32> to vector<5x4xf32>
      %301 = arith.subf %278, %300 : vector<5x4xf32>
      %302 = math.exp %301 : vector<5x4xf32>
      %cst_75 = arith.constant dense<0.000000e+00> : vector<5x4xf32>
      %303 = tpu.matmul %0, %302, %cst_75 {dimension_numbers = #tpu.dot_dimension_numbers<[1], [0], [0], [1], [0, 0, 1, 1], [], []>} : vector<5x5xf32>, vector<5x4xf32>, vector<5x4xf32> -> vector<5x4xf32>
      %304 = math.log %303 : vector<5x4xf32>
      %305 = vector.broadcast %299 : vector<1x4xf32> to vector<5x4xf32>
      %306 = arith.addf %304, %305 : vector<5x4xf32>
      %307 = vector.broadcast %1 : vector<5x1xf32> to vector<5x4xf32>
      %308 = arith.addf %306, %307 : vector<5x4xf32>
      %309 = arith.addf %308, %283 : vector<5x4xf32>
      %cst_76 = arith.constant 0.000000e+00 : f32
      %310 = vector.broadcast %cst_76 : f32 to vector<1x4xf32>
      %311 = arith.cmpf ogt, %280, %310 : vector<1x4xf32>
      %312 = vector.shape_cast %311 : vector<1x4xi1> to vector<1x4xi1>
      %313 = vector.broadcast %312 : vector<1x4xi1> to vector<5x4xi1>
      %314 = arith.select %313, %309, %278 : vector<5x4xi1>, vector<5x4xf32>
      %c5_i32_77 = arith.constant 5 : i32
      %315 = arith.index_cast %c5_i32_77 : i32 to index
      %c0_78 = arith.constant 0 : index
      %316 = vector.load %arg4[%315, %c0_78] : memref<8x4xf32, #tpu.memory_space<vmem>>, vector<1x4xf32>
      %317 = arith.index_cast %c5_i32_77 : i32 to index
      %c0_79 = arith.constant 0 : index
      %c0_80 = arith.constant 0 : index
      %318 = vector.load %arg2[%317, %c0_79, %c0_80] : memref<8x5x4xf32, #tpu.memory_space<vmem>>, vector<1x5x4xf32>
      %319 = vector.shape_cast %318 : vector<1x5x4xf32> to vector<5x4xf32>
      %320 = arith.index_cast %c5_i32_77 : i32 to index
      %c0_81 = arith.constant 0 : index
      %321 = vector.load %arg3[%320, %c0_81] : memref<8x4xi32, #tpu.memory_space<vmem>>, vector<1x4xi32>
      %322 = vector.broadcast %321 : vector<1x4xi32> to vector<5x4xi32>
      %323 = arith.cmpi eq, %322, %3 : vector<5x4xi32>
      %324 = arith.extui %323 : vector<5x4xi1> to vector<5x4xi32>
      %325 = arith.sitofp %324 : vector<5x4xi32> to vector<5x4xf32>
      %326 = arith.mulf %325, %319 : vector<5x4xf32>
      %cst_82 = arith.constant dense<0.000000e+00> : vector<4xf32>
      %327 = vector.multi_reduction <add>, %326, %cst_82 [0] : vector<5x4xf32> to vector<4xf32>
      %328 = vector.shape_cast %327 : vector<4xf32> to vector<1x4xf32>
      %329 = arith.mulf %328, %316 : vector<1x4xf32>
      %330 = arith.addf %294, %329 : vector<1x4xf32>
      %cst_83 = arith.constant 0.000000e+00 : f32
      %331 = vector.broadcast %cst_83 : f32 to vector<1x4xf32>
      %332 = arith.cmpf ogt, %316, %331 : vector<1x4xf32>
      %333 = arith.select %332, %321, %297 : vector<1x4xi1>, vector<1x4xi32>
      %cst_84 = arith.constant dense<0xFF800000> : vector<4xf32>
      %334 = vector.multi_reduction <maximumf>, %314, %cst_84 [0] : vector<5x4xf32> to vector<4xf32>
      %335 = vector.shape_cast %334 : vector<4xf32> to vector<1x4xf32>
      %336 = vector.broadcast %335 : vector<1x4xf32> to vector<5x4xf32>
      %337 = arith.subf %314, %336 : vector<5x4xf32>
      %338 = math.exp %337 : vector<5x4xf32>
      %cst_85 = arith.constant dense<0.000000e+00> : vector<5x4xf32>
      %339 = tpu.matmul %0, %338, %cst_85 {dimension_numbers = #tpu.dot_dimension_numbers<[1], [0], [0], [1], [0, 0, 1, 1], [], []>} : vector<5x5xf32>, vector<5x4xf32>, vector<5x4xf32> -> vector<5x4xf32>
      %340 = math.log %339 : vector<5x4xf32>
      %341 = vector.broadcast %335 : vector<1x4xf32> to vector<5x4xf32>
      %342 = arith.addf %340, %341 : vector<5x4xf32>
      %343 = vector.broadcast %1 : vector<5x1xf32> to vector<5x4xf32>
      %344 = arith.addf %342, %343 : vector<5x4xf32>
      %345 = arith.addf %344, %319 : vector<5x4xf32>
      %cst_86 = arith.constant 0.000000e+00 : f32
      %346 = vector.broadcast %cst_86 : f32 to vector<1x4xf32>
      %347 = arith.cmpf ogt, %316, %346 : vector<1x4xf32>
      %348 = vector.shape_cast %347 : vector<1x4xi1> to vector<1x4xi1>
      %349 = vector.broadcast %348 : vector<1x4xi1> to vector<5x4xi1>
      %350 = arith.select %349, %345, %314 : vector<5x4xi1>, vector<5x4xf32>
      %c6_i32_87 = arith.constant 6 : i32
      %351 = arith.index_cast %c6_i32_87 : i32 to index
      %c0_88 = arith.constant 0 : index
      %352 = vector.load %arg4[%351, %c0_88] : memref<8x4xf32, #tpu.memory_space<vmem>>, vector<1x4xf32>
      %353 = arith.index_cast %c6_i32_87 : i32 to index
      %c0_89 = arith.constant 0 : index
      %c0_90 = arith.constant 0 : index
      %354 = vector.load %arg2[%353, %c0_89, %c0_90] : memref<8x5x4xf32, #tpu.memory_space<vmem>>, vector<1x5x4xf32>
      %355 = vector.shape_cast %354 : vector<1x5x4xf32> to vector<5x4xf32>
      %356 = arith.index_cast %c6_i32_87 : i32 to index
      %c0_91 = arith.constant 0 : index
      %357 = vector.load %arg3[%356, %c0_91] : memref<8x4xi32, #tpu.memory_space<vmem>>, vector<1x4xi32>
      %358 = vector.broadcast %357 : vector<1x4xi32> to vector<5x4xi32>
      %359 = arith.cmpi eq, %358, %3 : vector<5x4xi32>
      %360 = arith.extui %359 : vector<5x4xi1> to vector<5x4xi32>
      %361 = arith.sitofp %360 : vector<5x4xi32> to vector<5x4xf32>
      %362 = arith.mulf %361, %355 : vector<5x4xf32>
      %cst_92 = arith.constant dense<0.000000e+00> : vector<4xf32>
      %363 = vector.multi_reduction <add>, %362, %cst_92 [0] : vector<5x4xf32> to vector<4xf32>
      %364 = vector.shape_cast %363 : vector<4xf32> to vector<1x4xf32>
      %365 = arith.mulf %364, %352 : vector<1x4xf32>
      %366 = arith.addf %330, %365 : vector<1x4xf32>
      %cst_93 = arith.constant 0.000000e+00 : f32
      %367 = vector.broadcast %cst_93 : f32 to vector<1x4xf32>
      %368 = arith.cmpf ogt, %352, %367 : vector<1x4xf32>
      %369 = arith.select %368, %357, %333 : vector<1x4xi1>, vector<1x4xi32>
      %cst_94 = arith.constant dense<0xFF800000> : vector<4xf32>
      %370 = vector.multi_reduction <maximumf>, %350, %cst_94 [0] : vector<5x4xf32> to vector<4xf32>
      %371 = vector.shape_cast %370 : vector<4xf32> to vector<1x4xf32>
      %372 = vector.broadcast %371 : vector<1x4xf32> to vector<5x4xf32>
      %373 = arith.subf %350, %372 : vector<5x4xf32>
      %374 = math.exp %373 : vector<5x4xf32>
      %cst_95 = arith.constant dense<0.000000e+00> : vector<5x4xf32>
      %375 = tpu.matmul %0, %374, %cst_95 {dimension_numbers = #tpu.dot_dimension_numbers<[1], [0], [0], [1], [0, 0, 1, 1], [], []>} : vector<5x5xf32>, vector<5x4xf32>, vector<5x4xf32> -> vector<5x4xf32>
      %376 = math.log %375 : vector<5x4xf32>
      %377 = vector.broadcast %371 : vector<1x4xf32> to vector<5x4xf32>
      %378 = arith.addf %376, %377 : vector<5x4xf32>
      %379 = vector.broadcast %1 : vector<5x1xf32> to vector<5x4xf32>
      %380 = arith.addf %378, %379 : vector<5x4xf32>
      %381 = arith.addf %380, %355 : vector<5x4xf32>
      %cst_96 = arith.constant 0.000000e+00 : f32
      %382 = vector.broadcast %cst_96 : f32 to vector<1x4xf32>
      %383 = arith.cmpf ogt, %352, %382 : vector<1x4xf32>
      %384 = vector.shape_cast %383 : vector<1x4xi1> to vector<1x4xi1>
      %385 = vector.broadcast %384 : vector<1x4xi1> to vector<5x4xi1>
      %386 = arith.select %385, %381, %350 : vector<5x4xi1>, vector<5x4xf32>
      %c7_i32_97 = arith.constant 7 : i32
      %387 = arith.index_cast %c7_i32_97 : i32 to index
      %c0_98 = arith.constant 0 : index
      %388 = vector.load %arg4[%387, %c0_98] : memref<8x4xf32, #tpu.memory_space<vmem>>, vector<1x4xf32>
      %389 = arith.index_cast %c7_i32_97 : i32 to index
      %c0_99 = arith.constant 0 : index
      %c0_100 = arith.constant 0 : index
      %390 = vector.load %arg2[%389, %c0_99, %c0_100] : memref<8x5x4xf32, #tpu.memory_space<vmem>>, vector<1x5x4xf32>
      %391 = vector.shape_cast %390 : vector<1x5x4xf32> to vector<5x4xf32>
      %392 = arith.index_cast %c7_i32_97 : i32 to index
      %c0_101 = arith.constant 0 : index
      %393 = vector.load %arg3[%392, %c0_101] : memref<8x4xi32, #tpu.memory_space<vmem>>, vector<1x4xi32>
      %394 = vector.broadcast %393 : vector<1x4xi32> to vector<5x4xi32>
      %395 = arith.cmpi eq, %394, %3 : vector<5x4xi32>
      %396 = arith.extui %395 : vector<5x4xi1> to vector<5x4xi32>
      %397 = arith.sitofp %396 : vector<5x4xi32> to vector<5x4xf32>
      %398 = arith.mulf %397, %391 : vector<5x4xf32>
      %cst_102 = arith.constant dense<0.000000e+00> : vector<4xf32>
      %399 = vector.multi_reduction <add>, %398, %cst_102 [0] : vector<5x4xf32> to vector<4xf32>
      %400 = vector.shape_cast %399 : vector<4xf32> to vector<1x4xf32>
      %401 = arith.mulf %400, %388 : vector<1x4xf32>
      %402 = arith.addf %366, %401 : vector<1x4xf32>
      %cst_103 = arith.constant 0.000000e+00 : f32
      %403 = vector.broadcast %cst_103 : f32 to vector<1x4xf32>
      %404 = arith.cmpf ogt, %388, %403 : vector<1x4xf32>
      %405 = arith.select %404, %393, %369 : vector<1x4xi1>, vector<1x4xi32>
      %cst_104 = arith.constant dense<0xFF800000> : vector<4xf32>
      %406 = vector.multi_reduction <maximumf>, %386, %cst_104 [0] : vector<5x4xf32> to vector<4xf32>
      %407 = vector.shape_cast %406 : vector<4xf32> to vector<1x4xf32>
      %408 = vector.broadcast %407 : vector<1x4xf32> to vector<5x4xf32>
      %409 = arith.subf %386, %408 : vector<5x4xf32>
      %410 = math.exp %409 : vector<5x4xf32>
      %cst_105 = arith.constant dense<0.000000e+00> : vector<5x4xf32>
      %411 = tpu.matmul %0, %410, %cst_105 {dimension_numbers = #tpu.dot_dimension_numbers<[1], [0], [0], [1], [0, 0, 1, 1], [], []>} : vector<5x5xf32>, vector<5x4xf32>, vector<5x4xf32> -> vector<5x4xf32>
      %412 = math.log %411 : vector<5x4xf32>
      %413 = vector.broadcast %407 : vector<1x4xf32> to vector<5x4xf32>
      %414 = arith.addf %412, %413 : vector<5x4xf32>
      %415 = vector.broadcast %1 : vector<5x1xf32> to vector<5x4xf32>
      %416 = arith.addf %414, %415 : vector<5x4xf32>
      %417 = arith.addf %416, %391 : vector<5x4xf32>
      %cst_106 = arith.constant 0.000000e+00 : f32
      %418 = vector.broadcast %cst_106 : f32 to vector<1x4xf32>
      %419 = arith.cmpf ogt, %388, %418 : vector<1x4xf32>
      %420 = vector.shape_cast %419 : vector<1x4xi1> to vector<1x4xi1>
      %421 = vector.broadcast %420 : vector<1x4xi1> to vector<5x4xi1>
      %422 = arith.select %421, %417, %386 : vector<5x4xi1>, vector<5x4xf32>
      %c7_i32_107 = arith.constant 7 : i32
      %c0_108 = arith.constant 0 : index
      %c0_109 = arith.constant 0 : index
      %423 = vector.load %arg11[%c0_108, %c0_109] : memref<5x4xf32, #tpu.memory_space<vmem>>, vector<5x4xf32>
      tpu.vector_store %arg11[%c0_108, %c0_109], %422 {strides = array<i32>} : memref<5x4xf32, #tpu.memory_space<vmem>>, vector<5x4xf32>,
      %c0_110 = arith.constant 0 : index
      %c0_111 = arith.constant 0 : index
      %424 = vector.load %arg12[%c0_110, %c0_111] : memref<1x4xf32, #tpu.memory_space<vmem>>, vector<1x4xf32>
      tpu.vector_store %arg12[%c0_110, %c0_111], %402 {strides = array<i32>} : memref<1x4xf32, #tpu.memory_space<vmem>>, vector<1x4xf32>,
      %c0_112 = arith.constant 0 : index
      %c0_113 = arith.constant 0 : index
      %425 = vector.load %arg13[%c0_112, %c0_113] : memref<1x4xi32, #tpu.memory_space<vmem>>, vector<1x4xi32>
      tpu.vector_store %arg13[%c0_112, %c0_113], %405 {strides = array<i32>} : memref<1x4xi32, #tpu.memory_space<vmem>>, vector<1x4xi32>,
    } else {
    }
    %c0_i32_23 = arith.constant 0 : i32
    %159 = arith.cmpi sgt, %arg1, %c0_i32_23 : i32
    %160 = arith.extui %159 : i1 to i32
    %c0_i32_24 = arith.constant 0 : i32
    %161 = arith.cmpi ne, %160, %c0_i32_24 : i32
    scf.if %161 {
      %c0_31 = arith.constant 0 : index
      %c0_32 = arith.constant 0 : index
      %167 = vector.load %arg11[%c0_31, %c0_32] : memref<5x4xf32, #tpu.memory_space<vmem>>, vector<5x4xf32>
      %c0_33 = arith.constant 0 : index
      %c0_34 = arith.constant 0 : index
      %168 = vector.load %arg12[%c0_33, %c0_34] : memref<1x4xf32, #tpu.memory_space<vmem>>, vector<1x4xf32>
      %169 = arith.addf %168, %155 : vector<1x4xf32>
      %c0_35 = arith.constant 0 : index
      %c0_36 = arith.constant 0 : index
      %170 = vector.load %arg13[%c0_35, %c0_36] : memref<1x4xi32, #tpu.memory_space<vmem>>, vector<1x4xi32>
      %c0_i32_37 = arith.constant 0 : i32
      %171 = arith.index_cast %c0_i32_37 : i32 to index
      %c0_38 = arith.constant 0 : index
      %172 = vector.load %arg4[%171, %c0_38] : memref<8x4xf32, #tpu.memory_space<vmem>>, vector<1x4xf32>
      %173 = arith.index_cast %c0_i32_37 : i32 to index
      %c0_39 = arith.constant 0 : index
      %c0_40 = arith.constant 0 : index
      %174 = vector.load %arg2[%173, %c0_39, %c0_40] : memref<8x5x4xf32, #tpu.memory_space<vmem>>, vector<1x5x4xf32>
      %175 = vector.shape_cast %174 : vector<1x5x4xf32> to vector<5x4xf32>
      %176 = arith.index_cast %c0_i32_37 : i32 to index
      %c0_41 = arith.constant 0 : index
      %177 = vector.load %arg3[%176, %c0_41] : memref<8x4xi32, #tpu.memory_space<vmem>>, vector<1x4xi32>
      %178 = vector.broadcast %177 : vector<1x4xi32> to vector<5x4xi32>
      %179 = arith.cmpi eq, %178, %3 : vector<5x4xi32>
      %180 = arith.extui %179 : vector<5x4xi1> to vector<5x4xi32>
      %181 = arith.sitofp %180 : vector<5x4xi32> to vector<5x4xf32>
      %182 = arith.mulf %181, %175 : vector<5x4xf32>
      %cst_42 = arith.constant dense<0.000000e+00> : vector<4xf32>
      %183 = vector.multi_reduction <add>, %182, %cst_42 [0] : vector<5x4xf32> to vector<4xf32>
      %184 = vector.shape_cast %183 : vector<4xf32> to vector<1x4xf32>
      %185 = arith.mulf %184, %172 : vector<1x4xf32>
      %186 = arith.addf %169, %185 : vector<1x4xf32>
      %cst_43 = arith.constant 0.000000e+00 : f32
      %187 = vector.broadcast %cst_43 : f32 to vector<1x4xf32>
      %188 = arith.cmpf ogt, %172, %187 : vector<1x4xf32>
      %189 = arith.select %188, %177, %170 : vector<1x4xi1>, vector<1x4xi32>
      %cst_44 = arith.constant dense<0xFF800000> : vector<4xf32>
      %190 = vector.multi_reduction <maximumf>, %167, %cst_44 [0] : vector<5x4xf32> to vector<4xf32>
      %191 = vector.shape_cast %190 : vector<4xf32> to vector<1x4xf32>
      %192 = vector.broadcast %191 : vector<1x4xf32> to vector<5x4xf32>
      %193 = arith.subf %167, %192 : vector<5x4xf32>
      %194 = math.exp %193 : vector<5x4xf32>
      %cst_45 = arith.constant dense<0.000000e+00> : vector<5x4xf32>
      %195 = tpu.matmul %0, %194, %cst_45 {dimension_numbers = #tpu.dot_dimension_numbers<[1], [0], [0], [1], [0, 0, 1, 1], [], []>} : vector<5x5xf32>, vector<5x4xf32>, vector<5x4xf32> -> vector<5x4xf32>
      %196 = math.log %195 : vector<5x4xf32>
      %197 = vector.broadcast %191 : vector<1x4xf32> to vector<5x4xf32>
      %198 = arith.addf %196, %197 : vector<5x4xf32>
      %199 = vector.broadcast %1 : vector<5x1xf32> to vector<5x4xf32>
      %200 = arith.addf %198, %199 : vector<5x4xf32>
      %201 = arith.addf %200, %175 : vector<5x4xf32>
      %cst_46 = arith.constant 0.000000e+00 : f32
      %202 = vector.broadcast %cst_46 : f32 to vector<1x4xf32>
      %203 = arith.cmpf ogt, %172, %202 : vector<1x4xf32>
      %204 = vector.shape_cast %203 : vector<1x4xi1> to vector<1x4xi1>
      %205 = vector.broadcast %204 : vector<1x4xi1> to vector<5x4xi1>
      %206 = arith.select %205, %201, %167 : vector<5x4xi1>, vector<5x4xf32>
      %c1_i32_47 = arith.constant 1 : i32
      %207 = arith.index_cast %c1_i32_47 : i32 to index
      %c0_48 = arith.constant 0 : index
      %208 = vector.load %arg4[%207, %c0_48] : memref<8x4xf32, #tpu.memory_space<vmem>>, vector<1x4xf32>
      %209 = arith.index_cast %c1_i32_47 : i32 to index
      %c0_49 = arith.constant 0 : index
      %c0_50 = arith.constant 0 : index
      %210 = vector.load %arg2[%209, %c0_49, %c0_50] : memref<8x5x4xf32, #tpu.memory_space<vmem>>, vector<1x5x4xf32>
      %211 = vector.shape_cast %210 : vector<1x5x4xf32> to vector<5x4xf32>
      %212 = arith.index_cast %c1_i32_47 : i32 to index
      %c0_51 = arith.constant 0 : index
      %213 = vector.load %arg3[%212, %c0_51] : memref<8x4xi32, #tpu.memory_space<vmem>>, vector<1x4xi32>
      %214 = vector.broadcast %213 : vector<1x4xi32> to vector<5x4xi32>
      %215 = arith.cmpi eq, %214, %3 : vector<5x4xi32>
      %216 = arith.extui %215 : vector<5x4xi1> to vector<5x4xi32>
      %217 = arith.sitofp %216 : vector<5x4xi32> to vector<5x4xf32>
      %218 = arith.mulf %217, %211 : vector<5x4xf32>
      %cst_52 = arith.constant dense<0.000000e+00> : vector<4xf32>
      %219 = vector.multi_reduction <add>, %218, %cst_52 [0] : vector<5x4xf32> to vector<4xf32>
      %220 = vector.shape_cast %219 : vector<4xf32> to vector<1x4xf32>
      %221 = arith.mulf %220, %208 : vector<1x4xf32>
      %222 = arith.addf %186, %221 : vector<1x4xf32>
      %cst_53 = arith.constant 0.000000e+00 : f32
      %223 = vector.broadcast %cst_53 : f32 to vector<1x4xf32>
      %224 = arith.cmpf ogt, %208, %223 : vector<1x4xf32>
      %225 = arith.select %224, %213, %189 : vector<1x4xi1>, vector<1x4xi32>
      %cst_54 = arith.constant dense<0xFF800000> : vector<4xf32>
      %226 = vector.multi_reduction <maximumf>, %206, %cst_54 [0] : vector<5x4xf32> to vector<4xf32>
      %227 = vector.shape_cast %226 : vector<4xf32> to vector<1x4xf32>
      %228 = vector.broadcast %227 : vector<1x4xf32> to vector<5x4xf32>
      %229 = arith.subf %206, %228 : vector<5x4xf32>
      %230 = math.exp %229 : vector<5x4xf32>
      %cst_55 = arith.constant dense<0.000000e+00> : vector<5x4xf32>
      %231 = tpu.matmul %0, %230, %cst_55 {dimension_numbers = #tpu.dot_dimension_numbers<[1], [0], [0], [1], [0, 0, 1, 1], [], []>} : vector<5x5xf32>, vector<5x4xf32>, vector<5x4xf32> -> vector<5x4xf32>
      %232 = math.log %231 : vector<5x4xf32>
      %233 = vector.broadcast %227 : vector<1x4xf32> to vector<5x4xf32>
      %234 = arith.addf %232, %233 : vector<5x4xf32>
      %235 = vector.broadcast %1 : vector<5x1xf32> to vector<5x4xf32>
      %236 = arith.addf %234, %235 : vector<5x4xf32>
      %237 = arith.addf %236, %211 : vector<5x4xf32>
      %cst_56 = arith.constant 0.000000e+00 : f32
      %238 = vector.broadcast %cst_56 : f32 to vector<1x4xf32>
      %239 = arith.cmpf ogt, %208, %238 : vector<1x4xf32>
      %240 = vector.shape_cast %239 : vector<1x4xi1> to vector<1x4xi1>
      %241 = vector.broadcast %240 : vector<1x4xi1> to vector<5x4xi1>
      %242 = arith.select %241, %237, %206 : vector<5x4xi1>, vector<5x4xf32>
      %c2_i32_57 = arith.constant 2 : i32
      %243 = arith.index_cast %c2_i32_57 : i32 to index
      %c0_58 = arith.constant 0 : index
      %244 = vector.load %arg4[%243, %c0_58] : memref<8x4xf32, #tpu.memory_space<vmem>>, vector<1x4xf32>
      %245 = arith.index_cast %c2_i32_57 : i32 to index
      %c0_59 = arith.constant 0 : index
      %c0_60 = arith.constant 0 : index
      %246 = vector.load %arg2[%245, %c0_59, %c0_60] : memref<8x5x4xf32, #tpu.memory_space<vmem>>, vector<1x5x4xf32>
      %247 = vector.shape_cast %246 : vector<1x5x4xf32> to vector<5x4xf32>
      %248 = arith.index_cast %c2_i32_57 : i32 to index
      %c0_61 = arith.constant 0 : index
      %249 = vector.load %arg3[%248, %c0_61] : memref<8x4xi32, #tpu.memory_space<vmem>>, vector<1x4xi32>
      %250 = vector.broadcast %249 : vector<1x4xi32> to vector<5x4xi32>
      %251 = arith.cmpi eq, %250, %3 : vector<5x4xi32>
      %252 = arith.extui %251 : vector<5x4xi1> to vector<5x4xi32>
      %253 = arith.sitofp %252 : vector<5x4xi32> to vector<5x4xf32>
      %254 = arith.mulf %253, %247 : vector<5x4xf32>
      %cst_62 = arith.constant dense<0.000000e+00> : vector<4xf32>
      %255 = vector.multi_reduction <add>, %254, %cst_62 [0] : vector<5x4xf32> to vector<4xf32>
      %256 = vector.shape_cast %255 : vector<4xf32> to vector<1x4xf32>
      %257 = arith.mulf %256, %244 : vector<1x4xf32>
      %258 = arith.addf %222, %257 : vector<1x4xf32>
      %cst_63 = arith.constant 0.000000e+00 : f32
      %259 = vector.broadcast %cst_63 : f32 to vector<1x4xf32>
      %260 = arith.cmpf ogt, %244, %259 : vector<1x4xf32>
      %261 = arith.select %260, %249, %225 : vector<1x4xi1>, vector<1x4xi32>
      %cst_64 = arith.constant dense<0xFF800000> : vector<4xf32>
      %262 = vector.multi_reduction <maximumf>, %242, %cst_64 [0] : vector<5x4xf32> to vector<4xf32>
      %263 = vector.shape_cast %262 : vector<4xf32> to vector<1x4xf32>
      %264 = vector.broadcast %263 : vector<1x4xf32> to vector<5x4xf32>
      %265 = arith.subf %242, %264 : vector<5x4xf32>
      %266 = math.exp %265 : vector<5x4xf32>
      %cst_65 = arith.constant dense<0.000000e+00> : vector<5x4xf32>
      %267 = tpu.matmul %0, %266, %cst_65 {dimension_numbers = #tpu.dot_dimension_numbers<[1], [0], [0], [1], [0, 0, 1, 1], [], []>} : vector<5x5xf32>, vector<5x4xf32>, vector<5x4xf32> -> vector<5x4xf32>
      %268 = math.log %267 : vector<5x4xf32>
      %269 = vector.broadcast %263 : vector<1x4xf32> to vector<5x4xf32>
      %270 = arith.addf %268, %269 : vector<5x4xf32>
      %271 = vector.broadcast %1 : vector<5x1xf32> to vector<5x4xf32>
      %272 = arith.addf %270, %271 : vector<5x4xf32>
      %273 = arith.addf %272, %247 : vector<5x4xf32>
      %cst_66 = arith.constant 0.000000e+00 : f32
      %274 = vector.broadcast %cst_66 : f32 to vector<1x4xf32>
      %275 = arith.cmpf ogt, %244, %274 : vector<1x4xf32>
      %276 = vector.shape_cast %275 : vector<1x4xi1> to vector<1x4xi1>
      %277 = vector.broadcast %276 : vector<1x4xi1> to vector<5x4xi1>
      %278 = arith.select %277, %273, %242 : vector<5x4xi1>, vector<5x4xf32>
      %c3_i32_67 = arith.constant 3 : i32
      %279 = arith.index_cast %c3_i32_67 : i32 to index
      %c0_68 = arith.constant 0 : index
      %280 = vector.load %arg4[%279, %c0_68] : memref<8x4xf32, #tpu.memory_space<vmem>>, vector<1x4xf32>
      %281 = arith.index_cast %c3_i32_67 : i32 to index
      %c0_69 = arith.constant 0 : index
      %c0_70 = arith.constant 0 : index
      %282 = vector.load %arg2[%281, %c0_69, %c0_70] : memref<8x5x4xf32, #tpu.memory_space<vmem>>, vector<1x5x4xf32>
      %283 = vector.shape_cast %282 : vector<1x5x4xf32> to vector<5x4xf32>
      %284 = arith.index_cast %c3_i32_67 : i32 to index
      %c0_71 = arith.constant 0 : index
      %285 = vector.load %arg3[%284, %c0_71] : memref<8x4xi32, #tpu.memory_space<vmem>>, vector<1x4xi32>
      %286 = vector.broadcast %285 : vector<1x4xi32> to vector<5x4xi32>
      %287 = arith.cmpi eq, %286, %3 : vector<5x4xi32>
      %288 = arith.extui %287 : vector<5x4xi1> to vector<5x4xi32>
      %289 = arith.sitofp %288 : vector<5x4xi32> to vector<5x4xf32>
      %290 = arith.mulf %289, %283 : vector<5x4xf32>
      %cst_72 = arith.constant dense<0.000000e+00> : vector<4xf32>
      %291 = vector.multi_reduction <add>, %290, %cst_72 [0] : vector<5x4xf32> to vector<4xf32>
      %292 = vector.shape_cast %291 : vector<4xf32> to vector<1x4xf32>
      %293 = arith.mulf %292, %280 : vector<1x4xf32>
      %294 = arith.addf %258, %293 : vector<1x4xf32>
      %cst_73 = arith.constant 0.000000e+00 : f32
      %295 = vector.broadcast %cst_73 : f32 to vector<1x4xf32>
      %296 = arith.cmpf ogt, %280, %295 : vector<1x4xf32>
      %297 = arith.select %296, %285, %261 : vector<1x4xi1>, vector<1x4xi32>
      %cst_74 = arith.constant dense<0xFF800000> : vector<4xf32>
      %298 = vector.multi_reduction <maximumf>, %278, %cst_74 [0] : vector<5x4xf32> to vector<4xf32>
      %299 = vector.shape_cast %298 : vector<4xf32> to vector<1x4xf32>
      %300 = vector.broadcast %299 : vector<1x4xf32> to vector<5x4xf32>
      %301 = arith.subf %278, %300 : vector<5x4xf32>
      %302 = math.exp %301 : vector<5x4xf32>
      %cst_75 = arith.constant dense<0.000000e+00> : vector<5x4xf32>
      %303 = tpu.matmul %0, %302, %cst_75 {dimension_numbers = #tpu.dot_dimension_numbers<[1], [0], [0], [1], [0, 0, 1, 1], [], []>} : vector<5x5xf32>, vector<5x4xf32>, vector<5x4xf32> -> vector<5x4xf32>
      %304 = math.log %303 : vector<5x4xf32>
      %305 = vector.broadcast %299 : vector<1x4xf32> to vector<5x4xf32>
      %306 = arith.addf %304, %305 : vector<5x4xf32>
      %307 = vector.broadcast %1 : vector<5x1xf32> to vector<5x4xf32>
      %308 = arith.addf %306, %307 : vector<5x4xf32>
      %309 = arith.addf %308, %283 : vector<5x4xf32>
      %cst_76 = arith.constant 0.000000e+00 : f32
      %310 = vector.broadcast %cst_76 : f32 to vector<1x4xf32>
      %311 = arith.cmpf ogt, %280, %310 : vector<1x4xf32>
      %312 = vector.shape_cast %311 : vector<1x4xi1> to vector<1x4xi1>
      %313 = vector.broadcast %312 : vector<1x4xi1> to vector<5x4xi1>
      %314 = arith.select %313, %309, %278 : vector<5x4xi1>, vector<5x4xf32>
      %c4_i32_77 = arith.constant 4 : i32
      %315 = arith.index_cast %c4_i32_77 : i32 to index
      %c0_78 = arith.constant 0 : index
      %316 = vector.load %arg4[%315, %c0_78] : memref<8x4xf32, #tpu.memory_space<vmem>>, vector<1x4xf32>
      %317 = arith.index_cast %c4_i32_77 : i32 to index
      %c0_79 = arith.constant 0 : index
      %c0_80 = arith.constant 0 : index
      %318 = vector.load %arg2[%317, %c0_79, %c0_80] : memref<8x5x4xf32, #tpu.memory_space<vmem>>, vector<1x5x4xf32>
      %319 = vector.shape_cast %318 : vector<1x5x4xf32> to vector<5x4xf32>
      %320 = arith.index_cast %c4_i32_77 : i32 to index
      %c0_81 = arith.constant 0 : index
      %321 = vector.load %arg3[%320, %c0_81] : memref<8x4xi32, #tpu.memory_space<vmem>>, vector<1x4xi32>
      %322 = vector.broadcast %321 : vector<1x4xi32> to vector<5x4xi32>
      %323 = arith.cmpi eq, %322, %3 : vector<5x4xi32>
      %324 = arith.extui %323 : vector<5x4xi1> to vector<5x4xi32>
      %325 = arith.sitofp %324 : vector<5x4xi32> to vector<5x4xf32>
      %326 = arith.mulf %325, %319 : vector<5x4xf32>
      %cst_82 = arith.constant dense<0.000000e+00> : vector<4xf32>
      %327 = vector.multi_reduction <add>, %326, %cst_82 [0] : vector<5x4xf32> to vector<4xf32>
      %328 = vector.shape_cast %327 : vector<4xf32> to vector<1x4xf32>
      %329 = arith.mulf %328, %316 : vector<1x4xf32>
      %330 = arith.addf %294, %329 : vector<1x4xf32>
      %cst_83 = arith.constant 0.000000e+00 : f32
      %331 = vector.broadcast %cst_83 : f32 to vector<1x4xf32>
      %332 = arith.cmpf ogt, %316, %331 : vector<1x4xf32>
      %333 = arith.select %332, %321, %297 : vector<1x4xi1>, vector<1x4xi32>
      %cst_84 = arith.constant dense<0xFF800000> : vector<4xf32>
      %334 = vector.multi_reduction <maximumf>, %314, %cst_84 [0] : vector<5x4xf32> to vector<4xf32>
      %335 = vector.shape_cast %334 : vector<4xf32> to vector<1x4xf32>
      %336 = vector.broadcast %335 : vector<1x4xf32> to vector<5x4xf32>
      %337 = arith.subf %314, %336 : vector<5x4xf32>
      %338 = math.exp %337 : vector<5x4xf32>
      %cst_85 = arith.constant dense<0.000000e+00> : vector<5x4xf32>
      %339 = tpu.matmul %0, %338, %cst_85 {dimension_numbers = #tpu.dot_dimension_numbers<[1], [0], [0], [1], [0, 0, 1, 1], [], []>} : vector<5x5xf32>, vector<5x4xf32>, vector<5x4xf32> -> vector<5x4xf32>
      %340 = math.log %339 : vector<5x4xf32>
      %341 = vector.broadcast %335 : vector<1x4xf32> to vector<5x4xf32>
      %342 = arith.addf %340, %341 : vector<5x4xf32>
      %343 = vector.broadcast %1 : vector<5x1xf32> to vector<5x4xf32>
      %344 = arith.addf %342, %343 : vector<5x4xf32>
      %345 = arith.addf %344, %319 : vector<5x4xf32>
      %cst_86 = arith.constant 0.000000e+00 : f32
      %346 = vector.broadcast %cst_86 : f32 to vector<1x4xf32>
      %347 = arith.cmpf ogt, %316, %346 : vector<1x4xf32>
      %348 = vector.shape_cast %347 : vector<1x4xi1> to vector<1x4xi1>
      %349 = vector.broadcast %348 : vector<1x4xi1> to vector<5x4xi1>
      %350 = arith.select %349, %345, %314 : vector<5x4xi1>, vector<5x4xf32>
      %c5_i32_87 = arith.constant 5 : i32
      %351 = arith.index_cast %c5_i32_87 : i32 to index
      %c0_88 = arith.constant 0 : index
      %352 = vector.load %arg4[%351, %c0_88] : memref<8x4xf32, #tpu.memory_space<vmem>>, vector<1x4xf32>
      %353 = arith.index_cast %c5_i32_87 : i32 to index
      %c0_89 = arith.constant 0 : index
      %c0_90 = arith.constant 0 : index
      %354 = vector.load %arg2[%353, %c0_89, %c0_90] : memref<8x5x4xf32, #tpu.memory_space<vmem>>, vector<1x5x4xf32>
      %355 = vector.shape_cast %354 : vector<1x5x4xf32> to vector<5x4xf32>
      %356 = arith.index_cast %c5_i32_87 : i32 to index
      %c0_91 = arith.constant 0 : index
      %357 = vector.load %arg3[%356, %c0_91] : memref<8x4xi32, #tpu.memory_space<vmem>>, vector<1x4xi32>
      %358 = vector.broadcast %357 : vector<1x4xi32> to vector<5x4xi32>
      %359 = arith.cmpi eq, %358, %3 : vector<5x4xi32>
      %360 = arith.extui %359 : vector<5x4xi1> to vector<5x4xi32>
      %361 = arith.sitofp %360 : vector<5x4xi32> to vector<5x4xf32>
      %362 = arith.mulf %361, %355 : vector<5x4xf32>
      %cst_92 = arith.constant dense<0.000000e+00> : vector<4xf32>
      %363 = vector.multi_reduction <add>, %362, %cst_92 [0] : vector<5x4xf32> to vector<4xf32>
      %364 = vector.shape_cast %363 : vector<4xf32> to vector<1x4xf32>
      %365 = arith.mulf %364, %352 : vector<1x4xf32>
      %366 = arith.addf %330, %365 : vector<1x4xf32>
      %cst_93 = arith.constant 0.000000e+00 : f32
      %367 = vector.broadcast %cst_93 : f32 to vector<1x4xf32>
      %368 = arith.cmpf ogt, %352, %367 : vector<1x4xf32>
      %369 = arith.select %368, %357, %333 : vector<1x4xi1>, vector<1x4xi32>
      %cst_94 = arith.constant dense<0xFF800000> : vector<4xf32>
      %370 = vector.multi_reduction <maximumf>, %350, %cst_94 [0] : vector<5x4xf32> to vector<4xf32>
      %371 = vector.shape_cast %370 : vector<4xf32> to vector<1x4xf32>
      %372 = vector.broadcast %371 : vector<1x4xf32> to vector<5x4xf32>
      %373 = arith.subf %350, %372 : vector<5x4xf32>
      %374 = math.exp %373 : vector<5x4xf32>
      %cst_95 = arith.constant dense<0.000000e+00> : vector<5x4xf32>
      %375 = tpu.matmul %0, %374, %cst_95 {dimension_numbers = #tpu.dot_dimension_numbers<[1], [0], [0], [1], [0, 0, 1, 1], [], []>} : vector<5x5xf32>, vector<5x4xf32>, vector<5x4xf32> -> vector<5x4xf32>
      %376 = math.log %375 : vector<5x4xf32>
      %377 = vector.broadcast %371 : vector<1x4xf32> to vector<5x4xf32>
      %378 = arith.addf %376, %377 : vector<5x4xf32>
      %379 = vector.broadcast %1 : vector<5x1xf32> to vector<5x4xf32>
      %380 = arith.addf %378, %379 : vector<5x4xf32>
      %381 = arith.addf %380, %355 : vector<5x4xf32>
      %cst_96 = arith.constant 0.000000e+00 : f32
      %382 = vector.broadcast %cst_96 : f32 to vector<1x4xf32>
      %383 = arith.cmpf ogt, %352, %382 : vector<1x4xf32>
      %384 = vector.shape_cast %383 : vector<1x4xi1> to vector<1x4xi1>
      %385 = vector.broadcast %384 : vector<1x4xi1> to vector<5x4xi1>
      %386 = arith.select %385, %381, %350 : vector<5x4xi1>, vector<5x4xf32>
      %c6_i32_97 = arith.constant 6 : i32
      %387 = arith.index_cast %c6_i32_97 : i32 to index
      %c0_98 = arith.constant 0 : index
      %388 = vector.load %arg4[%387, %c0_98] : memref<8x4xf32, #tpu.memory_space<vmem>>, vector<1x4xf32>
      %389 = arith.index_cast %c6_i32_97 : i32 to index
      %c0_99 = arith.constant 0 : index
      %c0_100 = arith.constant 0 : index
      %390 = vector.load %arg2[%389, %c0_99, %c0_100] : memref<8x5x4xf32, #tpu.memory_space<vmem>>, vector<1x5x4xf32>
      %391 = vector.shape_cast %390 : vector<1x5x4xf32> to vector<5x4xf32>
      %392 = arith.index_cast %c6_i32_97 : i32 to index
      %c0_101 = arith.constant 0 : index
      %393 = vector.load %arg3[%392, %c0_101] : memref<8x4xi32, #tpu.memory_space<vmem>>, vector<1x4xi32>
      %394 = vector.broadcast %393 : vector<1x4xi32> to vector<5x4xi32>
      %395 = arith.cmpi eq, %394, %3 : vector<5x4xi32>
      %396 = arith.extui %395 : vector<5x4xi1> to vector<5x4xi32>
      %397 = arith.sitofp %396 : vector<5x4xi32> to vector<5x4xf32>
      %398 = arith.mulf %397, %391 : vector<5x4xf32>
      %cst_102 = arith.constant dense<0.000000e+00> : vector<4xf32>
      %399 = vector.multi_reduction <add>, %398, %cst_102 [0] : vector<5x4xf32> to vector<4xf32>
      %400 = vector.shape_cast %399 : vector<4xf32> to vector<1x4xf32>
      %401 = arith.mulf %400, %388 : vector<1x4xf32>
      %402 = arith.addf %366, %401 : vector<1x4xf32>
      %cst_103 = arith.constant 0.000000e+00 : f32
      %403 = vector.broadcast %cst_103 : f32 to vector<1x4xf32>
      %404 = arith.cmpf ogt, %388, %403 : vector<1x4xf32>
      %405 = arith.select %404, %393, %369 : vector<1x4xi1>, vector<1x4xi32>
      %cst_104 = arith.constant dense<0xFF800000> : vector<4xf32>
      %406 = vector.multi_reduction <maximumf>, %386, %cst_104 [0] : vector<5x4xf32> to vector<4xf32>
      %407 = vector.shape_cast %406 : vector<4xf32> to vector<1x4xf32>
      %408 = vector.broadcast %407 : vector<1x4xf32> to vector<5x4xf32>
      %409 = arith.subf %386, %408 : vector<5x4xf32>
      %410 = math.exp %409 : vector<5x4xf32>
      %cst_105 = arith.constant dense<0.000000e+00> : vector<5x4xf32>
      %411 = tpu.matmul %0, %410, %cst_105 {dimension_numbers = #tpu.dot_dimension_numbers<[1], [0], [0], [1], [0, 0, 1, 1], [], []>} : vector<5x5xf32>, vector<5x4xf32>, vector<5x4xf32> -> vector<5x4xf32>
      %412 = math.log %411 : vector<5x4xf32>
      %413 = vector.broadcast %407 : vector<1x4xf32> to vector<5x4xf32>
      %414 = arith.addf %412, %413 : vector<5x4xf32>
      %415 = vector.broadcast %1 : vector<5x1xf32> to vector<5x4xf32>
      %416 = arith.addf %414, %415 : vector<5x4xf32>
      %417 = arith.addf %416, %391 : vector<5x4xf32>
      %cst_106 = arith.constant 0.000000e+00 : f32
      %418 = vector.broadcast %cst_106 : f32 to vector<1x4xf32>
      %419 = arith.cmpf ogt, %388, %418 : vector<1x4xf32>
      %420 = vector.shape_cast %419 : vector<1x4xi1> to vector<1x4xi1>
      %421 = vector.broadcast %420 : vector<1x4xi1> to vector<5x4xi1>
      %422 = arith.select %421, %417, %386 : vector<5x4xi1>, vector<5x4xf32>
      %c7_i32_107 = arith.constant 7 : i32
      %423 = arith.index_cast %c7_i32_107 : i32 to index
      %c0_108 = arith.constant 0 : index
      %424 = vector.load %arg4[%423, %c0_108] : memref<8x4xf32, #tpu.memory_space<vmem>>, vector<1x4xf32>
      %425 = arith.index_cast %c7_i32_107 : i32 to index
      %c0_109 = arith.constant 0 : index
      %c0_110 = arith.constant 0 : index
      %426 = vector.load %arg2[%425, %c0_109, %c0_110] : memref<8x5x4xf32, #tpu.memory_space<vmem>>, vector<1x5x4xf32>
      %427 = vector.shape_cast %426 : vector<1x5x4xf32> to vector<5x4xf32>
      %428 = arith.index_cast %c7_i32_107 : i32 to index
      %c0_111 = arith.constant 0 : index
      %429 = vector.load %arg3[%428, %c0_111] : memref<8x4xi32, #tpu.memory_space<vmem>>, vector<1x4xi32>
      %430 = vector.broadcast %429 : vector<1x4xi32> to vector<5x4xi32>
      %431 = arith.cmpi eq, %430, %3 : vector<5x4xi32>
      %432 = arith.extui %431 : vector<5x4xi1> to vector<5x4xi32>
      %433 = arith.sitofp %432 : vector<5x4xi32> to vector<5x4xf32>
      %434 = arith.mulf %433, %427 : vector<5x4xf32>
      %cst_112 = arith.constant dense<0.000000e+00> : vector<4xf32>
      %435 = vector.multi_reduction <add>, %434, %cst_112 [0] : vector<5x4xf32> to vector<4xf32>
      %436 = vector.shape_cast %435 : vector<4xf32> to vector<1x4xf32>
      %437 = arith.mulf %436, %424 : vector<1x4xf32>
      %438 = arith.addf %402, %437 : vector<1x4xf32>
      %cst_113 = arith.constant 0.000000e+00 : f32
      %439 = vector.broadcast %cst_113 : f32 to vector<1x4xf32>
      %440 = arith.cmpf ogt, %424, %439 : vector<1x4xf32>
      %441 = arith.select %440, %429, %405 : vector<1x4xi1>, vector<1x4xi32>
      %cst_114 = arith.constant dense<0xFF800000> : vector<4xf32>
      %442 = vector.multi_reduction <maximumf>, %422, %cst_114 [0] : vector<5x4xf32> to vector<4xf32>
      %443 = vector.shape_cast %442 : vector<4xf32> to vector<1x4xf32>
      %444 = vector.broadcast %443 : vector<1x4xf32> to vector<5x4xf32>
      %445 = arith.subf %422, %444 : vector<5x4xf32>
      %446 = math.exp %445 : vector<5x4xf32>
      %cst_115 = arith.constant dense<0.000000e+00> : vector<5x4xf32>
      %447 = tpu.matmul %0, %446, %cst_115 {dimension_numbers = #tpu.dot_dimension_numbers<[1], [0], [0], [1], [0, 0, 1, 1], [], []>} : vector<5x5xf32>, vector<5x4xf32>, vector<5x4xf32> -> vector<5x4xf32>
      %448 = math.log %447 : vector<5x4xf32>
      %449 = vector.broadcast %443 : vector<1x4xf32> to vector<5x4xf32>
      %450 = arith.addf %448, %449 : vector<5x4xf32>
      %451 = vector.broadcast %1 : vector<5x1xf32> to vector<5x4xf32>
      %452 = arith.addf %450, %451 : vector<5x4xf32>
      %453 = arith.addf %452, %427 : vector<5x4xf32>
      %cst_116 = arith.constant 0.000000e+00 : f32
      %454 = vector.broadcast %cst_116 : f32 to vector<1x4xf32>
      %455 = arith.cmpf ogt, %424, %454 : vector<1x4xf32>
      %456 = vector.shape_cast %455 : vector<1x4xi1> to vector<1x4xi1>
      %457 = vector.broadcast %456 : vector<1x4xi1> to vector<5x4xi1>
      %458 = arith.select %457, %453, %422 : vector<5x4xi1>, vector<5x4xf32>
      %c8_i32_117 = arith.constant 8 : i32
      %c0_118 = arith.constant 0 : index
      %c0_119 = arith.constant 0 : index
      %459 = vector.load %arg11[%c0_118, %c0_119] : memref<5x4xf32, #tpu.memory_space<vmem>>, vector<5x4xf32>
      tpu.vector_store %arg11[%c0_118, %c0_119], %458 {strides = array<i32>} : memref<5x4xf32, #tpu.memory_space<vmem>>, vector<5x4xf32>,
      %c0_120 = arith.constant 0 : index
      %c0_121 = arith.constant 0 : index
      %460 = vector.load %arg12[%c0_120, %c0_121] : memref<1x4xf32, #tpu.memory_space<vmem>>, vector<1x4xf32>
      tpu.vector_store %arg12[%c0_120, %c0_121], %438 {strides = array<i32>} : memref<1x4xf32, #tpu.memory_space<vmem>>, vector<1x4xf32>,
      %c0_122 = arith.constant 0 : index
      %c0_123 = arith.constant 0 : index
      %461 = vector.load %arg13[%c0_122, %c0_123] : memref<1x4xi32, #tpu.memory_space<vmem>>, vector<1x4xi32>
      tpu.vector_store %arg13[%c0_122, %c0_123], %441 {strides = array<i32>} : memref<1x4xi32, #tpu.memory_space<vmem>>, vector<1x4xi32>,
    } else {
    }
    %c7_25 = arith.constant 7 : index
    %c0_26 = arith.constant 0 : index
    %162 = vector.load %arg3[%c7_25, %c0_26] : memref<8x4xi32, #tpu.memory_space<vmem>>, vector<1x4xi32>
    %c0_27 = arith.constant 0 : index
    %c0_28 = arith.constant 0 : index
    %163 = vector.load %arg14[%c0_27, %c0_28] : memref<1x4xi32, #tpu.memory_space<vmem>>, vector<1x4xi32>
    tpu.vector_store %arg14[%c0_27, %c0_28], %162 {strides = array<i32>} : memref<1x4xi32, #tpu.memory_space<vmem>>, vector<1x4xi32>,
    %c2_i32_29 = arith.constant 2 : i32
    %164 = arith.cmpi eq, %arg1, %c2_i32_29 : i32
    %165 = arith.extui %164 : i1 to i32
    %c0_i32_30 = arith.constant 0 : i32
    %166 = arith.cmpi ne, %165, %c0_i32_30 : i32
    scf.if %166 {
      %c0_31 = arith.constant 0 : index
      %c0_32 = arith.constant 0 : index
      %167 = vector.load %arg6[%c0_31, %c0_32] : memref<5x1xf32, #tpu.memory_space<vmem>>, vector<5x1xf32>
      %c0_33 = arith.constant 0 : index
      %c0_34 = arith.constant 0 : index
      %168 = vector.load %arg13[%c0_33, %c0_34] : memref<1x4xi32, #tpu.memory_space<vmem>>, vector<1x4xi32>
      %169 = vector.broadcast %168 : vector<1x4xi32> to vector<5x4xi32>
      %170 = arith.cmpi eq, %169, %3 : vector<5x4xi32>
      %171 = arith.extui %170 : vector<5x4xi1> to vector<5x4xi32>
      %172 = arith.sitofp %171 : vector<5x4xi32> to vector<5x4xf32>
      %c0_35 = arith.constant 0 : index
      %c0_36 = arith.constant 0 : index
      %173 = vector.load %arg12[%c0_35, %c0_36] : memref<1x4xf32, #tpu.memory_space<vmem>>, vector<1x4xf32>
      %174 = vector.broadcast %167 : vector<5x1xf32> to vector<5x4xf32>
      %175 = arith.mulf %174, %172 : vector<5x4xf32>
      %cst_37 = arith.constant dense<0.000000e+00> : vector<4xf32>
      %176 = vector.multi_reduction <add>, %175, %cst_37 [0] : vector<5x4xf32> to vector<4xf32>
      %177 = vector.shape_cast %176 : vector<4xf32> to vector<1x4xf32>
      %178 = arith.addf %173, %177 : vector<1x4xf32>
      %c0_38 = arith.constant 0 : index
      %c0_39 = arith.constant 0 : index
      %179 = vector.load %arg11[%c0_38, %c0_39] : memref<5x4xf32, #tpu.memory_space<vmem>>, vector<5x4xf32>
      %180 = vector.broadcast %167 : vector<5x1xf32> to vector<5x4xf32>
      %181 = arith.addf %179, %180 : vector<5x4xf32>
      %cst_40 = arith.constant dense<0xFF800000> : vector<4xf32>
      %182 = vector.multi_reduction <maximumf>, %181, %cst_40 [0] : vector<5x4xf32> to vector<4xf32>
      %183 = vector.shape_cast %182 : vector<4xf32> to vector<1x4xf32>
      %184 = vector.broadcast %183 : vector<1x4xf32> to vector<5x4xf32>
      %185 = arith.subf %181, %184 : vector<5x4xf32>
      %186 = math.exp %185 : vector<5x4xf32>
      %cst_41 = arith.constant dense<0.000000e+00> : vector<4xf32>
      %187 = vector.multi_reduction <add>, %186, %cst_41 [0] : vector<5x4xf32> to vector<4xf32>
      %188 = vector.shape_cast %187 : vector<4xf32> to vector<1x4xf32>
      %189 = math.log %188 : vector<1x4xf32>
      %190 = arith.addf %183, %189 : vector<1x4xf32>
      %191 = arith.subf %178, %190 : vector<1x4xf32>
      %c0_42 = arith.constant 0 : index
      %c0_43 = arith.constant 0 : index
      %192 = vector.load %arg10[%c0_42, %c0_43] : memref<1x4xf32, #tpu.memory_space<vmem>>, vector<1x4xf32>
      tpu.vector_store %arg10[%c0_42, %c0_43], %191 {strides = array<i32>} : memref<1x4xf32, #tpu.memory_space<vmem>>, vector<1x4xf32>,
    } else {
    }
    return
  }
  func.func @transform_0(%arg0: i32, %arg1: i32) -> (i32, i32, i32) {
    %c0_i32 = arith.constant 0 : i32
    %c0_i32_0 = arith.constant 0 : i32
    return %arg1, %c0_i32, %arg0 : i32, i32, i32
  }
  func.func @transform_1(%arg0: i32, %arg1: i32) -> (i32, i32) {
    %c0_i32 = arith.constant 0 : i32
    return %arg1, %arg0 : i32, i32
  }
  func.func @transform_2(%arg0: i32, %arg1: i32) -> (i32, i32) {
    %c0_i32 = arith.constant 0 : i32
    return %arg1, %arg0 : i32, i32
  }
  func.func @transform_3(%arg0: i32, %arg1: i32) -> (i32, i32) {
    %c0_i32 = arith.constant 0 : i32
    %c0_i32_0 = arith.constant 0 : i32
    %c0_i32_1 = arith.constant 0 : i32
    return %c0_i32, %c0_i32_0 : i32, i32
  }
  func.func @transform_4(%arg0: i32, %arg1: i32) -> (i32, i32) {
    %c0_i32 = arith.constant 0 : i32
    %c0_i32_0 = arith.constant 0 : i32
    %c0_i32_1 = arith.constant 0 : i32
    return %c0_i32, %c0_i32_0 : i32, i32
  }
  func.func @transform_5(%arg0: i32, %arg1: i32) -> (i32, i32) {
    %c0_i32 = arith.constant 0 : i32
    %c0_i32_0 = arith.constant 0 : i32
    %c0_i32_1 = arith.constant 0 : i32
    return %c0_i32, %c0_i32_0 : i32, i32
  }
  func.func @transform_6(%arg0: i32, %arg1: i32) -> (i32, i32) {
    %c0_i32 = arith.constant 0 : i32
    %c0_i32_0 = arith.constant 0 : i32
    %c0_i32_1 = arith.constant 0 : i32
    return %c0_i32, %c0_i32_0 : i32, i32
  }
  func.func @transform_7(%arg0: i32, %arg1: i32) -> i32 {
    %c0_i32 = arith.constant 0 : i32
    %c0_i32_0 = arith.constant 0 : i32
    return %c0_i32 : i32
  }
  func.func @transform_8(%arg0: i32, %arg1: i32) -> (i32, i32) {
    %c0_i32 = arith.constant 0 : i32
    %c0_i32_0 = arith.constant 0 : i32
    return %c0_i32, %arg0 : i32, i32
  }
}

</mosaic_0001>

<llo_original>
// kernel: tpu_custom_call.1
$region0: #{tpu_custom_call.1}
  #allocation0 [shape = 'u32[]', space=smem, size = 0x4, offset = 0x4, fixed_abs, tag = 'smem constant byte address 0x4 - core index']
  #allocation1 [shape = 'u32[144,128]{1,0:T(1,128)}', space=vmem, size = 0x12000, scoped, tag = 'internal scratch']
  #allocation2 [shape = 'f32[5,4]{1,0:T(8,128)}', space=vmem, size = 0x1000, scoped, tag = 'scratch operand']
  #allocation3 [shape = 'f32[1,4]{1,0:T(1,128)}', space=vmem, size = 0x200, scoped, tag = 'scratch operand']
  #allocation4 [shape = 's32[1,4]{1,0:T(1,128)}', space=vmem, size = 0x200, scoped, tag = 'scratch operand']
  #allocation5 [shape = 's32[1,4]{1,0:T(1,128)}', space=vmem, size = 0x200, scoped, tag = 'scratch operand']
  %s0 = inlined_call_operand.vmem [shape: f32[24,5,4], index: 0, kind: input, shape index: {}]
  %s1 = inlined_call_operand.vmem [shape: s32[24,4], index: 1, kind: input, shape index: {}]
  %s2 = inlined_call_operand.vmem [shape: f32[24,4], index: 2, kind: input, shape index: {}]
  %s3 = inlined_call_operand.vmem [shape: f32[5,1], index: 3, kind: input, shape index: {}]
  %s4 = inlined_call_operand.vmem [shape: f32[5,1], index: 4, kind: input, shape index: {}]
  %s5 = inlined_call_operand.vmem [shape: f32[5,5], index: 5, kind: input, shape index: {}]
  %s6 = inlined_call_operand.vmem [shape: f32[5,1], index: 6, kind: input, shape index: {}]
  %s7 = inlined_call_operand.vmem [shape: f32[25], index: 7, kind: input, shape index: {}]
  %s8 = inlined_call_operand.hbm [shape: f32[1,4], index: 8, kind: output, shape index: {}]
  %s9 = sld [smem:[#allocation0]]
  $region85: #{tpu_custom_call.1} parent=0
    _
  %s11 = ssub.s32 1, %s9
  %s12 = scalar_select 0, %s11, %s9
  $region1: #{tpu_custom_call.1} parent=0
    #allocation6 [shape = 'u8[512]{0}', space=smem, size = 0x200, scoped, tag = 'input window, operand 7, single buffered']
    #allocation7 [shape = 's32[2]{0}', space=sflag, size = 0x8, scoped, tag = 'scoped memory for tpu_custom_call.1']
    #allocation8 [shape = 's32[2]{0}', space=sflag, size = 0x8, scoped, tag = 'scoped memory for tpu_custom_call.1']
    #allocation9 [shape = 'u8[512]{0}', space=vmem, size = 0x400, scoped, tag = 'output window, operand 0, single buffered']
    %13 = vsyncpa [#allocation8], 0
    %14 = vsyncpa [#allocation7], 0
    loop: start=0, step=1, limit=5
    $region2: #{tpu_custom_call.1} parent=1 // loop_pre_header
      _
    $region3: #{tpu_custom_call.1} parent=1 // loop_header
      %s16 = sphi 0, %s20
      %p17 = scmp.ge.s32.totalorder %s16, 5
      %s23 = sphi 0, %s35
      %s24 = sphi 0, %s31
      %s25 = sphi 0, %s23
      %s26 = sphi 0, %s24
      %s27 = sphi 0, %s25
      %s28 = sphi 0, %s26
      %s40 = sphi 0, %s42
      %s43 = sphi 0, %s40
      %s44 = sphi 0, %s43
      %s60 = sphi 0, %s44
      %s68 = sphi 0, %s70
      %s71 = sphi 0, %s68
      %s72 = sphi 0, %s71
      %s88 = sphi 0, %s72
      %s96 = sphi 0, %s98
      %s99 = sphi 0, %s96
      %s100 = sphi 0, %s99
      %s116 = sphi 0, %s100
      %s120 = sphi 0, %s120
      %s122 = sphi 0, %s120
      %s123 = sphi 0, %s122
      %s137 = sphi 0, %s123
      %s141 = sphi 0, %s141
      %s143 = sphi 0, %s141
      %s144 = sphi 0, %s143
      %s158 = sphi 0, %s144
      %s162 = sphi 0, %s162
      %s164 = sphi 0, %s162
      %s165 = sphi 0, %s164
      %s179 = sphi 0, %s165
      %s183 = sphi 0, %s183
      %s185 = sphi 0, %s183
      %s186 = sphi 0, %s185
      %s200 = sphi 0, %s186
      %s204 = sphi 0, %s204
      %s206 = sphi 0, %s204
      %s207 = sphi 0, %s206
      %s221 = sphi 0, %s207
      %s227 = sphi 0, %s229
      %s230 = sphi 0, %s227
      %s231 = sphi 0, %s230
      %s247 = sphi 0, %s231
    $region4: #{tpu_custom_call.1} parent=1 // loop_header_branch
      %19 = sbr.rel (%p17) target = $region8
    $region5: #{tpu_custom_call.1} parent=1 // loop_body
      %s21 = ssub.s32 %s16, 1
      %s22 = ssub.s32 %s16, 2
      %s29 = sadd.s32 1, %s24
      %p30 = scmp.ge.s32.totalorder %s29, 3
      %s31 = scalar_select %p30, 0, %s29
      %s32 = sadd.s32 1, %s23
      %s33 = scalar_select %p30, %s32, %s23
      %p34 = scmp.ge.s32.totalorder %s33, 1
      %s35 = scalar_select %p34, 0, %s33
      %s36 = ssub.s32 %s24, %s31
      %s37 = ssub.s32 %s23, %s35
      %s38 = sor.u32 %s36, %s37
      %p39 = scmp.eq.s32.totalorder %s38, 0
      %s41 = sadd.s32 %s40, 1
      %s42 = scalar_select %p39, %s40, %s41
      %p45 = pneg %p39
      %p46 = scmp.eq.s32.totalorder %s16, 2
      %p47 = por %p45, %p46
      %p48 = scmp.ne.s32.totalorder %s40, %s43
      %p49 = scmp.eq.s32.totalorder %s16, 0
      %p50 = por %p48, %p49
      %p51 = scmp.ne.s32.totalorder %s40, %s43
      %p52 = scmp.eq.s32.totalorder %s21, 2
      %p53 = por %p51, %p52
      %p54 = scmp.ne.s32.totalorder %s43, %s44
      %p55 = scmp.eq.s32.totalorder %s21, 0
      %p56 = por %p54, %p55
      %p57 = scmp.ne.s32.totalorder %s43, %s44
      %p58 = scmp.eq.s32.totalorder %s22, 2
      %p59 = por %p57, %p58
      %p61 = scmp.ne.s32.totalorder %s44, %s60
      %p62 = scmp.eq.s32.totalorder %s22, 0
      %p63 = por %p61, %p62
      %s64 = ssub.s32 %s24, %s31
      %s65 = ssub.s32 %s23, %s35
      %s66 = sor.u32 %s64, %s65
      %p67 = scmp.eq.s32.totalorder %s66, 0
      %s69 = sadd.s32 %s68, 1
      %s70 = scalar_select %p67, %s68, %s69
      %p73 = pneg %p67
      %p74 = scmp.eq.s32.totalorder %s16, 2
      %p75 = por %p73, %p74
      %p76 = scmp.ne.s32.totalorder %s68, %s71
      %p77 = scmp.eq.s32.totalorder %s16, 0
      %p78 = por %p76, %p77
      %p79 = scmp.ne.s32.totalorder %s68, %s71
      %p80 = scmp.eq.s32.totalorder %s21, 2
      %p81 = por %p79, %p80
      %p82 = scmp.ne.s32.totalorder %s71, %s72
      %p83 = scmp.eq.s32.totalorder %s21, 0
      %p84 = por %p82, %p83
      %p85 = scmp.ne.s32.totalorder %s71, %s72
      %p86 = scmp.eq.s32.totalorder %s22, 2
      %p87 = por %p85, %p86
      %p89 = scmp.ne.s32.totalorder %s72, %s88
      %p90 = scmp.eq.s32.totalorder %s22, 0
      %p91 = por %p89, %p90
      %s92 = ssub.s32 %s24, %s31
      %s93 = ssub.s32 %s23, %s35
      %s94 = sor.u32 %s92, %s93
      %p95 = scmp.eq.s32.totalorder %s94, 0
      %s97 = sadd.s32 %s96, 1
      %s98 = scalar_select %p95, %s96, %s97
      %p101 = pneg %p95
      %p102 = scmp.eq.s32.totalorder %s16, 2
      %p103 = por %p101, %p102
      %p104 = scmp.ne.s32.totalorder %s96, %s99
      %p105 = scmp.eq.s32.totalorder %s16, 0
      %p106 = por %p104, %p105
      %p107 = scmp.ne.s32.totalorder %s96, %s99
      %p108 = scmp.eq.s32.totalorder %s21, 2
      %p109 = por %p107, %p108
      %p110 = scmp.ne.s32.totalorder %s99, %s100
      %p111 = scmp.eq.s32.totalorder %s21, 0
      %p112 = por %p110, %p111
      %p113 = scmp.ne.s32.totalorder %s99, %s100
      %p114 = scmp.eq.s32.totalorder %s22, 2
      %p115 = por %p113, %p114
      %p117 = scmp.ne.s32.totalorder %s100, %s116
      %p118 = scmp.eq.s32.totalorder %s22, 0
      %p119 = por %p117, %p118
      %s121 = sadd.s32 %s120, 1
      %p124 = scmp.eq.s32.totalorder %s16, 2
      %p125 = scmp.ne.s32.totalorder %s120, %s122
      %p126 = scmp.eq.s32.totalorder %s16, 0
      %p127 = por %p125, %p126
      %p128 = scmp.ne.s32.totalorder %s120, %s122
      %p129 = scmp.eq.s32.totalorder %s21, 2
      %p130 = por %p128, %p129
      %p131 = scmp.ne.s32.totalorder %s122, %s123
      %p132 = scmp.eq.s32.totalorder %s21, 0
      %p133 = por %p131, %p132
      %p134 = scmp.ne.s32.totalorder %s122, %s123
      %p135 = scmp.eq.s32.totalorder %s22, 2
      %p136 = por %p134, %p135
      %p138 = scmp.ne.s32.totalorder %s123, %s137
      %p139 = scmp.eq.s32.totalorder %s22, 0
      %p140 = por %p138, %p139
      %s142 = sadd.s32 %s141, 1
      %p145 = scmp.eq.s32.totalorder %s16, 2
      %p146 = scmp.ne.s32.totalorder %s141, %s143
      %p147 = scmp.eq.s32.totalorder %s16, 0
      %p148 = por %p146, %p147
      %p149 = scmp.ne.s32.totalorder %s141, %s143
      %p150 = scmp.eq.s32.totalorder %s21, 2
      %p151 = por %p149, %p150
      %p152 = scmp.ne.s32.totalorder %s143, %s144
      %p153 = scmp.eq.s32.totalorder %s21, 0
      %p154 = por %p152, %p153
      %p155 = scmp.ne.s32.totalorder %s143, %s144
      %p156 = scmp.eq.s32.totalorder %s22, 2
      %p157 = por %p155, %p156
      %p159 = scmp.ne.s32.totalorder %s144, %s158
      %p160 = scmp.eq.s32.totalorder %s22, 0
      %p161 = por %p159, %p160
      %s163 = sadd.s32 %s162, 1
      %p166 = scmp.eq.s32.totalorder %s16, 2
      %p167 = scmp.ne.s32.totalorder %s162, %s164
      %p168 = scmp.eq.s32.totalorder %s16, 0
      %p169 = por %p167, %p168
      %p170 = scmp.ne.s32.totalorder %s162, %s164
      %p171 = scmp.eq.s32.totalorder %s21, 2
      %p172 = por %p170, %p171
      %p173 = scmp.ne.s32.totalorder %s164, %s165
      %p174 = scmp.eq.s32.totalorder %s21, 0
      %p175 = por %p173, %p174
      %p176 = scmp.ne.s32.totalorder %s164, %s165
      %p177 = scmp.eq.s32.totalorder %s22, 2
      %p178 = por %p176, %p177
      %p180 = scmp.ne.s32.totalorder %s165, %s179
      %p181 = scmp.eq.s32.totalorder %s22, 0
      %p182 = por %p180, %p181
      %s184 = sadd.s32 %s183, 1
      %p187 = scmp.eq.s32.totalorder %s16, 2
      %p188 = scmp.ne.s32.totalorder %s183, %s185
      %p189 = scmp.eq.s32.totalorder %s16, 0
      %p190 = por %p188, %p189
      %p191 = scmp.ne.s32.totalorder %s183, %s185
      %p192 = scmp.eq.s32.totalorder %s21, 2
      %p193 = por %p191, %p192
      %p194 = scmp.ne.s32.totalorder %s185, %s186
      %p195 = scmp.eq.s32.totalorder %s21, 0
      %p196 = por %p194, %p195
      %p197 = scmp.ne.s32.totalorder %s185, %s186
      %p198 = scmp.eq.s32.totalorder %s22, 2
      %p199 = por %p197, %p198
      %p201 = scmp.ne.s32.totalorder %s186, %s200
      %p202 = scmp.eq.s32.totalorder %s22, 0
      %p203 = por %p201, %p202
      %s205 = sadd.s32 %s204, 1
      %p208 = scmp.eq.s32.totalorder %s16, 2
      %p209 = scmp.ne.s32.totalorder %s204, %s206
      %p210 = scmp.eq.s32.totalorder %s16, 0
      %p211 = por %p209, %p210
      %p212 = scmp.ne.s32.totalorder %s204, %s206
      %p213 = scmp.eq.s32.totalorder %s21, 2
      %p214 = por %p212, %p213
      %p215 = scmp.ne.s32.totalorder %s206, %s207
      %p216 = scmp.eq.s32.totalorder %s21, 0
      %p217 = por %p215, %p216
      %p218 = scmp.ne.s32.totalorder %s206, %s207
      %p219 = scmp.eq.s32.totalorder %s22, 2
      %p220 = por %p218, %p219
      %p222 = scmp.ne.s32.totalorder %s207, %s221
      %p223 = scmp.eq.s32.totalorder %s22, 0
      %p224 = por %p222, %p223
      %s225 = ssub.s32 %s23, %s35
      %p226 = scmp.eq.s32.totalorder %s225, 0
      %s228 = sadd.s32 %s227, 1
      %s229 = scalar_select %p226, %s227, %s228
      %p232 = pneg %p226
      %p233 = scmp.eq.s32.totalorder %s16, 2
      %p234 = por %p232, %p233
      %p235 = scmp.ne.s32.totalorder %s227, %s230
      %p236 = scmp.eq.s32.totalorder %s16, 0
      %p237 = por %p235, %p236
      %p238 = scmp.ne.s32.totalorder %s227, %s230
      %p239 = scmp.eq.s32.totalorder %s21, 2
      %p240 = por %p238, %p239
      %p241 = scmp.ne.s32.totalorder %s230, %s231
      %p242 = scmp.eq.s32.totalorder %s21, 0
      %p243 = por %p241, %p242
      %p244 = scmp.ne.s32.totalorder %s230, %s231
      %p245 = scmp.eq.s32.totalorder %s22, 2
      %p246 = por %p244, %p245
      %p248 = scmp.ne.s32.totalorder %s231, %s247
      %p249 = scmp.eq.s32.totalorder %s22, 0
      %p250 = por %p248, %p249
      %p251 = scmp.le.s32.totalorder 1, %s16
      %p252 = scmp.lt.s32.totalorder %s16, 4
      %p253 = pnand %p251, %p252
      %p254 = pneg %p253
      // Predicated region
      $region9: #{tpu_custom_call.1} parent=5 // pred_check
        _
      $region10: #{tpu_custom_call.1} parent=5 // pred_check_branch
        %256 = sbr.rel (%p253) target = $region12
      $region11: #{tpu_custom_call.1} parent=5 // pred_region
        %s257 = ssub.s32 %s16, 1
        // Predicated region
        $region13: #{tpu_custom_call.1} parent=11 // pred_check
          %p258 = pneg %p133
        $region14: #{tpu_custom_call.1} parent=11 // pred_check_branch
          %260 = sbr.rel (%p258) target = $region16
        $region15: #{tpu_custom_call.1} parent=11 // pred_region
          _
        $region16: #{tpu_custom_call.1} parent=11 // pred_fallthru
          _
        // Predicated region
        $region17: #{tpu_custom_call.1} parent=11 // pred_check
          %p261 = pneg %p154
        $region18: #{tpu_custom_call.1} parent=11 // pred_check_branch
          %263 = sbr.rel (%p261) target = $region20
        $region19: #{tpu_custom_call.1} parent=11 // pred_region
          _
        $region20: #{tpu_custom_call.1} parent=11 // pred_fallthru
          _
        // Predicated region
        $region21: #{tpu_custom_call.1} parent=11 // pred_check
          %p264 = pneg %p175
        $region22: #{tpu_custom_call.1} parent=11 // pred_check_branch
          %266 = sbr.rel (%p264) target = $region24
        $region23: #{tpu_custom_call.1} parent=11 // pred_region
          _
        $region24: #{tpu_custom_call.1} parent=11 // pred_fallthru
          _
        // Predicated region
        $region25: #{tpu_custom_call.1} parent=11 // pred_check
          %p267 = pneg %p196
        $region26: #{tpu_custom_call.1} parent=11 // pred_check_branch
          %269 = sbr.rel (%p267) target = $region28
        $region27: #{tpu_custom_call.1} parent=11 // pred_region
          _
        $region28: #{tpu_custom_call.1} parent=11 // pred_fallthru
          _
        // Predicated region
        $region29: #{tpu_custom_call.1} parent=11 // pred_check
          %p270 = pneg %p217
        $region30: #{tpu_custom_call.1} parent=11 // pred_check_branch
          %272 = sbr.rel (%p270) target = $region32
        $region31: #{tpu_custom_call.1} parent=11 // pred_region
          %s274 = ssub.s32 16, 16
          %275 = vsyncadd [#allocation8], %s274
          %s277 = sshll.u32 %s7, 4
          %s278 = int_to_ptr.vmem [resolvable:$true] %s277
          %280 = dma.vmem_to_smem %s278, 16, [#allocation6], [#allocation8]
        $region32: #{tpu_custom_call.1} parent=11 // pred_fallthru
          _
      $region12: #{tpu_custom_call.1} parent=5 // pred_fallthru
        _
      %p281 = scmp.lt.s32.totalorder %s16, 3
      // Predicated region
      $region33: #{tpu_custom_call.1} parent=5 // pred_check
        %p282 = pneg %p281
      $region34: #{tpu_custom_call.1} parent=5 // pred_check_branch
        %284 = sbr.rel (%p282) target = $region36
      $region35: #{tpu_custom_call.1} parent=5 // pred_region
        // Predicated region
        $region37: #{tpu_custom_call.1} parent=35 // pred_check
          %p285 = pneg %p50
        $region38: #{tpu_custom_call.1} parent=35 // pred_check_branch
          %287 = sbr.rel (%p285) target = $region40
        $region39: #{tpu_custom_call.1} parent=35 // pred_region
          %s288 = smul.u32 8, %s24
          %p289 = scmp.lt.s32.totalorder %s288, 23
          %s290 = scalar_select %p289, %s288, 23
          %p291 = scmp.lt.s32.totalorder %s23, 0
          %s292 = scalar_select %p291, %s23, 0
          %s293 = sadd.s32 %s292, %s290
          %s294 = smul.addr %s293, 8
          %s295 = scalar_lea.vmem %s0, %s294
          %s296 = smul.u32 8, %s24
        $region40: #{tpu_custom_call.1} parent=35 // pred_fallthru
          _
        // Predicated region
        $region41: #{tpu_custom_call.1} parent=35 // pred_check
          %p297 = pneg %p78
        $region42: #{tpu_custom_call.1} parent=35 // pred_check_branch
          %299 = sbr.rel (%p297) target = $region44
        $region43: #{tpu_custom_call.1} parent=35 // pred_region
          %p300 = scmp.lt.s32.totalorder %s24, 2
          %s301 = scalar_select %p300, %s24, 2
          %p302 = scmp.lt.s32.totalorder %s23, 0
          %s303 = scalar_select %p302, %s23, 0
          %s304 = sadd.s32 %s303, %s301
          %s305 = smul.addr %s304, 8
          %s306 = scalar_lea.vmem %s1, %s305
        $region44: #{tpu_custom_call.1} parent=35 // pred_fallthru
          _
        // Predicated region
        $region45: #{tpu_custom_call.1} parent=35 // pred_check
          %p307 = pneg %p106
        $region46: #{tpu_custom_call.1} parent=35 // pred_check_branch
          %309 = sbr.rel (%p307) target = $region48
        $region47: #{tpu_custom_call.1} parent=35 // pred_region
          %p310 = scmp.lt.s32.totalorder %s24, 2
          %s311 = scalar_select %p310, %s24, 2
          %p312 = scmp.lt.s32.totalorder %s23, 0
          %s313 = scalar_select %p312, %s23, 0
          %s314 = sadd.s32 %s313, %s311
          %s315 = smul.addr %s314, 8
          %s316 = scalar_lea.vmem %s2, %s315
        $region48: #{tpu_custom_call.1} parent=35 // pred_fallthru
          _
      $region36: #{tpu_custom_call.1} parent=5 // pred_fallthru
        _
      %p317 = scmp.le.s32.totalorder 1, %s16
      %p318 = scmp.lt.s32.totalorder %s16, 4
      %p319 = pnand %p317, %p318
      %p320 = pneg %p319
      // Predicated region
      $region49: #{tpu_custom_call.1} parent=5 // pred_check
        _
      $region50: #{tpu_custom_call.1} parent=5 // pred_check_branch
        %322 = sbr.rel (%p319) target = $region52
      $region51: #{tpu_custom_call.1} parent=5 // pred_region
        %s323 = ssub.s32 %s16, 1
        // Predicated region
        $region53: #{tpu_custom_call.1} parent=51 // pred_check
          %p324 = pneg %p217
        $region54: #{tpu_custom_call.1} parent=51 // pred_check_branch
          %326 = sbr.rel (%p324) target = $region56
        $region55: #{tpu_custom_call.1} parent=51 // pred_region
          %327 = dma.done [#allocation8], 16
        $region56: #{tpu_custom_call.1} parent=51 // pred_fallthru
          _
        %328 = sfence
        %s329 = smul.u32 8, %s26
        %p330 = scmp.lt.s32.totalorder %s329, 23
        %s331 = scalar_select %p330, %s329, 23
        %p332 = scmp.lt.s32.totalorder %s25, 0
        %s333 = scalar_select %p332, %s25, 0
        %s334 = sadd.s32 %s333, %s331
        %s335 = smul.addr %s334, 8
        %s336 = scalar_lea.vmem %s0, %s335
        %p337 = pneg %p56
        %p338 = pneg %p53
        %p339 = scmp.lt.s32.totalorder %s26, 2
        %s340 = scalar_select %p339, %s26, 2
        %p341 = scmp.lt.s32.totalorder %s25, 0
        %s342 = scalar_select %p341, %s25, 0
        %s343 = sadd.s32 %s342, %s340
        %s344 = smul.addr %s343, 8
        %s345 = scalar_lea.vmem %s1, %s344
        %p346 = pneg %p84
        %p347 = pneg %p81
        %p348 = scmp.lt.s32.totalorder %s26, 2
        %s349 = scalar_select %p348, %s26, 2
        %p350 = scmp.lt.s32.totalorder %s25, 0
        %s351 = scalar_select %p350, %s25, 0
        %s352 = sadd.s32 %s351, %s349
        %s353 = smul.addr %s352, 8
        %s354 = scalar_lea.vmem %s2, %s353
        %p355 = pneg %p112
        %p356 = pneg %p109
        %p357 = pneg %p133
        %p358 = pneg %p130
        %p359 = pneg %p154
        %p360 = pneg %p151
        %p361 = pneg %p175
        %p362 = pneg %p172
        %p363 = pneg %p196
        %p364 = pneg %p193
        %p365 = pneg %p217
        %p366 = pneg %p214
        %p367 = pneg %p243
        %p368 = pneg %p240
        %s369 = smul.u32 8, %s26
        %p370 = scmp.lt.s32.totalorder %s369, 23
        %s371 = scalar_select %p370, %s369, 23
        %p372 = scmp.lt.s32.totalorder %s25, 0
        %s373 = scalar_select %p372, %s25, 0
        %s374 = sadd.s32 %s373, %s371
        %s375 = smul.addr %s374, 8
        %s376 = scalar_lea.vmem %s0, %s375
        %s377 = smul.u32 8, %s26
        %p378 = scmp.lt.s32.totalorder %s26, 2
        %s379 = scalar_select %p378, %s26, 2
        %p380 = scmp.lt.s32.totalorder %s25, 0
        %s381 = scalar_select %p380, %s25, 0
        %s382 = sadd.s32 %s381, %s379
        %s383 = smul.addr %s382, 8
        %s384 = scalar_lea.vmem %s1, %s383
        %p385 = scmp.lt.s32.totalorder %s26, 2
        %s386 = scalar_select %p385, %s26, 2
        %p387 = scmp.lt.s32.totalorder %s25, 0
        %s388 = scalar_select %p387, %s25, 0
        %s389 = sadd.s32 %s388, %s386
        %s390 = smul.addr %s389, 8
        %s391 = scalar_lea.vmem %s2, %s390
        %v392 = vld [vmem:[%s5] sm:$0x1f]
        %v393 = vld [vmem:[%s6] sm:$0x1f]
        %v394 = vld [vmem:[%s3] sm:$0x1f]
        %v395 = vlaneseq
        %v396 = vshrl.u32 %v395, 7
        %p397 = scmp.eq.s32.totalorder %s26, 0
        // Predicated region
        $region57: #{tpu_custom_call.1} parent=51 // pred_check
          %p398 = pneg %p397
        $region58: #{tpu_custom_call.1} parent=51 // pred_check_branch
          %400 = sbr.rel (%p398) target = $region60
        $region59: #{tpu_custom_call.1} parent=51 // pred_region
          %v401 = vld [vmem:[%s376] sm:$0x1f]
          %v402 = vld [vmem:[%s384] sm:$0x1]
          %v403 = vlaneseq
          %v404 = vshrl.u32 %v403, 7
          %v405 = vsub.s32 0, %v404
          %v406 = vrot.slane %v402, %v405
          %vm407 = vcmp.eq.s32.totalorder %v406, %v396
          %v408 = vsel %vm407, 1, 0
          %v409 = vcvt.s32.f32 %v408
          %411 = vset.pattern.permute.xlu0 0
          %412 = vperm.xlu0 %411, %v394
          %v413 = vpop.permute.xlu0 %412
          %v415 = vadd.f32 %v413, %v401
          %vm416 = vcmask 28672
          %417 = vst.msk [vmem:[#allocation2] sm:$0x1f] %vm416, %v415
          %v418 = vmul.f32 %v409, %v415
          %v419 = vsel %vm416, %v418, 0.0
          %v420 = vrot.slane %v419, 4
          %v421 = vadd.f32 %v419, %v420
          %v422 = vrot.slane %v421, 2
          %v423 = vadd.f32 %v421, %v422
          %v424 = vrot.slane %v423, 1
          %v425 = vadd.f32 %v423, %v424
          %vm426 = vcmask 24576
          %427 = vst.msk [vmem:[#allocation3] sm:$0x1] %vm426, %v425
          %428 = vst.msk [vmem:[#allocation4] sm:$0x1] %vm426, %v402
          %429 = vst.msk [vmem:[#allocation5] sm:$0x1] %vm426, %v402
        $region60: #{tpu_custom_call.1} parent=51 // pred_fallthru
          _
        %v430 = vld [vmem:[%s384] sm:$0xff]
        %v431 = vld [vmem:[%s391] sm:$0xff]
        %vm432 = vcmp.eq.s32.totalorder %v396, 0
        %s433 = scalar_select %p397, 1, 0
        %v434 = vstv %s433
        %vm435 = vcmp.eq.s32.totalorder %v434, 1
        %vm436 = vmand %vm432, %vm435
        %v437 = vsel %vm436, 0.0, %v431
        %v438 = vrot.slane %v430, 7
        %v439 = vld [vmem:[#allocation5] sm:$0x1]
        %v440 = vlaneseq
        %v441 = vshrl.u32 %v440, 7
        %v442 = vsub.s32 0, %v441
        %v443 = vrot.slane %v439, %v442
        %v444 = vsel %vm432, %v443, %v438
        %v445 = vmul.u32 %v444, 5
        %v446 = vadd.s32 %v445, %v430
        %vm447 = vcmp.eq.s32.totalorder %v446, 0
        %s448 = sld [smem:[#allocation6]]
        %v449 = vstv %s448
        %v450 = vsel %vm447, %v449, 0.0
        %vm451 = vcmp.eq.s32.totalorder %v446, 1
        %s452 = sld [smem:[#allocation6 + $0x1]]
        %v453 = vstv %s452
        %v454 = vsel %vm451, %v453, %v450
        %vm455 = vcmp.eq.s32.totalorder %v446, 2
        %s456 = sld [smem:[#allocation6 + $0x2]]
        %v457 = vstv %s456
        %v458 = vsel %vm455, %v457, %v454
        %vm459 = vcmp.eq.s32.totalorder %v446, 3
        %s460 = sld [smem:[#allocation6 + $0x3]]
        %v461 = vstv %s460
        %v462 = vsel %vm459, %v461, %v458
        %vm463 = vcmp.eq.s32.totalorder %v446, 4
        %s464 = sld [smem:[#allocation6 + $0x4]]
        %v465 = vstv %s464
        %v466 = vsel %vm463, %v465, %v462
        %vm467 = vcmp.eq.s32.totalorder %v446, 5
        %s468 = sld [smem:[#allocation6 + $0x5]]
        %v469 = vstv %s468
        %v470 = vsel %vm467, %v469, %v466
        %vm471 = vcmp.eq.s32.totalorder %v446, 6
        %s472 = sld [smem:[#allocation6 + $0x6]]
        %v473 = vstv %s472
        %v474 = vsel %vm471, %v473, %v470
        %vm475 = vcmp.eq.s32.totalorder %v446, 7
        %s476 = sld [smem:[#allocation6 + $0x7]]
        %v477 = vstv %s476
        %v478 = vsel %vm475, %v477, %v474
        %vm479 = vcmp.eq.s32.totalorder %v446, 8
        %s480 = sld [smem:[#allocation6 + $0x8]]
        %v481 = vstv %s480
        %v482 = vsel %vm479, %v481, %v478
        %vm483 = vcmp.eq.s32.totalorder %v446, 9
        %s484 = sld [smem:[#allocation6 + $0x9]]
        %v485 = vstv %s484
        %v486 = vsel %vm483, %v485, %v482
        %vm487 = vcmp.eq.s32.totalorder %v446, 10
        %s488 = sld [smem:[#allocation6 + $0xa]]
        %v489 = vstv %s488
        %v490 = vsel %vm487, %v489, %v486
        %vm491 = vcmp.eq.s32.totalorder %v446, 11
        %s492 = sld [smem:[#allocation6 + $0xb]]
        %v493 = vstv %s492
        %v494 = vsel %vm491, %v493, %v490
        %vm495 = vcmp.eq.s32.totalorder %v446, 12
        %s496 = sld [smem:[#allocation6 + $0xc]]
        %v497 = vstv %s496
        %v498 = vsel %vm495, %v497, %v494
        %vm499 = vcmp.eq.s32.totalorder %v446, 13
        %s500 = sld [smem:[#allocation6 + $0xd]]
        %v501 = vstv %s500
        %v502 = vsel %vm499, %v501, %v498
        %vm503 = vcmp.eq.s32.totalorder %v446, 14
        %s504 = sld [smem:[#allocation6 + $0xe]]
        %v505 = vstv %s504
        %v506 = vsel %vm503, %v505, %v502
        %vm507 = vcmp.eq.s32.totalorder %v446, 15
        %s508 = sld [smem:[#allocation6 + $0xf]]
        %v509 = vstv %s508
        %v510 = vsel %vm507, %v509, %v506
        %vm511 = vcmp.eq.s32.totalorder %v446, 16
        %s512 = sld [smem:[#allocation6 + $0x10]]
        %v513 = vstv %s512
        %v514 = vsel %vm511, %v513, %v510
        %vm515 = vcmp.eq.s32.totalorder %v446, 17
        %s516 = sld [smem:[#allocation6 + $0x11]]
        %v517 = vstv %s516
        %v518 = vsel %vm515, %v517, %v514
        %vm519 = vcmp.eq.s32.totalorder %v446, 18
        %s520 = sld [smem:[#allocation6 + $0x12]]
        %v521 = vstv %s520
        %v522 = vsel %vm519, %v521, %v518
        %vm523 = vcmp.eq.s32.totalorder %v446, 19
        %s524 = sld [smem:[#allocation6 + $0x13]]
        %v525 = vstv %s524
        %v526 = vsel %vm523, %v525, %v522
        %vm527 = vcmp.eq.s32.totalorder %v446, 20
        %s528 = sld [smem:[#allocation6 + $0x14]]
        %v529 = vstv %s528
        %v530 = vsel %vm527, %v529, %v526
        %vm531 = vcmp.eq.s32.totalorder %v446, 21
        %s532 = sld [smem:[#allocation6 + $0x15]]
        %v533 = vstv %s532
        %v534 = vsel %vm531, %v533, %v530
        %vm535 = vcmp.eq.s32.totalorder %v446, 22
        %s536 = sld [smem:[#allocation6 + $0x16]]
        %v537 = vstv %s536
        %v538 = vsel %vm535, %v537, %v534
        %vm539 = vcmp.eq.s32.totalorder %v446, 23
        %s540 = sld [smem:[#allocation6 + $0x17]]
        %v541 = vstv %s540
        %v542 = vsel %vm539, %v541, %v538
        %vm543 = vcmp.eq.s32.totalorder %v446, 24
        %s544 = sld [smem:[#allocation6 + $0x18]]
        %v545 = vstv %s544
        %v546 = vsel %vm543, %v545, %v542
        %v547 = vmul.f32 %v546, %v437
        %vm548 = vcmask 31744
        %v549 = vsel %vm548, %v547, 0.0
        %v550 = vrot.slane %v549, 4
        %v551 = vadd.f32 %v549, %v550
        %v552 = vrot.slane %v551, 2
        %v553 = vadd.f32 %v551, %v552
        %v554 = vrot.slane %v553, 1
        %v555 = vadd.f32 %v553, %v554
        // Predicated region
        $region61: #{tpu_custom_call.1} parent=51 // pred_check
          %p556 = pneg %p397
        $region62: #{tpu_custom_call.1} parent=51 // pred_check_branch
          %558 = sbr.rel (%p556) target = $region64
        $region63: #{tpu_custom_call.1} parent=51 // pred_region
          %v559 = vld [vmem:[#allocation2] sm:$0x1f]
          %v560 = vld [vmem:[#allocation3] sm:$0x1]
          %v561 = vadd.f32 %v560, %v555
          %v562 = vld [vmem:[#allocation4] sm:$0x1]
          %v563 = vld [vmem:[%s391 + $0x1] sm:$0x1]
          %s564 = scalar_lea.vmem %s376, 8
          %v565 = vld [vmem:[%s564] sm:$0x1f]
          %v566 = vld [vmem:[%s384 + $0x1] sm:$0x1]
          %v567 = vlaneseq
          %v568 = vshrl.u32 %v567, 7
          %v569 = vsub.s32 0, %v568
          %v570 = vrot.slane %v566, %v569
          %vm571 = vcmp.eq.s32.totalorder %v570, %v396
          %v572 = vsel %vm571, 1, 0
          %v573 = vcvt.s32.f32 %v572
          %v574 = vmul.f32 %v573, %v565
          %vm575 = vcmask 28672
          %v576 = vsel %vm575, %v574, 0.0
          %v577 = vrot.slane %v576, 4
          %v578 = vadd.f32 %v576, %v577
          %v579 = vrot.slane %v578, 2
          %v580 = vadd.f32 %v578, %v579
          %v581 = vrot.slane %v580, 1
          %v582 = vadd.f32 %v580, %v581
          %v583 = vmul.f32 %v582, %v563
          %v584 = vadd.f32 %v561, %v583
          %vm585 = vcmp.gt.f32.partialorder %v563, 0.0
          %v586 = vsel %vm585, %v566, %v562
          %v587 = vsel %vm575, %v559, -inf
          %v588 = vrot.slane %v587, 4
          %v589 = vmax.f32 %v587, %v588
          %v590 = vrot.slane %v589, 2
          %v591 = vmax.f32 %v589, %v590
          %v592 = vrot.slane %v591, 1
          %v593 = vmax.f32 %v591, %v592
          %v594 = vsub.f32 %v559, %v593
          %v595 = vmul.f32 %v594, 1.442695
          %v596 = vpow.pop %v595
          %vm597 = vcmask 39936
          %v599 = vsel %vm597, %v392, 0
          %vm601 = vcmask 1044480
          %v603 = vsel %vm601, %v596, 0
          %605 = vmatprep.subr.mxu0 0.0
          %606 = vmatpush1.msra.mxu0 %v603
          %607 = vmatprep.subr.mxu0 0.0
          %608 = vmatpush1.msra.mxu0 0.0
          %609 = vmatprep.subr.mxu0 0.0
          %610 = vmatpush1.msra.mxu0 0.0
          %611 = vmatprep.subr.mxu0 0.0
          %612 = vmatpush1.msra.mxu0 0.0
          %613 = vmatprep.subr.mxu0 0.0
          %614 = vmatpush1.msra.mxu0 0.0
          %615 = vmatprep.subr.mxu0 0.0
          %616 = vmatpush1.msra.mxu0 0.0
          %617 = vmatprep.subr.mxu0 0.0
          %618 = vmatpush1.msra.mxu0 0.0
          %619 = vmatprep.subr.mxu0 0.0
          %620 = vmatpush1.msra.mxu0 0.0
          %621 = vmatprep.subr.mxu0 0.0
          %622 = vmatpush1.msra.mxu0 0.0
          %623 = vmatprep.subr.mxu0 0.0
          %624 = vmatpush1.msra.mxu0 0.0
          %625 = vmatprep.subr.mxu0 0.0
          %626 = vmatpush1.msra.mxu0 0.0
          %627 = vmatprep.subr.mxu0 0.0
          %628 = vmatpush1.msra.mxu0 0.0
          %629 = vmatprep.subr.mxu0 0.0
          %630 = vmatpush1.msra.mxu0 0.0
          %631 = vmatprep.subr.mxu0 0.0
          %632 = vmatpush1.msra.mxu0 0.0
          %633 = vmatprep.subr.mxu0 0.0
          %634 = vmatpush1.msra.mxu0 0.0
          %635 = vmatprep.subr.mxu0 0.0
          %636 = vmatpush1.msra.mxu0 0.0
          %637 = vmatprep.subr.mxu0 0.0
          %638 = vmatpush1.msra.mxu0 0.0
          %639 = vmatprep.subr.mxu0 0.0
          %640 = vmatpush1.msra.mxu0 0.0
          %641 = vmatprep.subr.mxu0 0.0
          %642 = vmatpush1.msra.mxu0 0.0
          %643 = vmatprep.subr.mxu0 0.0
          %644 = vmatpush1.msra.mxu0 0.0
          %645 = vmatprep.subr.mxu0 0.0
          %646 = vmatpush1.msra.mxu0 0.0
          %647 = vmatprep.subr.mxu0 0.0
          %648 = vmatpush1.msra.mxu0 0.0
          %649 = vmatprep.subr.mxu0 0.0
          %650 = vmatpush1.msra.mxu0 0.0
          %651 = vmatprep.subr.mxu0 0.0
          %652 = vmatpush1.msra.mxu0 0.0
          %653 = vmatprep.subr.mxu0 0.0
          %654 = vmatpush1.msra.mxu0 0.0
          %655 = vmatprep.subr.mxu0 0.0
          %656 = vmatpush1.msra.mxu0 0.0
          %657 = vmatprep.subr.mxu0 0.0
          %658 = vmatpush1.msra.mxu0 0.0
          %659 = vmatprep.subr.mxu0 0.0
          %660 = vmatpush1.msra.mxu0 0.0
          %661 = vmatprep.subr.mxu0 0.0
          %662 = vmatpush1.msra.mxu0 0.0
          %663 = vmatprep.subr.mxu0 0.0
          %664 = vmatpush1.msra.mxu0 0.0
          %665 = vmatprep.subr.mxu0 0.0
          %666 = vmatpush1.msra.mxu0 0.0
          %667 = vmatprep.subr.mxu0 0.0
          %668 = vmatpush1.msra.mxu0 0.0
          %669 = vmatprep.mubr.f32.mxu0 0.0
          %670 = vmatmul.mubr.f32.gmra.mrb[0].mxu0 %v599
          %v671 = vpop.f32.mrb[0].mxu0
          %v672 = vadd.f32 0.0, %v671
          %v673 = vpop.f32.mrb[0].mxu0
          %674 = vdwg.mxu0
          %v675 = vlog2.pop %v672
          %v676 = vmul.f32 %v675, 0.6931472
          %v677 = vadd.f32 %v676, %v593
          %679 = vset.pattern.permute.xlu0 0
          %680 = vperm.xlu0 %679, %v393
          %v681 = vpop.permute.xlu0 %680
          %v683 = vadd.f32 %v677, %v681
          %v684 = vadd.f32 %v683, %v565
          %v685 = vsel %vm585, 1, 0
          %v686 = vlaneseq
          %v687 = vshrl.u32 %v686, 7
          %v688 = vsub.s32 0, %v687
          %v689 = vrot.slane %v685, %v688
          %vm690 = vcmp.eq.s32.totalorder %v689, 1
          %v691 = vsel %vm690, %v684, %v559
          %v692 = vld [vmem:[%s391 + $0x2] sm:$0x1]
          %s693 = scalar_lea.vmem %s376, 16
          %v694 = vld [vmem:[%s693] sm:$0x1f]
          %v695 = vld [vmem:[%s384 + $0x2] sm:$0x1]
          %v696 = vlaneseq
          %v697 = vshrl.u32 %v696, 7
          %v698 = vsub.s32 0, %v697
          %v699 = vrot.slane %v695, %v698
          %vm700 = vcmp.eq.s32.totalorder %v699, %v396
          %v701 = vsel %vm700, 1, 0
          %v702 = vcvt.s32.f32 %v701
          %v703 = vmul.f32 %v702, %v694
          %v704 = vsel %vm575, %v703, 0.0
          %v705 = vrot.slane %v704, 4
          %v706 = vadd.f32 %v704, %v705
          %v707 = vrot.slane %v706, 2
          %v708 = vadd.f32 %v706, %v707
          %v709 = vrot.slane %v708, 1
          %v710 = vadd.f32 %v708, %v709
          %v711 = vmul.f32 %v710, %v692
          %v712 = vadd.f32 %v584, %v711
          %vm713 = vcmp.gt.f32.partialorder %v692, 0.0
          %v714 = vsel %vm713, %v695, %v586
          %v715 = vsel %vm575, %v691, -inf
          %v716 = vrot.slane %v715, 4
          %v717 = vmax.f32 %v715, %v716
          %v718 = vrot.slane %v717, 2
          %v719 = vmax.f32 %v717, %v718
          %v720 = vrot.slane %v719, 1
          %v721 = vmax.f32 %v719, %v720
          %v722 = vsub.f32 %v691, %v721
          %v723 = vmul.f32 %v722, 1.442695
          %v724 = vpow.pop %v723
          %v726 = vsel %vm601, %v724, 0
          %728 = vmatprep.subr.mxu0 0.0
          %729 = vmatpush1.msra.mxu0 %v726
          %730 = vmatprep.subr.mxu0 0.0
          %731 = vmatpush1.msra.mxu0 0.0
          %732 = vmatprep.subr.mxu0 0.0
          %733 = vmatpush1.msra.mxu0 0.0
          %734 = vmatprep.subr.mxu0 0.0
          %735 = vmatpush1.msra.mxu0 0.0
          %736 = vmatprep.subr.mxu0 0.0
          %737 = vmatpush1.msra.mxu0 0.0
          %738 = vmatprep.subr.mxu0 0.0
          %739 = vmatpush1.msra.mxu0 0.0
          %740 = vmatprep.subr.mxu0 0.0
          %741 = vmatpush1.msra.mxu0 0.0
          %742 = vmatprep.subr.mxu0 0.0
          %743 = vmatpush1.msra.mxu0 0.0
          %744 = vmatprep.subr.mxu0 0.0
          %745 = vmatpush1.msra.mxu0 0.0
          %746 = vmatprep.subr.mxu0 0.0
          %747 = vmatpush1.msra.mxu0 0.0
          %748 = vmatprep.subr.mxu0 0.0
          %749 = vmatpush1.msra.mxu0 0.0
          %750 = vmatprep.subr.mxu0 0.0
          %751 = vmatpush1.msra.mxu0 0.0
          %752 = vmatprep.subr.mxu0 0.0
          %753 = vmatpush1.msra.mxu0 0.0
          %754 = vmatprep.subr.mxu0 0.0
          %755 = vmatpush1.msra.mxu0 0.0
          %756 = vmatprep.subr.mxu0 0.0
          %757 = vmatpush1.msra.mxu0 0.0
          %758 = vmatprep.subr.mxu0 0.0
          %759 = vmatpush1.msra.mxu0 0.0
          %760 = vmatprep.subr.mxu0 0.0
          %761 = vmatpush1.msra.mxu0 0.0
          %762 = vmatprep.subr.mxu0 0.0
          %763 = vmatpush1.msra.mxu0 0.0
          %764 = vmatprep.subr.mxu0 0.0
          %765 = vmatpush1.msra.mxu0 0.0
          %766 = vmatprep.subr.mxu0 0.0
          %767 = vmatpush1.msra.mxu0 0.0
          %768 = vmatprep.subr.mxu0 0.0
          %769 = vmatpush1.msra.mxu0 0.0
          %770 = vmatprep.subr.mxu0 0.0
          %771 = vmatpush1.msra.mxu0 0.0
          %772 = vmatprep.subr.mxu0 0.0
          %773 = vmatpush1.msra.mxu0 0.0
          %774 = vmatprep.subr.mxu0 0.0
          %775 = vmatpush1.msra.mxu0 0.0
          %776 = vmatprep.subr.mxu0 0.0
          %777 = vmatpush1.msra.mxu0 0.0
          %778 = vmatprep.subr.mxu0 0.0
          %779 = vmatpush1.msra.mxu0 0.0
          %780 = vmatprep.subr.mxu0 0.0
          %781 = vmatpush1.msra.mxu0 0.0
          %782 = vmatprep.subr.mxu0 0.0
          %783 = vmatpush1.msra.mxu0 0.0
          %784 = vmatprep.subr.mxu0 0.0
          %785 = vmatpush1.msra.mxu0 0.0
          %786 = vmatprep.subr.mxu0 0.0
          %787 = vmatpush1.msra.mxu0 0.0
          %788 = vmatprep.subr.mxu0 0.0
          %789 = vmatpush1.msra.mxu0 0.0
          %790 = vmatprep.subr.mxu0 0.0
          %791 = vmatpush1.msra.mxu0 0.0
          %792 = vmatprep.mubr.f32.mxu0 0.0
          %793 = vmatmul.mubr.f32.gmra.mrb[0].mxu0 %v599
          %v794 = vpop.f32.mrb[0].mxu0
          %v795 = vadd.f32 0.0, %v794
          %v796 = vpop.f32.mrb[0].mxu0
          %797 = vdwg.mxu0
          %v798 = vlog2.pop %v795
          %v799 = vmul.f32 %v798, 0.6931472
          %v800 = vadd.f32 %v799, %v721
          %v801 = vadd.f32 %v800, %v681
          %v802 = vadd.f32 %v801, %v694
          %v803 = vsel %vm713, 1, 0
          %v804 = vlaneseq
          %v805 = vshrl.u32 %v804, 7
          %v806 = vsub.s32 0, %v805
          %v807 = vrot.slane %v803, %v806
          %vm808 = vcmp.eq.s32.totalorder %v807, 1
          %v809 = vsel %vm808, %v802, %v691
          %v810 = vld [vmem:[%s391 + $0x3] sm:$0x1]
          %s811 = scalar_lea.vmem %s376, 24
          %v812 = vld [vmem:[%s811] sm:$0x1f]
          %v813 = vld [vmem:[%s384 + $0x3] sm:$0x1]
          %v814 = vlaneseq
          %v815 = vshrl.u32 %v814, 7
          %v816 = vsub.s32 0, %v815
          %v817 = vrot.slane %v813, %v816
          %vm818 = vcmp.eq.s32.totalorder %v817, %v396
          %v819 = vsel %vm818, 1, 0
          %v820 = vcvt.s32.f32 %v819
          %v821 = vmul.f32 %v820, %v812
          %v822 = vsel %vm575, %v821, 0.0
          %v823 = vrot.slane %v822, 4
          %v824 = vadd.f32 %v822, %v823
          %v825 = vrot.slane %v824, 2
          %v826 = vadd.f32 %v824, %v825
          %v827 = vrot.slane %v826, 1
          %v828 = vadd.f32 %v826, %v827
          %v829 = vmul.f32 %v828, %v810
          %v830 = vadd.f32 %v712, %v829
          %vm831 = vcmp.gt.f32.partialorder %v810, 0.0
          %v832 = vsel %vm831, %v813, %v714
          %v833 = vsel %vm575, %v809, -inf
          %v834 = vrot.slane %v833, 4
          %v835 = vmax.f32 %v833, %v834
          %v836 = vrot.slane %v835, 2
          %v837 = vmax.f32 %v835, %v836
          %v838 = vrot.slane %v837, 1
          %v839 = vmax.f32 %v837, %v838
          %v840 = vsub.f32 %v809, %v839
          %v841 = vmul.f32 %v840, 1.442695
          %v842 = vpow.pop %v841
          %v844 = vsel %vm601, %v842, 0
          %846 = vmatprep.subr.mxu0 0.0
          %847 = vmatpush1.msra.mxu0 %v844
          %848 = vmatprep.subr.mxu0 0.0
          %849 = vmatpush1.msra.mxu0 0.0
          %850 = vmatprep.subr.mxu0 0.0
          %851 = vmatpush1.msra.mxu0 0.0
          %852 = vmatprep.subr.mxu0 0.0
          %853 = vmatpush1.msra.mxu0 0.0
          %854 = vmatprep.subr.mxu0 0.0
          %855 = vmatpush1.msra.mxu0 0.0
          %856 = vmatprep.subr.mxu0 0.0
          %857 = vmatpush1.msra.mxu0 0.0
          %858 = vmatprep.subr.mxu0 0.0
          %859 = vmatpush1.msra.mxu0 0.0
          %860 = vmatprep.subr.mxu0 0.0
          %861 = vmatpush1.msra.mxu0 0.0
          %862 = vmatprep.subr.mxu0 0.0
          %863 = vmatpush1.msra.mxu0 0.0
          %864 = vmatprep.subr.mxu0 0.0
          %865 = vmatpush1.msra.mxu0 0.0
          %866 = vmatprep.subr.mxu0 0.0
          %867 = vmatpush1.msra.mxu0 0.0
          %868 = vmatprep.subr.mxu0 0.0
          %869 = vmatpush1.msra.mxu0 0.0
          %870 = vmatprep.subr.mxu0 0.0
          %871 = vmatpush1.msra.mxu0 0.0
          %872 = vmatprep.subr.mxu0 0.0
          %873 = vmatpush1.msra.mxu0 0.0
          %874 = vmatprep.subr.mxu0 0.0
          %875 = vmatpush1.msra.mxu0 0.0
          %876 = vmatprep.subr.mxu0 0.0
          %877 = vmatpush1.msra.mxu0 0.0
          %878 = vmatprep.subr.mxu0 0.0
          %879 = vmatpush1.msra.mxu0 0.0
          %880 = vmatprep.subr.mxu0 0.0
          %881 = vmatpush1.msra.mxu0 0.0
          %882 = vmatprep.subr.mxu0 0.0
          %883 = vmatpush1.msra.mxu0 0.0
          %884 = vmatprep.subr.mxu0 0.0
          %885 = vmatpush1.msra.mxu0 0.0
          %886 = vmatprep.subr.mxu0 0.0
          %887 = vmatpush1.msra.mxu0 0.0
          %888 = vmatprep.subr.mxu0 0.0
          %889 = vmatpush1.msra.mxu0 0.0
          %890 = vmatprep.subr.mxu0 0.0
          %891 = vmatpush1.msra.mxu0 0.0
          %892 = vmatprep.subr.mxu0 0.0
          %893 = vmatpush1.msra.mxu0 0.0
          %894 = vmatprep.subr.mxu0 0.0
          %895 = vmatpush1.msra.mxu0 0.0
          %896 = vmatprep.subr.mxu0 0.0
          %897 = vmatpush1.msra.mxu0 0.0
          %898 = vmatprep.subr.mxu0 0.0
          %899 = vmatpush1.msra.mxu0 0.0
          %900 = vmatprep.subr.mxu0 0.0
          %901 = vmatpush1.msra.mxu0 0.0
          %902 = vmatprep.subr.mxu0 0.0
          %903 = vmatpush1.msra.mxu0 0.0
          %904 = vmatprep.subr.mxu0 0.0
          %905 = vmatpush1.msra.mxu0 0.0
          %906 = vmatprep.subr.mxu0 0.0
          %907 = vmatpush1.msra.mxu0 0.0
          %908 = vmatprep.subr.mxu0 0.0
          %909 = vmatpush1.msra.mxu0 0.0
          %910 = vmatprep.mubr.f32.mxu0 0.0
          %911 = vmatmul.mubr.f32.gmra.mrb[0].mxu0 %v599
          %v912 = vpop.f32.mrb[0].mxu0
          %v913 = vadd.f32 0.0, %v912
          %v914 = vpop.f32.mrb[0].mxu0
          %915 = vdwg.mxu0
          %v916 = vlog2.pop %v913
          %v917 = vmul.f32 %v916, 0.6931472
          %v918 = vadd.f32 %v917, %v839
          %v919 = vadd.f32 %v918, %v681
          %v920 = vadd.f32 %v919, %v812
          %v921 = vsel %vm831, 1, 0
          %v922 = vlaneseq
          %v923 = vshrl.u32 %v922, 7
          %v924 = vsub.s32 0, %v923
          %v925 = vrot.slane %v921, %v924
          %vm926 = vcmp.eq.s32.totalorder %v925, 1
          %v927 = vsel %vm926, %v920, %v809
          %v928 = vld [vmem:[%s391 + $0x4] sm:$0x1]
          %s929 = scalar_lea.vmem %s376, 32
          %v930 = vld [vmem:[%s929] sm:$0x1f]
          %v931 = vld [vmem:[%s384 + $0x4] sm:$0x1]
          %v932 = vlaneseq
          %v933 = vshrl.u32 %v932, 7
          %v934 = vsub.s32 0, %v933
          %v935 = vrot.slane %v931, %v934
          %vm936 = vcmp.eq.s32.totalorder %v935, %v396
          %v937 = vsel %vm936, 1, 0
          %v938 = vcvt.s32.f32 %v937
          %v939 = vmul.f32 %v938, %v930
          %v940 = vsel %vm575, %v939, 0.0
          %v941 = vrot.slane %v940, 4
          %v942 = vadd.f32 %v940, %v941
          %v943 = vrot.slane %v942, 2
          %v944 = vadd.f32 %v942, %v943
          %v945 = vrot.slane %v944, 1
          %v946 = vadd.f32 %v944, %v945
          %v947 = vmul.f32 %v946, %v928
          %v948 = vadd.f32 %v830, %v947
          %vm949 = vcmp.gt.f32.partialorder %v928, 0.0
          %v950 = vsel %vm949, %v931, %v832
          %v951 = vsel %vm575, %v927, -inf
          %v952 = vrot.slane %v951, 4
          %v953 = vmax.f32 %v951, %v952
          %v954 = vrot.slane %v953, 2
          %v955 = vmax.f32 %v953, %v954
          %v956 = vrot.slane %v955, 1
          %v957 = vmax.f32 %v955, %v956
          %v958 = vsub.f32 %v927, %v957
          %v959 = vmul.f32 %v958, 1.442695
          %v960 = vpow.pop %v959
          %v962 = vsel %vm601, %v960, 0
          %964 = vmatprep.subr.mxu0 0.0
          %965 = vmatpush1.msra.mxu0 %v962
          %966 = vmatprep.subr.mxu0 0.0
          %967 = vmatpush1.msra.mxu0 0.0
          %968 = vmatprep.subr.mxu0 0.0
          %969 = vmatpush1.msra.mxu0 0.0
          %970 = vmatprep.subr.mxu0 0.0
          %971 = vmatpush1.msra.mxu0 0.0
          %972 = vmatprep.subr.mxu0 0.0
          %973 = vmatpush1.msra.mxu0 0.0
          %974 = vmatprep.subr.mxu0 0.0
          %975 = vmatpush1.msra.mxu0 0.0
          %976 = vmatprep.subr.mxu0 0.0
          %977 = vmatpush1.msra.mxu0 0.0
          %978 = vmatprep.subr.mxu0 0.0
          %979 = vmatpush1.msra.mxu0 0.0
          %980 = vmatprep.subr.mxu0 0.0
          %981 = vmatpush1.msra.mxu0 0.0
          %982 = vmatprep.subr.mxu0 0.0
          %983 = vmatpush1.msra.mxu0 0.0
          %984 = vmatprep.subr.mxu0 0.0
          %985 = vmatpush1.msra.mxu0 0.0
          %986 = vmatprep.subr.mxu0 0.0
          %987 = vmatpush1.msra.mxu0 0.0
          %988 = vmatprep.subr.mxu0 0.0
          %989 = vmatpush1.msra.mxu0 0.0
          %990 = vmatprep.subr.mxu0 0.0
          %991 = vmatpush1.msra.mxu0 0.0
          %992 = vmatprep.subr.mxu0 0.0
          %993 = vmatpush1.msra.mxu0 0.0
          %994 = vmatprep.subr.mxu0 0.0
          %995 = vmatpush1.msra.mxu0 0.0
          %996 = vmatprep.subr.mxu0 0.0
          %997 = vmatpush1.msra.mxu0 0.0
          %998 = vmatprep.subr.mxu0 0.0
          %999 = vmatpush1.msra.mxu0 0.0
          %1000 = vmatprep.subr.mxu0 0.0
          %1001 = vmatpush1.msra.mxu0 0.0
          %1002 = vmatprep.subr.mxu0 0.0
          %1003 = vmatpush1.msra.mxu0 0.0
          %1004 = vmatprep.subr.mxu0 0.0
          %1005 = vmatpush1.msra.mxu0 0.0
          %1006 = vmatprep.subr.mxu0 0.0
          %1007 = vmatpush1.msra.mxu0 0.0
          %1008 = vmatprep.subr.mxu0 0.0
          %1009 = vmatpush1.msra.mxu0 0.0
          %1010 = vmatprep.subr.mxu0 0.0
          %1011 = vmatpush1.msra.mxu0 0.0
          %1012 = vmatprep.subr.mxu0 0.0
          %1013 = vmatpush1.msra.mxu0 0.0
          %1014 = vmatprep.subr.mxu0 0.0
          %1015 = vmatpush1.msra.mxu0 0.0
          %1016 = vmatprep.subr.mxu0 0.0
          %1017 = vmatpush1.msra.mxu0 0.0
          %1018 = vmatprep.subr.mxu0 0.0
          %1019 = vmatpush1.msra.mxu0 0.0
          %1020 = vmatprep.subr.mxu0 0.0
          %1021 = vmatpush1.msra.mxu0 0.0
          %1022 = vmatprep.subr.mxu0 0.0
          %1023 = vmatpush1.msra.mxu0 0.0
          %1024 = vmatprep.subr.mxu0 0.0
          %1025 = vmatpush1.msra.mxu0 0.0
          %1026 = vmatprep.subr.mxu0 0.0
          %1027 = vmatpush1.msra.mxu0 0.0
          %1028 = vmatprep.mubr.f32.mxu0 0.0
          %1029 = vmatmul.mubr.f32.gmra.mrb[0].mxu0 %v599
          %v1030 = vpop.f32.mrb[0].mxu0
          %v1031 = vadd.f32 0.0, %v1030
          %v1032 = vpop.f32.mrb[0].mxu0
          %1033 = vdwg.mxu0
          %v1034 = vlog2.pop %v1031
          %v1035 = vmul.f32 %v1034, 0.6931472
          %v1036 = vadd.f32 %v1035, %v957
          %v1037 = vadd.f32 %v1036, %v681
          %v1038 = vadd.f32 %v1037, %v930
          %v1039 = vsel %vm949, 1, 0
          %v1040 = vlaneseq
          %v1041 = vshrl.u32 %v1040, 7
          %v1042 = vsub.s32 0, %v1041
          %v1043 = vrot.slane %v1039, %v1042
          %vm1044 = vcmp.eq.s32.totalorder %v1043, 1
          %v1045 = vsel %vm1044, %v1038, %v927
          %v1046 = vld [vmem:[%s391 + $0x5] sm:$0x1]
          %s1047 = scalar_lea.vmem %s376, 40
          %v1048 = vld [vmem:[%s1047] sm:$0x1f]
          %v1049 = vld [vmem:[%s384 + $0x5] sm:$0x1]
          %v1050 = vlaneseq
          %v1051 = vshrl.u32 %v1050, 7
          %v1052 = vsub.s32 0, %v1051
          %v1053 = vrot.slane %v1049, %v1052
          %vm1054 = vcmp.eq.s32.totalorder %v1053, %v396
          %v1055 = vsel %vm1054, 1, 0
          %v1056 = vcvt.s32.f32 %v1055
          %v1057 = vmul.f32 %v1056, %v1048
          %v1058 = vsel %vm575, %v1057, 0.0
          %v1059 = vrot.slane %v1058, 4
          %v1060 = vadd.f32 %v1058, %v1059
          %v1061 = vrot.slane %v1060, 2
          %v1062 = vadd.f32 %v1060, %v1061
          %v1063 = vrot.slane %v1062, 1
          %v1064 = vadd.f32 %v1062, %v1063
          %v1065 = vmul.f32 %v1064, %v1046
          %v1066 = vadd.f32 %v948, %v1065
          %vm1067 = vcmp.gt.f32.partialorder %v1046, 0.0
          %v1068 = vsel %vm1067, %v1049, %v950
          %v1069 = vsel %vm575, %v1045, -inf
          %v1070 = vrot.slane %v1069, 4
          %v1071 = vmax.f32 %v1069, %v1070
          %v1072 = vrot.slane %v1071, 2
          %v1073 = vmax.f32 %v1071, %v1072
          %v1074 = vrot.slane %v1073, 1
          %v1075 = vmax.f32 %v1073, %v1074
          %v1076 = vsub.f32 %v1045, %v1075
          %v1077 = vmul.f32 %v1076, 1.442695
          %v1078 = vpow.pop %v1077
          %v1080 = vsel %vm601, %v1078, 0
          %1082 = vmatprep.subr.mxu0 0.0
          %1083 = vmatpush1.msra.mxu0 %v1080
          %1084 = vmatprep.subr.mxu0 0.0
          %1085 = vmatpush1.msra.mxu0 0.0
          %1086 = vmatprep.subr.mxu0 0.0
          %1087 = vmatpush1.msra.mxu0 0.0
          %1088 = vmatprep.subr.mxu0 0.0
          %1089 = vmatpush1.msra.mxu0 0.0
          %1090 = vmatprep.subr.mxu0 0.0
          %1091 = vmatpush1.msra.mxu0 0.0
          %1092 = vmatprep.subr.mxu0 0.0
          %1093 = vmatpush1.msra.mxu0 0.0
          %1094 = vmatprep.subr.mxu0 0.0
          %1095 = vmatpush1.msra.mxu0 0.0
          %1096 = vmatprep.subr.mxu0 0.0
          %1097 = vmatpush1.msra.mxu0 0.0
          %1098 = vmatprep.subr.mxu0 0.0
          %1099 = vmatpush1.msra.mxu0 0.0
          %1100 = vmatprep.subr.mxu0 0.0
          %1101 = vmatpush1.msra.mxu0 0.0
          %1102 = vmatprep.subr.mxu0 0.0
          %1103 = vmatpush1.msra.mxu0 0.0
          %1104 = vmatprep.subr.mxu0 0.0
          %1105 = vmatpush1.msra.mxu0 0.0
          %1106 = vmatprep.subr.mxu0 0.0
          %1107 = vmatpush1.msra.mxu0 0.0
          %1108 = vmatprep.subr.mxu0 0.0
          %1109 = vmatpush1.msra.mxu0 0.0
          %1110 = vmatprep.subr.mxu0 0.0
          %1111 = vmatpush1.msra.mxu0 0.0
          %1112 = vmatprep.subr.mxu0 0.0
          %1113 = vmatpush1.msra.mxu0 0.0
          %1114 = vmatprep.subr.mxu0 0.0
          %1115 = vmatpush1.msra.mxu0 0.0
          %1116 = vmatprep.subr.mxu0 0.0
          %1117 = vmatpush1.msra.mxu0 0.0
          %1118 = vmatprep.subr.mxu0 0.0
          %1119 = vmatpush1.msra.mxu0 0.0
          %1120 = vmatprep.subr.mxu0 0.0
          %1121 = vmatpush1.msra.mxu0 0.0
          %1122 = vmatprep.subr.mxu0 0.0
          %1123 = vmatpush1.msra.mxu0 0.0
          %1124 = vmatprep.subr.mxu0 0.0
          %1125 = vmatpush1.msra.mxu0 0.0
          %1126 = vmatprep.subr.mxu0 0.0
          %1127 = vmatpush1.msra.mxu0 0.0
          %1128 = vmatprep.subr.mxu0 0.0
          %1129 = vmatpush1.msra.mxu0 0.0
          %1130 = vmatprep.subr.mxu0 0.0
          %1131 = vmatpush1.msra.mxu0 0.0
          %1132 = vmatprep.subr.mxu0 0.0
          %1133 = vmatpush1.msra.mxu0 0.0
          %1134 = vmatprep.subr.mxu0 0.0
          %1135 = vmatpush1.msra.mxu0 0.0
          %1136 = vmatprep.subr.mxu0 0.0
          %1137 = vmatpush1.msra.mxu0 0.0
          %1138 = vmatprep.subr.mxu0 0.0
          %1139 = vmatpush1.msra.mxu0 0.0
          %1140 = vmatprep.subr.mxu0 0.0
          %1141 = vmatpush1.msra.mxu0 0.0
          %1142 = vmatprep.subr.mxu0 0.0
          %1143 = vmatpush1.msra.mxu0 0.0
          %1144 = vmatprep.subr.mxu0 0.0
          %1145 = vmatpush1.msra.mxu0 0.0
          %1146 = vmatprep.mubr.f32.mxu0 0.0
          %1147 = vmatmul.mubr.f32.gmra.mrb[0].mxu0 %v599
          %v1148 = vpop.f32.mrb[0].mxu0
          %v1149 = vadd.f32 0.0, %v1148
          %v1150 = vpop.f32.mrb[0].mxu0
          %1151 = vdwg.mxu0
          %v1152 = vlog2.pop %v1149
          %v1153 = vmul.f32 %v1152, 0.6931472
          %v1154 = vadd.f32 %v1153, %v1075
          %v1155 = vadd.f32 %v1154, %v681
          %v1156 = vadd.f32 %v1155, %v1048
          %v1157 = vsel %vm1067, 1, 0
          %v1158 = vlaneseq
          %v1159 = vshrl.u32 %v1158, 7
          %v1160 = vsub.s32 0, %v1159
          %v1161 = vrot.slane %v1157, %v1160
          %vm1162 = vcmp.eq.s32.totalorder %v1161, 1
          %v1163 = vsel %vm1162, %v1156, %v1045
          %v1164 = vld [vmem:[%s391 + $0x6] sm:$0x1]
          %s1165 = scalar_lea.vmem %s376, 48
          %v1166 = vld [vmem:[%s1165] sm:$0x1f]
          %v1167 = vld [vmem:[%s384 + $0x6] sm:$0x1]
          %v1168 = vlaneseq
          %v1169 = vshrl.u32 %v1168, 7
          %v1170 = vsub.s32 0, %v1169
          %v1171 = vrot.slane %v1167, %v1170
          %vm1172 = vcmp.eq.s32.totalorder %v1171, %v396
          %v1173 = vsel %vm1172, 1, 0
          %v1174 = vcvt.s32.f32 %v1173
          %v1175 = vmul.f32 %v1174, %v1166
          %v1176 = vsel %vm575, %v1175, 0.0
          %v1177 = vrot.slane %v1176, 4
          %v1178 = vadd.f32 %v1176, %v1177
          %v1179 = vrot.slane %v1178, 2
          %v1180 = vadd.f32 %v1178, %v1179
          %v1181 = vrot.slane %v1180, 1
          %v1182 = vadd.f32 %v1180, %v1181
          %v1183 = vmul.f32 %v1182, %v1164
          %v1184 = vadd.f32 %v1066, %v1183
          %vm1185 = vcmp.gt.f32.partialorder %v1164, 0.0
          %v1186 = vsel %vm1185, %v1167, %v1068
          %v1187 = vsel %vm575, %v1163, -inf
          %v1188 = vrot.slane %v1187, 4
          %v1189 = vmax.f32 %v1187, %v1188
          %v1190 = vrot.slane %v1189, 2
          %v1191 = vmax.f32 %v1189, %v1190
          %v1192 = vrot.slane %v1191, 1
          %v1193 = vmax.f32 %v1191, %v1192
          %v1194 = vsub.f32 %v1163, %v1193
          %v1195 = vmul.f32 %v1194, 1.442695
          %v1196 = vpow.pop %v1195
          %v1198 = vsel %vm601, %v1196, 0
          %1200 = vmatprep.subr.mxu0 0.0
          %1201 = vmatpush1.msra.mxu0 %v1198
          %1202 = vmatprep.subr.mxu0 0.0
          %1203 = vmatpush1.msra.mxu0 0.0
          %1204 = vmatprep.subr.mxu0 0.0
          %1205 = vmatpush1.msra.mxu0 0.0
          %1206 = vmatprep.subr.mxu0 0.0
          %1207 = vmatpush1.msra.mxu0 0.0
          %1208 = vmatprep.subr.mxu0 0.0
          %1209 = vmatpush1.msra.mxu0 0.0
          %1210 = vmatprep.subr.mxu0 0.0
          %1211 = vmatpush1.msra.mxu0 0.0
          %1212 = vmatprep.subr.mxu0 0.0
          %1213 = vmatpush1.msra.mxu0 0.0
          %1214 = vmatprep.subr.mxu0 0.0
          %1215 = vmatpush1.msra.mxu0 0.0
          %1216 = vmatprep.subr.mxu0 0.0
          %1217 = vmatpush1.msra.mxu0 0.0
          %1218 = vmatprep.subr.mxu0 0.0
          %1219 = vmatpush1.msra.mxu0 0.0
          %1220 = vmatprep.subr.mxu0 0.0
          %1221 = vmatpush1.msra.mxu0 0.0
          %1222 = vmatprep.subr.mxu0 0.0
          %1223 = vmatpush1.msra.mxu0 0.0
          %1224 = vmatprep.subr.mxu0 0.0
          %1225 = vmatpush1.msra.mxu0 0.0
          %1226 = vmatprep.subr.mxu0 0.0
          %1227 = vmatpush1.msra.mxu0 0.0
          %1228 = vmatprep.subr.mxu0 0.0
          %1229 = vmatpush1.msra.mxu0 0.0
          %1230 = vmatprep.subr.mxu0 0.0
          %1231 = vmatpush1.msra.mxu0 0.0
          %1232 = vmatprep.subr.mxu0 0.0
          %1233 = vmatpush1.msra.mxu0 0.0
          %1234 = vmatprep.subr.mxu0 0.0
          %1235 = vmatpush1.msra.mxu0 0.0
          %1236 = vmatprep.subr.mxu0 0.0
          %1237 = vmatpush1.msra.mxu0 0.0
          %1238 = vmatprep.subr.mxu0 0.0
          %1239 = vmatpush1.msra.mxu0 0.0
          %1240 = vmatprep.subr.mxu0 0.0
          %1241 = vmatpush1.msra.mxu0 0.0
          %1242 = vmatprep.subr.mxu0 0.0
          %1243 = vmatpush1.msra.mxu0 0.0
          %1244 = vmatprep.subr.mxu0 0.0
          %1245 = vmatpush1.msra.mxu0 0.0
          %1246 = vmatprep.subr.mxu0 0.0
          %1247 = vmatpush1.msra.mxu0 0.0
          %1248 = vmatprep.subr.mxu0 0.0
          %1249 = vmatpush1.msra.mxu0 0.0
          %1250 = vmatprep.subr.mxu0 0.0
          %1251 = vmatpush1.msra.mxu0 0.0
          %1252 = vmatprep.subr.mxu0 0.0
          %1253 = vmatpush1.msra.mxu0 0.0
          %1254 = vmatprep.subr.mxu0 0.0
          %1255 = vmatpush1.msra.mxu0 0.0
          %1256 = vmatprep.subr.mxu0 0.0
          %1257 = vmatpush1.msra.mxu0 0.0
          %1258 = vmatprep.subr.mxu0 0.0
          %1259 = vmatpush1.msra.mxu0 0.0
          %1260 = vmatprep.subr.mxu0 0.0
          %1261 = vmatpush1.msra.mxu0 0.0
          %1262 = vmatprep.subr.mxu0 0.0
          %1263 = vmatpush1.msra.mxu0 0.0
          %1264 = vmatprep.mubr.f32.mxu0 0.0
          %1265 = vmatmul.mubr.f32.gmra.mrb[0].mxu0 %v599
          %v1266 = vpop.f32.mrb[0].mxu0
          %v1267 = vadd.f32 0.0, %v1266
          %v1268 = vpop.f32.mrb[0].mxu0
          %1269 = vdwg.mxu0
          %v1270 = vlog2.pop %v1267
          %v1271 = vmul.f32 %v1270, 0.6931472
          %v1272 = vadd.f32 %v1271, %v1193
          %v1273 = vadd.f32 %v1272, %v681
          %v1274 = vadd.f32 %v1273, %v1166
          %v1275 = vsel %vm1185, 1, 0
          %v1276 = vlaneseq
          %v1277 = vshrl.u32 %v1276, 7
          %v1278 = vsub.s32 0, %v1277
          %v1279 = vrot.slane %v1275, %v1278
          %vm1280 = vcmp.eq.s32.totalorder %v1279, 1
          %v1281 = vsel %vm1280, %v1274, %v1163
          %v1282 = vld [vmem:[%s391 + $0x7] sm:$0x1]
          %s1283 = scalar_lea.vmem %s376, 56
          %v1284 = vld [vmem:[%s1283] sm:$0x1f]
          %v1285 = vld [vmem:[%s384 + $0x7] sm:$0x1]
          %v1286 = vlaneseq
          %v1287 = vshrl.u32 %v1286, 7
          %v1288 = vsub.s32 0, %v1287
          %v1289 = vrot.slane %v1285, %v1288
          %vm1290 = vcmp.eq.s32.totalorder %v1289, %v396
          %v1291 = vsel %vm1290, 1, 0
          %v1292 = vcvt.s32.f32 %v1291
          %v1293 = vmul.f32 %v1292, %v1284
          %v1294 = vsel %vm575, %v1293, 0.0
          %v1295 = vrot.slane %v1294, 4
          %v1296 = vadd.f32 %v1294, %v1295
          %v1297 = vrot.slane %v1296, 2
          %v1298 = vadd.f32 %v1296, %v1297
          %v1299 = vrot.slane %v1298, 1
          %v1300 = vadd.f32 %v1298, %v1299
          %v1301 = vmul.f32 %v1300, %v1282
          %v1302 = vadd.f32 %v1184, %v1301
          %vm1303 = vcmp.gt.f32.partialorder %v1282, 0.0
          %v1304 = vsel %vm1303, %v1285, %v1186
          %v1305 = vsel %vm575, %v1281, -inf
          %v1306 = vrot.slane %v1305, 4
          %v1307 = vmax.f32 %v1305, %v1306
          %v1308 = vrot.slane %v1307, 2
          %v1309 = vmax.f32 %v1307, %v1308
          %v1310 = vrot.slane %v1309, 1
          %v1311 = vmax.f32 %v1309, %v1310
          %v1312 = vsub.f32 %v1281, %v1311
          %v1313 = vmul.f32 %v1312, 1.442695
          %v1314 = vpow.pop %v1313
          %v1316 = vsel %vm601, %v1314, 0
          %1318 = vmatprep.subr.mxu0 0.0
          %1319 = vmatpush1.msra.mxu0 %v1316
          %1320 = vmatprep.subr.mxu0 0.0
          %1321 = vmatpush1.msra.mxu0 0.0
          %1322 = vmatprep.subr.mxu0 0.0
          %1323 = vmatpush1.msra.mxu0 0.0
          %1324 = vmatprep.subr.mxu0 0.0
          %1325 = vmatpush1.msra.mxu0 0.0
          %1326 = vmatprep.subr.mxu0 0.0
          %1327 = vmatpush1.msra.mxu0 0.0
          %1328 = vmatprep.subr.mxu0 0.0
          %1329 = vmatpush1.msra.mxu0 0.0
          %1330 = vmatprep.subr.mxu0 0.0
          %1331 = vmatpush1.msra.mxu0 0.0
          %1332 = vmatprep.subr.mxu0 0.0
          %1333 = vmatpush1.msra.mxu0 0.0
          %1334 = vmatprep.subr.mxu0 0.0
          %1335 = vmatpush1.msra.mxu0 0.0
          %1336 = vmatprep.subr.mxu0 0.0
          %1337 = vmatpush1.msra.mxu0 0.0
          %1338 = vmatprep.subr.mxu0 0.0
          %1339 = vmatpush1.msra.mxu0 0.0
          %1340 = vmatprep.subr.mxu0 0.0
          %1341 = vmatpush1.msra.mxu0 0.0
          %1342 = vmatprep.subr.mxu0 0.0
          %1343 = vmatpush1.msra.mxu0 0.0
          %1344 = vmatprep.subr.mxu0 0.0
          %1345 = vmatpush1.msra.mxu0 0.0
          %1346 = vmatprep.subr.mxu0 0.0
          %1347 = vmatpush1.msra.mxu0 0.0
          %1348 = vmatprep.subr.mxu0 0.0
          %1349 = vmatpush1.msra.mxu0 0.0
          %1350 = vmatprep.subr.mxu0 0.0
          %1351 = vmatpush1.msra.mxu0 0.0
          %1352 = vmatprep.subr.mxu0 0.0
          %1353 = vmatpush1.msra.mxu0 0.0
          %1354 = vmatprep.subr.mxu0 0.0
          %1355 = vmatpush1.msra.mxu0 0.0
          %1356 = vmatprep.subr.mxu0 0.0
          %1357 = vmatpush1.msra.mxu0 0.0
          %1358 = vmatprep.subr.mxu0 0.0
          %1359 = vmatpush1.msra.mxu0 0.0
          %1360 = vmatprep.subr.mxu0 0.0
          %1361 = vmatpush1.msra.mxu0 0.0
          %1362 = vmatprep.subr.mxu0 0.0
          %1363 = vmatpush1.msra.mxu0 0.0
          %1364 = vmatprep.subr.mxu0 0.0
          %1365 = vmatpush1.msra.mxu0 0.0
          %1366 = vmatprep.subr.mxu0 0.0
          %1367 = vmatpush1.msra.mxu0 0.0
          %1368 = vmatprep.subr.mxu0 0.0
          %1369 = vmatpush1.msra.mxu0 0.0
          %1370 = vmatprep.subr.mxu0 0.0
          %1371 = vmatpush1.msra.mxu0 0.0
          %1372 = vmatprep.subr.mxu0 0.0
          %1373 = vmatpush1.msra.mxu0 0.0
          %1374 = vmatprep.subr.mxu0 0.0
          %1375 = vmatpush1.msra.mxu0 0.0
          %1376 = vmatprep.subr.mxu0 0.0
          %1377 = vmatpush1.msra.mxu0 0.0
          %1378 = vmatprep.subr.mxu0 0.0
          %1379 = vmatpush1.msra.mxu0 0.0
          %1380 = vmatprep.subr.mxu0 0.0
          %1381 = vmatpush1.msra.mxu0 0.0
          %1382 = vmatprep.mubr.f32.mxu0 0.0
          %1383 = vmatmul.mubr.f32.gmra.mrb[0].mxu0 %v599
          %v1384 = vpop.f32.mrb[0].mxu0
          %v1385 = vadd.f32 0.0, %v1384
          %v1386 = vpop.f32.mrb[0].mxu0
          %1387 = vdwg.mxu0
          %v1388 = vlog2.pop %v1385
          %v1389 = vmul.f32 %v1388, 0.6931472
          %v1390 = vadd.f32 %v1389, %v1311
          %v1391 = vadd.f32 %v1390, %v681
          %v1392 = vadd.f32 %v1391, %v1284
          %v1393 = vsel %vm1303, 1, 0
          %v1394 = vlaneseq
          %v1395 = vshrl.u32 %v1394, 7
          %v1396 = vsub.s32 0, %v1395
          %v1397 = vrot.slane %v1393, %v1396
          %vm1398 = vcmp.eq.s32.totalorder %v1397, 1
          %v1399 = vsel %vm1398, %v1392, %v1281
          %1400 = vst.msk [vmem:[#allocation2] sm:$0x1f] %vm575, %v1399
          %vm1401 = vcmask 24576
          %1402 = vst.msk [vmem:[#allocation3] sm:$0x1] %vm1401, %v1302
          %1403 = vst.msk [vmem:[#allocation4] sm:$0x1] %vm1401, %v1304
        $region64: #{tpu_custom_call.1} parent=51 // pred_fallthru
          _
        %p1404 = scmp.gt.s32.totalorder %s26, 0
        // Predicated region
        $region65: #{tpu_custom_call.1} parent=51 // pred_check
          %p1405 = pneg %p1404
        $region66: #{tpu_custom_call.1} parent=51 // pred_check_branch
          %1407 = sbr.rel (%p1405) target = $region68
        $region67: #{tpu_custom_call.1} parent=51 // pred_region
          %v1408 = vld [vmem:[#allocation2] sm:$0x1f]
          %v1409 = vld [vmem:[#allocation3] sm:$0x1]
          %v1410 = vadd.f32 %v1409, %v555
          %v1411 = vld [vmem:[#allocation4] sm:$0x1]
          %v1412 = vld [vmem:[%s391] sm:$0x1]
          %v1413 = vld [vmem:[%s376] sm:$0x1f]
          %v1414 = vld [vmem:[%s384] sm:$0x1]
          %v1415 = vlaneseq
          %v1416 = vshrl.u32 %v1415, 7
          %v1417 = vsub.s32 0, %v1416
          %v1418 = vrot.slane %v1414, %v1417
          %vm1419 = vcmp.eq.s32.totalorder %v1418, %v396
          %v1420 = vsel %vm1419, 1, 0
          %v1421 = vcvt.s32.f32 %v1420
          %v1422 = vmul.f32 %v1421, %v1413
          %vm1423 = vcmask 28672
          %v1424 = vsel %vm1423, %v1422, 0.0
          %v1425 = vrot.slane %v1424, 4
          %v1426 = vadd.f32 %v1424, %v1425
          %v1427 = vrot.slane %v1426, 2
          %v1428 = vadd.f32 %v1426, %v1427
          %v1429 = vrot.slane %v1428, 1
          %v1430 = vadd.f32 %v1428, %v1429
          %v1431 = vmul.f32 %v1430, %v1412
          %v1432 = vadd.f32 %v1410, %v1431
          %vm1433 = vcmp.gt.f32.partialorder %v1412, 0.0
          %v1434 = vsel %vm1433, %v1414, %v1411
          %v1435 = vsel %vm1423, %v1408, -inf
          %v1436 = vrot.slane %v1435, 4
          %v1437 = vmax.f32 %v1435, %v1436
          %v1438 = vrot.slane %v1437, 2
          %v1439 = vmax.f32 %v1437, %v1438
          %v1440 = vrot.slane %v1439, 1
          %v1441 = vmax.f32 %v1439, %v1440
          %v1442 = vsub.f32 %v1408, %v1441
          %v1443 = vmul.f32 %v1442, 1.442695
          %v1444 = vpow.pop %v1443
          %vm1445 = vcmask 39936
          %v1447 = vsel %vm1445, %v392, 0
          %vm1449 = vcmask 1044480
          %v1451 = vsel %vm1449, %v1444, 0
          %1453 = vmatprep.subr.mxu0 0.0
          %1454 = vmatpush1.msra.mxu0 %v1451
          %1455 = vmatprep.subr.mxu0 0.0
          %1456 = vmatpush1.msra.mxu0 0.0
          %1457 = vmatprep.subr.mxu0 0.0
          %1458 = vmatpush1.msra.mxu0 0.0
          %1459 = vmatprep.subr.mxu0 0.0
          %1460 = vmatpush1.msra.mxu0 0.0
          %1461 = vmatprep.subr.mxu0 0.0
          %1462 = vmatpush1.msra.mxu0 0.0
          %1463 = vmatprep.subr.mxu0 0.0
          %1464 = vmatpush1.msra.mxu0 0.0
          %1465 = vmatprep.subr.mxu0 0.0
          %1466 = vmatpush1.msra.mxu0 0.0
          %1467 = vmatprep.subr.mxu0 0.0
          %1468 = vmatpush1.msra.mxu0 0.0
          %1469 = vmatprep.subr.mxu0 0.0
          %1470 = vmatpush1.msra.mxu0 0.0
          %1471 = vmatprep.subr.mxu0 0.0
          %1472 = vmatpush1.msra.mxu0 0.0
          %1473 = vmatprep.subr.mxu0 0.0
          %1474 = vmatpush1.msra.mxu0 0.0
          %1475 = vmatprep.subr.mxu0 0.0
          %1476 = vmatpush1.msra.mxu0 0.0
          %1477 = vmatprep.subr.mxu0 0.0
          %1478 = vmatpush1.msra.mxu0 0.0
          %1479 = vmatprep.subr.mxu0 0.0
          %1480 = vmatpush1.msra.mxu0 0.0
          %1481 = vmatprep.subr.mxu0 0.0
          %1482 = vmatpush1.msra.mxu0 0.0
          %1483 = vmatprep.subr.mxu0 0.0
          %1484 = vmatpush1.msra.mxu0 0.0
          %1485 = vmatprep.subr.mxu0 0.0
          %1486 = vmatpush1.msra.mxu0 0.0
          %1487 = vmatprep.subr.mxu0 0.0
          %1488 = vmatpush1.msra.mxu0 0.0
          %1489 = vmatprep.subr.mxu0 0.0
          %1490 = vmatpush1.msra.mxu0 0.0
          %1491 = vmatprep.subr.mxu0 0.0
          %1492 = vmatpush1.msra.mxu0 0.0
          %1493 = vmatprep.subr.mxu0 0.0
          %1494 = vmatpush1.msra.mxu0 0.0
          %1495 = vmatprep.subr.mxu0 0.0
          %1496 = vmatpush1.msra.mxu0 0.0
          %1497 = vmatprep.subr.mxu0 0.0
          %1498 = vmatpush1.msra.mxu0 0.0
          %1499 = vmatprep.subr.mxu0 0.0
          %1500 = vmatpush1.msra.mxu0 0.0
          %1501 = vmatprep.subr.mxu0 0.0
          %1502 = vmatpush1.msra.mxu0 0.0
          %1503 = vmatprep.subr.mxu0 0.0
          %1504 = vmatpush1.msra.mxu0 0.0
          %1505 = vmatprep.subr.mxu0 0.0
          %1506 = vmatpush1.msra.mxu0 0.0
          %1507 = vmatprep.subr.mxu0 0.0
          %1508 = vmatpush1.msra.mxu0 0.0
          %1509 = vmatprep.subr.mxu0 0.0
          %1510 = vmatpush1.msra.mxu0 0.0
          %1511 = vmatprep.subr.mxu0 0.0
          %1512 = vmatpush1.msra.mxu0 0.0
          %1513 = vmatprep.subr.mxu0 0.0
          %1514 = vmatpush1.msra.mxu0 0.0
          %1515 = vmatprep.subr.mxu0 0.0
          %1516 = vmatpush1.msra.mxu0 0.0
          %1517 = vmatprep.mubr.f32.mxu0 0.0
          %1518 = vmatmul.mubr.f32.gmra.mrb[0].mxu0 %v1447
          %v1519 = vpop.f32.mrb[0].mxu0
          %v1520 = vadd.f32 0.0, %v1519
          %v1521 = vpop.f32.mrb[0].mxu0
          %1522 = vdwg.mxu0
          %v1523 = vlog2.pop %v1520
          %v1524 = vmul.f32 %v1523, 0.6931472
          %v1525 = vadd.f32 %v1524, %v1441
          %1527 = vset.pattern.permute.xlu0 0
          %1528 = vperm.xlu0 %1527, %v393
          %v1529 = vpop.permute.xlu0 %1528
          %v1531 = vadd.f32 %v1525, %v1529
          %v1532 = vadd.f32 %v1531, %v1413
          %v1533 = vsel %vm1433, 1, 0
          %v1534 = vlaneseq
          %v1535 = vshrl.u32 %v1534, 7
          %v1536 = vsub.s32 0, %v1535
          %v1537 = vrot.slane %v1533, %v1536
          %vm1538 = vcmp.eq.s32.totalorder %v1537, 1
          %v1539 = vsel %vm1538, %v1532, %v1408
          %v1540 = vld [vmem:[%s391 + $0x1] sm:$0x1]
          %s1541 = scalar_lea.vmem %s376, 8
          %v1542 = vld [vmem:[%s1541] sm:$0x1f]
          %v1543 = vld [vmem:[%s384 + $0x1] sm:$0x1]
          %v1544 = vlaneseq
          %v1545 = vshrl.u32 %v1544, 7
          %v1546 = vsub.s32 0, %v1545
          %v1547 = vrot.slane %v1543, %v1546
          %vm1548 = vcmp.eq.s32.totalorder %v1547, %v396
          %v1549 = vsel %vm1548, 1, 0
          %v1550 = vcvt.s32.f32 %v1549
          %v1551 = vmul.f32 %v1550, %v1542
          %v1552 = vsel %vm1423, %v1551, 0.0
          %v1553 = vrot.slane %v1552, 4
          %v1554 = vadd.f32 %v1552, %v1553
          %v1555 = vrot.slane %v1554, 2
          %v1556 = vadd.f32 %v1554, %v1555
          %v1557 = vrot.slane %v1556, 1
          %v1558 = vadd.f32 %v1556, %v1557
          %v1559 = vmul.f32 %v1558, %v1540
          %v1560 = vadd.f32 %v1432, %v1559
          %vm1561 = vcmp.gt.f32.partialorder %v1540, 0.0
          %v1562 = vsel %vm1561, %v1543, %v1434
          %v1563 = vsel %vm1423, %v1539, -inf
          %v1564 = vrot.slane %v1563, 4
          %v1565 = vmax.f32 %v1563, %v1564
          %v1566 = vrot.slane %v1565, 2
          %v1567 = vmax.f32 %v1565, %v1566
          %v1568 = vrot.slane %v1567, 1
          %v1569 = vmax.f32 %v1567, %v1568
          %v1570 = vsub.f32 %v1539, %v1569
          %v1571 = vmul.f32 %v1570, 1.442695
          %v1572 = vpow.pop %v1571
          %v1574 = vsel %vm1449, %v1572, 0
          %1576 = vmatprep.subr.mxu0 0.0
          %1577 = vmatpush1.msra.mxu0 %v1574
          %1578 = vmatprep.subr.mxu0 0.0
          %1579 = vmatpush1.msra.mxu0 0.0
          %1580 = vmatprep.subr.mxu0 0.0
          %1581 = vmatpush1.msra.mxu0 0.0
          %1582 = vmatprep.subr.mxu0 0.0
          %1583 = vmatpush1.msra.mxu0 0.0
          %1584 = vmatprep.subr.mxu0 0.0
          %1585 = vmatpush1.msra.mxu0 0.0
          %1586 = vmatprep.subr.mxu0 0.0
          %1587 = vmatpush1.msra.mxu0 0.0
          %1588 = vmatprep.subr.mxu0 0.0
          %1589 = vmatpush1.msra.mxu0 0.0
          %1590 = vmatprep.subr.mxu0 0.0
          %1591 = vmatpush1.msra.mxu0 0.0
          %1592 = vmatprep.subr.mxu0 0.0
          %1593 = vmatpush1.msra.mxu0 0.0
          %1594 = vmatprep.subr.mxu0 0.0
          %1595 = vmatpush1.msra.mxu0 0.0
          %1596 = vmatprep.subr.mxu0 0.0
          %1597 = vmatpush1.msra.mxu0 0.0
          %1598 = vmatprep.subr.mxu0 0.0
          %1599 = vmatpush1.msra.mxu0 0.0
          %1600 = vmatprep.subr.mxu0 0.0
          %1601 = vmatpush1.msra.mxu0 0.0
          %1602 = vmatprep.subr.mxu0 0.0
          %1603 = vmatpush1.msra.mxu0 0.0
          %1604 = vmatprep.subr.mxu0 0.0
          %1605 = vmatpush1.msra.mxu0 0.0
          %1606 = vmatprep.subr.mxu0 0.0
          %1607 = vmatpush1.msra.mxu0 0.0
          %1608 = vmatprep.subr.mxu0 0.0
          %1609 = vmatpush1.msra.mxu0 0.0
          %1610 = vmatprep.subr.mxu0 0.0
          %1611 = vmatpush1.msra.mxu0 0.0
          %1612 = vmatprep.subr.mxu0 0.0
          %1613 = vmatpush1.msra.mxu0 0.0
          %1614 = vmatprep.subr.mxu0 0.0
          %1615 = vmatpush1.msra.mxu0 0.0
          %1616 = vmatprep.subr.mxu0 0.0
          %1617 = vmatpush1.msra.mxu0 0.0
          %1618 = vmatprep.subr.mxu0 0.0
          %1619 = vmatpush1.msra.mxu0 0.0
          %1620 = vmatprep.subr.mxu0 0.0
          %1621 = vmatpush1.msra.mxu0 0.0
          %1622 = vmatprep.subr.mxu0 0.0
          %1623 = vmatpush1.msra.mxu0 0.0
          %1624 = vmatprep.subr.mxu0 0.0
          %1625 = vmatpush1.msra.mxu0 0.0
          %1626 = vmatprep.subr.mxu0 0.0
          %1627 = vmatpush1.msra.mxu0 0.0
          %1628 = vmatprep.subr.mxu0 0.0
          %1629 = vmatpush1.msra.mxu0 0.0
          %1630 = vmatprep.subr.mxu0 0.0
          %1631 = vmatpush1.msra.mxu0 0.0
          %1632 = vmatprep.subr.mxu0 0.0
          %1633 = vmatpush1.msra.mxu0 0.0
          %1634 = vmatprep.subr.mxu0 0.0
          %1635 = vmatpush1.msra.mxu0 0.0
          %1636 = vmatprep.subr.mxu0 0.0
          %1637 = vmatpush1.msra.mxu0 0.0
          %1638 = vmatprep.subr.mxu0 0.0
          %1639 = vmatpush1.msra.mxu0 0.0
          %1640 = vmatprep.mubr.f32.mxu0 0.0
          %1641 = vmatmul.mubr.f32.gmra.mrb[0].mxu0 %v1447
          %v1642 = vpop.f32.mrb[0].mxu0
          %v1643 = vadd.f32 0.0, %v1642
          %v1644 = vpop.f32.mrb[0].mxu0
          %1645 = vdwg.mxu0
          %v1646 = vlog2.pop %v1643
          %v1647 = vmul.f32 %v1646, 0.6931472
          %v1648 = vadd.f32 %v1647, %v1569
          %v1649 = vadd.f32 %v1648, %v1529
          %v1650 = vadd.f32 %v1649, %v1542
          %v1651 = vsel %vm1561, 1, 0
          %v1652 = vlaneseq
          %v1653 = vshrl.u32 %v1652, 7
          %v1654 = vsub.s32 0, %v1653
          %v1655 = vrot.slane %v1651, %v1654
          %vm1656 = vcmp.eq.s32.totalorder %v1655, 1
          %v1657 = vsel %vm1656, %v1650, %v1539
          %v1658 = vld [vmem:[%s391 + $0x2] sm:$0x1]
          %s1659 = scalar_lea.vmem %s376, 16
          %v1660 = vld [vmem:[%s1659] sm:$0x1f]
          %v1661 = vld [vmem:[%s384 + $0x2] sm:$0x1]
          %v1662 = vlaneseq
          %v1663 = vshrl.u32 %v1662, 7
          %v1664 = vsub.s32 0, %v1663
          %v1665 = vrot.slane %v1661, %v1664
          %vm1666 = vcmp.eq.s32.totalorder %v1665, %v396
          %v1667 = vsel %vm1666, 1, 0
          %v1668 = vcvt.s32.f32 %v1667
          %v1669 = vmul.f32 %v1668, %v1660
          %v1670 = vsel %vm1423, %v1669, 0.0
          %v1671 = vrot.slane %v1670, 4
          %v1672 = vadd.f32 %v1670, %v1671
          %v1673 = vrot.slane %v1672, 2
          %v1674 = vadd.f32 %v1672, %v1673
          %v1675 = vrot.slane %v1674, 1
          %v1676 = vadd.f32 %v1674, %v1675
          %v1677 = vmul.f32 %v1676, %v1658
          %v1678 = vadd.f32 %v1560, %v1677
          %vm1679 = vcmp.gt.f32.partialorder %v1658, 0.0
          %v1680 = vsel %vm1679, %v1661, %v1562
          %v1681 = vsel %vm1423, %v1657, -inf
          %v1682 = vrot.slane %v1681, 4
          %v1683 = vmax.f32 %v1681, %v1682
          %v1684 = vrot.slane %v1683, 2
          %v1685 = vmax.f32 %v1683, %v1684
          %v1686 = vrot.slane %v1685, 1
          %v1687 = vmax.f32 %v1685, %v1686
          %v1688 = vsub.f32 %v1657, %v1687
          %v1689 = vmul.f32 %v1688, 1.442695
          %v1690 = vpow.pop %v1689
          %v1692 = vsel %vm1449, %v1690, 0
          %1694 = vmatprep.subr.mxu0 0.0
          %1695 = vmatpush1.msra.mxu0 %v1692
          %1696 = vmatprep.subr.mxu0 0.0
          %1697 = vmatpush1.msra.mxu0 0.0
          %1698 = vmatprep.subr.mxu0 0.0
          %1699 = vmatpush1.msra.mxu0 0.0
          %1700 = vmatprep.subr.mxu0 0.0
          %1701 = vmatpush1.msra.mxu0 0.0
          %1702 = vmatprep.subr.mxu0 0.0
          %1703 = vmatpush1.msra.mxu0 0.0
          %1704 = vmatprep.subr.mxu0 0.0
          %1705 = vmatpush1.msra.mxu0 0.0
          %1706 = vmatprep.subr.mxu0 0.0
          %1707 = vmatpush1.msra.mxu0 0.0
          %1708 = vmatprep.subr.mxu0 0.0
          %1709 = vmatpush1.msra.mxu0 0.0
          %1710 = vmatprep.subr.mxu0 0.0
          %1711 = vmatpush1.msra.mxu0 0.0
          %1712 = vmatprep.subr.mxu0 0.0
          %1713 = vmatpush1.msra.mxu0 0.0
          %1714 = vmatprep.subr.mxu0 0.0
          %1715 = vmatpush1.msra.mxu0 0.0
          %1716 = vmatprep.subr.mxu0 0.0
          %1717 = vmatpush1.msra.mxu0 0.0
          %1718 = vmatprep.subr.mxu0 0.0
          %1719 = vmatpush1.msra.mxu0 0.0
          %1720 = vmatprep.subr.mxu0 0.0
          %1721 = vmatpush1.msra.mxu0 0.0
          %1722 = vmatprep.subr.mxu0 0.0
          %1723 = vmatpush1.msra.mxu0 0.0
          %1724 = vmatprep.subr.mxu0 0.0
          %1725 = vmatpush1.msra.mxu0 0.0
          %1726 = vmatprep.subr.mxu0 0.0
          %1727 = vmatpush1.msra.mxu0 0.0
          %1728 = vmatprep.subr.mxu0 0.0
          %1729 = vmatpush1.msra.mxu0 0.0
          %1730 = vmatprep.subr.mxu0 0.0
          %1731 = vmatpush1.msra.mxu0 0.0
          %1732 = vmatprep.subr.mxu0 0.0
          %1733 = vmatpush1.msra.mxu0 0.0
          %1734 = vmatprep.subr.mxu0 0.0
          %1735 = vmatpush1.msra.mxu0 0.0
          %1736 = vmatprep.subr.mxu0 0.0
          %1737 = vmatpush1.msra.mxu0 0.0
          %1738 = vmatprep.subr.mxu0 0.0
          %1739 = vmatpush1.msra.mxu0 0.0
          %1740 = vmatprep.subr.mxu0 0.0
          %1741 = vmatpush1.msra.mxu0 0.0
          %1742 = vmatprep.subr.mxu0 0.0
          %1743 = vmatpush1.msra.mxu0 0.0
          %1744 = vmatprep.subr.mxu0 0.0
          %1745 = vmatpush1.msra.mxu0 0.0
          %1746 = vmatprep.subr.mxu0 0.0
          %1747 = vmatpush1.msra.mxu0 0.0
          %1748 = vmatprep.subr.mxu0 0.0
          %1749 = vmatpush1.msra.mxu0 0.0
          %1750 = vmatprep.subr.mxu0 0.0
          %1751 = vmatpush1.msra.mxu0 0.0
          %1752 = vmatprep.subr.mxu0 0.0
          %1753 = vmatpush1.msra.mxu0 0.0
          %1754 = vmatprep.subr.mxu0 0.0
          %1755 = vmatpush1.msra.mxu0 0.0
          %1756 = vmatprep.subr.mxu0 0.0
          %1757 = vmatpush1.msra.mxu0 0.0
          %1758 = vmatprep.mubr.f32.mxu0 0.0
          %1759 = vmatmul.mubr.f32.gmra.mrb[0].mxu0 %v1447
          %v1760 = vpop.f32.mrb[0].mxu0
          %v1761 = vadd.f32 0.0, %v1760
          %v1762 = vpop.f32.mrb[0].mxu0
          %1763 = vdwg.mxu0
          %v1764 = vlog2.pop %v1761
          %v1765 = vmul.f32 %v1764, 0.6931472
          %v1766 = vadd.f32 %v1765, %v1687
          %v1767 = vadd.f32 %v1766, %v1529
          %v1768 = vadd.f32 %v1767, %v1660
          %v1769 = vsel %vm1679, 1, 0
          %v1770 = vlaneseq
          %v1771 = vshrl.u32 %v1770, 7
          %v1772 = vsub.s32 0, %v1771
          %v1773 = vrot.slane %v1769, %v1772
          %vm1774 = vcmp.eq.s32.totalorder %v1773, 1
          %v1775 = vsel %vm1774, %v1768, %v1657
          %v1776 = vld [vmem:[%s391 + $0x3] sm:$0x1]
          %s1777 = scalar_lea.vmem %s376, 24
          %v1778 = vld [vmem:[%s1777] sm:$0x1f]
          %v1779 = vld [vmem:[%s384 + $0x3] sm:$0x1]
          %v1780 = vlaneseq
          %v1781 = vshrl.u32 %v1780, 7
          %v1782 = vsub.s32 0, %v1781
          %v1783 = vrot.slane %v1779, %v1782
          %vm1784 = vcmp.eq.s32.totalorder %v1783, %v396
          %v1785 = vsel %vm1784, 1, 0
          %v1786 = vcvt.s32.f32 %v1785
          %v1787 = vmul.f32 %v1786, %v1778
          %v1788 = vsel %vm1423, %v1787, 0.0
          %v1789 = vrot.slane %v1788, 4
          %v1790 = vadd.f32 %v1788, %v1789
          %v1791 = vrot.slane %v1790, 2
          %v1792 = vadd.f32 %v1790, %v1791
          %v1793 = vrot.slane %v1792, 1
          %v1794 = vadd.f32 %v1792, %v1793
          %v1795 = vmul.f32 %v1794, %v1776
          %v1796 = vadd.f32 %v1678, %v1795
          %vm1797 = vcmp.gt.f32.partialorder %v1776, 0.0
          %v1798 = vsel %vm1797, %v1779, %v1680
          %v1799 = vsel %vm1423, %v1775, -inf
          %v1800 = vrot.slane %v1799, 4
          %v1801 = vmax.f32 %v1799, %v1800
          %v1802 = vrot.slane %v1801, 2
          %v1803 = vmax.f32 %v1801, %v1802
          %v1804 = vrot.slane %v1803, 1
          %v1805 = vmax.f32 %v1803, %v1804
          %v1806 = vsub.f32 %v1775, %v1805
          %v1807 = vmul.f32 %v1806, 1.442695
          %v1808 = vpow.pop %v1807
          %v1810 = vsel %vm1449, %v1808, 0
          %1812 = vmatprep.subr.mxu0 0.0
          %1813 = vmatpush1.msra.mxu0 %v1810
          %1814 = vmatprep.subr.mxu0 0.0
          %1815 = vmatpush1.msra.mxu0 0.0
          %1816 = vmatprep.subr.mxu0 0.0
          %1817 = vmatpush1.msra.mxu0 0.0
          %1818 = vmatprep.subr.mxu0 0.0
          %1819 = vmatpush1.msra.mxu0 0.0
          %1820 = vmatprep.subr.mxu0 0.0
          %1821 = vmatpush1.msra.mxu0 0.0
          %1822 = vmatprep.subr.mxu0 0.0
          %1823 = vmatpush1.msra.mxu0 0.0
          %1824 = vmatprep.subr.mxu0 0.0
          %1825 = vmatpush1.msra.mxu0 0.0
          %1826 = vmatprep.subr.mxu0 0.0
          %1827 = vmatpush1.msra.mxu0 0.0
          %1828 = vmatprep.subr.mxu0 0.0
          %1829 = vmatpush1.msra.mxu0 0.0
          %1830 = vmatprep.subr.mxu0 0.0
          %1831 = vmatpush1.msra.mxu0 0.0
          %1832 = vmatprep.subr.mxu0 0.0
          %1833 = vmatpush1.msra.mxu0 0.0
          %1834 = vmatprep.subr.mxu0 0.0
          %1835 = vmatpush1.msra.mxu0 0.0
          %1836 = vmatprep.subr.mxu0 0.0
          %1837 = vmatpush1.msra.mxu0 0.0
          %1838 = vmatprep.subr.mxu0 0.0
          %1839 = vmatpush1.msra.mxu0 0.0
          %1840 = vmatprep.subr.mxu0 0.0
          %1841 = vmatpush1.msra.mxu0 0.0
          %1842 = vmatprep.subr.mxu0 0.0
          %1843 = vmatpush1.msra.mxu0 0.0
          %1844 = vmatprep.subr.mxu0 0.0
          %1845 = vmatpush1.msra.mxu0 0.0
          %1846 = vmatprep.subr.mxu0 0.0
          %1847 = vmatpush1.msra.mxu0 0.0
          %1848 = vmatprep.subr.mxu0 0.0
          %1849 = vmatpush1.msra.mxu0 0.0
          %1850 = vmatprep.subr.mxu0 0.0
          %1851 = vmatpush1.msra.mxu0 0.0
          %1852 = vmatprep.subr.mxu0 0.0
          %1853 = vmatpush1.msra.mxu0 0.0
          %1854 = vmatprep.subr.mxu0 0.0
          %1855 = vmatpush1.msra.mxu0 0.0
          %1856 = vmatprep.subr.mxu0 0.0
          %1857 = vmatpush1.msra.mxu0 0.0
          %1858 = vmatprep.subr.mxu0 0.0
          %1859 = vmatpush1.msra.mxu0 0.0
          %1860 = vmatprep.subr.mxu0 0.0
          %1861 = vmatpush1.msra.mxu0 0.0
          %1862 = vmatprep.subr.mxu0 0.0
          %1863 = vmatpush1.msra.mxu0 0.0
          %1864 = vmatprep.subr.mxu0 0.0
          %1865 = vmatpush1.msra.mxu0 0.0
          %1866 = vmatprep.subr.mxu0 0.0
          %1867 = vmatpush1.msra.mxu0 0.0
          %1868 = vmatprep.subr.mxu0 0.0
          %1869 = vmatpush1.msra.mxu0 0.0
          %1870 = vmatprep.subr.mxu0 0.0
          %1871 = vmatpush1.msra.mxu0 0.0
          %1872 = vmatprep.subr.mxu0 0.0
          %1873 = vmatpush1.msra.mxu0 0.0
          %1874 = vmatprep.subr.mxu0 0.0
          %1875 = vmatpush1.msra.mxu0 0.0
          %1876 = vmatprep.mubr.f32.mxu0 0.0
          %1877 = vmatmul.mubr.f32.gmra.mrb[0].mxu0 %v1447
          %v1878 = vpop.f32.mrb[0].mxu0
          %v1879 = vadd.f32 0.0, %v1878
          %v1880 = vpop.f32.mrb[0].mxu0
          %1881 = vdwg.mxu0
          %v1882 = vlog2.pop %v1879
          %v1883 = vmul.f32 %v1882, 0.6931472
          %v1884 = vadd.f32 %v1883, %v1805
          %v1885 = vadd.f32 %v1884, %v1529
          %v1886 = vadd.f32 %v1885, %v1778
          %v1887 = vsel %vm1797, 1, 0
          %v1888 = vlaneseq
          %v1889 = vshrl.u32 %v1888, 7
          %v1890 = vsub.s32 0, %v1889
          %v1891 = vrot.slane %v1887, %v1890
          %vm1892 = vcmp.eq.s32.totalorder %v1891, 1
          %v1893 = vsel %vm1892, %v1886, %v1775
          %v1894 = vld [vmem:[%s391 + $0x4] sm:$0x1]
          %s1895 = scalar_lea.vmem %s376, 32
          %v1896 = vld [vmem:[%s1895] sm:$0x1f]
          %v1897 = vld [vmem:[%s384 + $0x4] sm:$0x1]
          %v1898 = vlaneseq
          %v1899 = vshrl.u32 %v1898, 7
          %v1900 = vsub.s32 0, %v1899
          %v1901 = vrot.slane %v1897, %v1900
          %vm1902 = vcmp.eq.s32.totalorder %v1901, %v396
          %v1903 = vsel %vm1902, 1, 0
          %v1904 = vcvt.s32.f32 %v1903
          %v1905 = vmul.f32 %v1904, %v1896
          %v1906 = vsel %vm1423, %v1905, 0.0
          %v1907 = vrot.slane %v1906, 4
          %v1908 = vadd.f32 %v1906, %v1907
          %v1909 = vrot.slane %v1908, 2
          %v1910 = vadd.f32 %v1908, %v1909
          %v1911 = vrot.slane %v1910, 1
          %v1912 = vadd.f32 %v1910, %v1911
          %v1913 = vmul.f32 %v1912, %v1894
          %v1914 = vadd.f32 %v1796, %v1913
          %vm1915 = vcmp.gt.f32.partialorder %v1894, 0.0
          %v1916 = vsel %vm1915, %v1897, %v1798
          %v1917 = vsel %vm1423, %v1893, -inf
          %v1918 = vrot.slane %v1917, 4
          %v1919 = vmax.f32 %v1917, %v1918
          %v1920 = vrot.slane %v1919, 2
          %v1921 = vmax.f32 %v1919, %v1920
          %v1922 = vrot.slane %v1921, 1
          %v1923 = vmax.f32 %v1921, %v1922
          %v1924 = vsub.f32 %v1893, %v1923
          %v1925 = vmul.f32 %v1924, 1.442695
          %v1926 = vpow.pop %v1925
          %v1928 = vsel %vm1449, %v1926, 0
          %1930 = vmatprep.subr.mxu0 0.0
          %1931 = vmatpush1.msra.mxu0 %v1928
          %1932 = vmatprep.subr.mxu0 0.0
          %1933 = vmatpush1.msra.mxu0 0.0
          %1934 = vmatprep.subr.mxu0 0.0
          %1935 = vmatpush1.msra.mxu0 0.0
          %1936 = vmatprep.subr.mxu0 0.0
          %1937 = vmatpush1.msra.mxu0 0.0
          %1938 = vmatprep.subr.mxu0 0.0
          %1939 = vmatpush1.msra.mxu0 0.0
          %1940 = vmatprep.subr.mxu0 0.0
          %1941 = vmatpush1.msra.mxu0 0.0
          %1942 = vmatprep.subr.mxu0 0.0
          %1943 = vmatpush1.msra.mxu0 0.0
          %1944 = vmatprep.subr.mxu0 0.0
          %1945 = vmatpush1.msra.mxu0 0.0
          %1946 = vmatprep.subr.mxu0 0.0
          %1947 = vmatpush1.msra.mxu0 0.0
          %1948 = vmatprep.subr.mxu0 0.0
          %1949 = vmatpush1.msra.mxu0 0.0
          %1950 = vmatprep.subr.mxu0 0.0
          %1951 = vmatpush1.msra.mxu0 0.0
          %1952 = vmatprep.subr.mxu0 0.0
          %1953 = vmatpush1.msra.mxu0 0.0
          %1954 = vmatprep.subr.mxu0 0.0
          %1955 = vmatpush1.msra.mxu0 0.0
          %1956 = vmatprep.subr.mxu0 0.0
          %1957 = vmatpush1.msra.mxu0 0.0
          %1958 = vmatprep.subr.mxu0 0.0
          %1959 = vmatpush1.msra.mxu0 0.0
          %1960 = vmatprep.subr.mxu0 0.0
          %1961 = vmatpush1.msra.mxu0 0.0
          %1962 = vmatprep.subr.mxu0 0.0
          %1963 = vmatpush1.msra.mxu0 0.0
          %1964 = vmatprep.subr.mxu0 0.0
          %1965 = vmatpush1.msra.mxu0 0.0
          %1966 = vmatprep.subr.mxu0 0.0
          %1967 = vmatpush1.msra.mxu0 0.0
          %1968 = vmatprep.subr.mxu0 0.0
          %1969 = vmatpush1.msra.mxu0 0.0
          %1970 = vmatprep.subr.mxu0 0.0
          %1971 = vmatpush1.msra.mxu0 0.0
          %1972 = vmatprep.subr.mxu0 0.0
          %1973 = vmatpush1.msra.mxu0 0.0
          %1974 = vmatprep.subr.mxu0 0.0
          %1975 = vmatpush1.msra.mxu0 0.0
          %1976 = vmatprep.subr.mxu0 0.0
          %1977 = vmatpush1.msra.mxu0 0.0
          %1978 = vmatprep.subr.mxu0 0.0
          %1979 = vmatpush1.msra.mxu0 0.0
          %1980 = vmatprep.subr.mxu0 0.0
          %1981 = vmatpush1.msra.mxu0 0.0
          %1982 = vmatprep.subr.mxu0 0.0
          %1983 = vmatpush1.msra.mxu0 0.0
          %1984 = vmatprep.subr.mxu0 0.0
          %1985 = vmatpush1.msra.mxu0 0.0
          %1986 = vmatprep.subr.mxu0 0.0
          %1987 = vmatpush1.msra.mxu0 0.0
          %1988 = vmatprep.subr.mxu0 0.0
          %1989 = vmatpush1.msra.mxu0 0.0
          %1990 = vmatprep.subr.mxu0 0.0
          %1991 = vmatpush1.msra.mxu0 0.0
          %1992 = vmatprep.subr.mxu0 0.0
          %1993 = vmatpush1.msra.mxu0 0.0
          %1994 = vmatprep.mubr.f32.mxu0 0.0
          %1995 = vmatmul.mubr.f32.gmra.mrb[0].mxu0 %v1447
          %v1996 = vpop.f32.mrb[0].mxu0
          %v1997 = vadd.f32 0.0, %v1996
          %v1998 = vpop.f32.mrb[0].mxu0
          %1999 = vdwg.mxu0
          %v2000 = vlog2.pop %v1997
          %v2001 = vmul.f32 %v2000, 0.6931472
          %v2002 = vadd.f32 %v2001, %v1923
          %v2003 = vadd.f32 %v2002, %v1529
          %v2004 = vadd.f32 %v2003, %v1896
          %v2005 = vsel %vm1915, 1, 0
          %v2006 = vlaneseq
          %v2007 = vshrl.u32 %v2006, 7
          %v2008 = vsub.s32 0, %v2007
          %v2009 = vrot.slane %v2005, %v2008
          %vm2010 = vcmp.eq.s32.totalorder %v2009, 1
          %v2011 = vsel %vm2010, %v2004, %v1893
          %v2012 = vld [vmem:[%s391 + $0x5] sm:$0x1]
          %s2013 = scalar_lea.vmem %s376, 40
          %v2014 = vld [vmem:[%s2013] sm:$0x1f]
          %v2015 = vld [vmem:[%s384 + $0x5] sm:$0x1]
          %v2016 = vlaneseq
          %v2017 = vshrl.u32 %v2016, 7
          %v2018 = vsub.s32 0, %v2017
          %v2019 = vrot.slane %v2015, %v2018
          %vm2020 = vcmp.eq.s32.totalorder %v2019, %v396
          %v2021 = vsel %vm2020, 1, 0
          %v2022 = vcvt.s32.f32 %v2021
          %v2023 = vmul.f32 %v2022, %v2014
          %v2024 = vsel %vm1423, %v2023, 0.0
          %v2025 = vrot.slane %v2024, 4
          %v2026 = vadd.f32 %v2024, %v2025
          %v2027 = vrot.slane %v2026, 2
          %v2028 = vadd.f32 %v2026, %v2027
          %v2029 = vrot.slane %v2028, 1
          %v2030 = vadd.f32 %v2028, %v2029
          %v2031 = vmul.f32 %v2030, %v2012
          %v2032 = vadd.f32 %v1914, %v2031
          %vm2033 = vcmp.gt.f32.partialorder %v2012, 0.0
          %v2034 = vsel %vm2033, %v2015, %v1916
          %v2035 = vsel %vm1423, %v2011, -inf
          %v2036 = vrot.slane %v2035, 4
          %v2037 = vmax.f32 %v2035, %v2036
          %v2038 = vrot.slane %v2037, 2
          %v2039 = vmax.f32 %v2037, %v2038
          %v2040 = vrot.slane %v2039, 1
          %v2041 = vmax.f32 %v2039, %v2040
          %v2042 = vsub.f32 %v2011, %v2041
          %v2043 = vmul.f32 %v2042, 1.442695
          %v2044 = vpow.pop %v2043
          %v2046 = vsel %vm1449, %v2044, 0
          %2048 = vmatprep.subr.mxu0 0.0
          %2049 = vmatpush1.msra.mxu0 %v2046
          %2050 = vmatprep.subr.mxu0 0.0
          %2051 = vmatpush1.msra.mxu0 0.0
          %2052 = vmatprep.subr.mxu0 0.0
          %2053 = vmatpush1.msra.mxu0 0.0
          %2054 = vmatprep.subr.mxu0 0.0
          %2055 = vmatpush1.msra.mxu0 0.0
          %2056 = vmatprep.subr.mxu0 0.0
          %2057 = vmatpush1.msra.mxu0 0.0
          %2058 = vmatprep.subr.mxu0 0.0
          %2059 = vmatpush1.msra.mxu0 0.0
          %2060 = vmatprep.subr.mxu0 0.0
          %2061 = vmatpush1.msra.mxu0 0.0
          %2062 = vmatprep.subr.mxu0 0.0
          %2063 = vmatpush1.msra.mxu0 0.0
          %2064 = vmatprep.subr.mxu0 0.0
          %2065 = vmatpush1.msra.mxu0 0.0
          %2066 = vmatprep.subr.mxu0 0.0
          %2067 = vmatpush1.msra.mxu0 0.0
          %2068 = vmatprep.subr.mxu0 0.0
          %2069 = vmatpush1.msra.mxu0 0.0
          %2070 = vmatprep.subr.mxu0 0.0
          %2071 = vmatpush1.msra.mxu0 0.0
          %2072 = vmatprep.subr.mxu0 0.0
          %2073 = vmatpush1.msra.mxu0 0.0
          %2074 = vmatprep.subr.mxu0 0.0
          %2075 = vmatpush1.msra.mxu0 0.0
          %2076 = vmatprep.subr.mxu0 0.0
          %2077 = vmatpush1.msra.mxu0 0.0
          %2078 = vmatprep.subr.mxu0 0.0
          %2079 = vmatpush1.msra.mxu0 0.0
          %2080 = vmatprep.subr.mxu0 0.0
          %2081 = vmatpush1.msra.mxu0 0.0
          %2082 = vmatprep.subr.mxu0 0.0
          %2083 = vmatpush1.msra.mxu0 0.0
          %2084 = vmatprep.subr.mxu0 0.0
          %2085 = vmatpush1.msra.mxu0 0.0
          %2086 = vmatprep.subr.mxu0 0.0
          %2087 = vmatpush1.msra.mxu0 0.0
          %2088 = vmatprep.subr.mxu0 0.0
          %2089 = vmatpush1.msra.mxu0 0.0
          %2090 = vmatprep.subr.mxu0 0.0
          %2091 = vmatpush1.msra.mxu0 0.0
          %2092 = vmatprep.subr.mxu0 0.0
          %2093 = vmatpush1.msra.mxu0 0.0
          %2094 = vmatprep.subr.mxu0 0.0
          %2095 = vmatpush1.msra.mxu0 0.0
          %2096 = vmatprep.subr.mxu0 0.0
          %2097 = vmatpush1.msra.mxu0 0.0
          %2098 = vmatprep.subr.mxu0 0.0
          %2099 = vmatpush1.msra.mxu0 0.0
          %2100 = vmatprep.subr.mxu0 0.0
          %2101 = vmatpush1.msra.mxu0 0.0
          %2102 = vmatprep.subr.mxu0 0.0
          %2103 = vmatpush1.msra.mxu0 0.0
          %2104 = vmatprep.subr.mxu0 0.0
          %2105 = vmatpush1.msra.mxu0 0.0
          %2106 = vmatprep.subr.mxu0 0.0
          %2107 = vmatpush1.msra.mxu0 0.0
          %2108 = vmatprep.subr.mxu0 0.0
          %2109 = vmatpush1.msra.mxu0 0.0
          %2110 = vmatprep.subr.mxu0 0.0
          %2111 = vmatpush1.msra.mxu0 0.0
          %2112 = vmatprep.mubr.f32.mxu0 0.0
          %2113 = vmatmul.mubr.f32.gmra.mrb[0].mxu0 %v1447
          %v2114 = vpop.f32.mrb[0].mxu0
          %v2115 = vadd.f32 0.0, %v2114
          %v2116 = vpop.f32.mrb[0].mxu0
          %2117 = vdwg.mxu0
          %v2118 = vlog2.pop %v2115
          %v2119 = vmul.f32 %v2118, 0.6931472
          %v2120 = vadd.f32 %v2119, %v2041
          %v2121 = vadd.f32 %v2120, %v1529
          %v2122 = vadd.f32 %v2121, %v2014
          %v2123 = vsel %vm2033, 1, 0
          %v2124 = vlaneseq
          %v2125 = vshrl.u32 %v2124, 7
          %v2126 = vsub.s32 0, %v2125
          %v2127 = vrot.slane %v2123, %v2126
          %vm2128 = vcmp.eq.s32.totalorder %v2127, 1
          %v2129 = vsel %vm2128, %v2122, %v2011
          %v2130 = vld [vmem:[%s391 + $0x6] sm:$0x1]
          %s2131 = scalar_lea.vmem %s376, 48
          %v2132 = vld [vmem:[%s2131] sm:$0x1f]
          %v2133 = vld [vmem:[%s384 + $0x6] sm:$0x1]
          %v2134 = vlaneseq
          %v2135 = vshrl.u32 %v2134, 7
          %v2136 = vsub.s32 0, %v2135
          %v2137 = vrot.slane %v2133, %v2136
          %vm2138 = vcmp.eq.s32.totalorder %v2137, %v396
          %v2139 = vsel %vm2138, 1, 0
          %v2140 = vcvt.s32.f32 %v2139
          %v2141 = vmul.f32 %v2140, %v2132
          %v2142 = vsel %vm1423, %v2141, 0.0
          %v2143 = vrot.slane %v2142, 4
          %v2144 = vadd.f32 %v2142, %v2143
          %v2145 = vrot.slane %v2144, 2
          %v2146 = vadd.f32 %v2144, %v2145
          %v2147 = vrot.slane %v2146, 1
          %v2148 = vadd.f32 %v2146, %v2147
          %v2149 = vmul.f32 %v2148, %v2130
          %v2150 = vadd.f32 %v2032, %v2149
          %vm2151 = vcmp.gt.f32.partialorder %v2130, 0.0
          %v2152 = vsel %vm2151, %v2133, %v2034
          %v2153 = vsel %vm1423, %v2129, -inf
          %v2154 = vrot.slane %v2153, 4
          %v2155 = vmax.f32 %v2153, %v2154
          %v2156 = vrot.slane %v2155, 2
          %v2157 = vmax.f32 %v2155, %v2156
          %v2158 = vrot.slane %v2157, 1
          %v2159 = vmax.f32 %v2157, %v2158
          %v2160 = vsub.f32 %v2129, %v2159
          %v2161 = vmul.f32 %v2160, 1.442695
          %v2162 = vpow.pop %v2161
          %v2164 = vsel %vm1449, %v2162, 0
          %2166 = vmatprep.subr.mxu0 0.0
          %2167 = vmatpush1.msra.mxu0 %v2164
          %2168 = vmatprep.subr.mxu0 0.0
          %2169 = vmatpush1.msra.mxu0 0.0
          %2170 = vmatprep.subr.mxu0 0.0
          %2171 = vmatpush1.msra.mxu0 0.0
          %2172 = vmatprep.subr.mxu0 0.0
          %2173 = vmatpush1.msra.mxu0 0.0
          %2174 = vmatprep.subr.mxu0 0.0
          %2175 = vmatpush1.msra.mxu0 0.0
          %2176 = vmatprep.subr.mxu0 0.0
          %2177 = vmatpush1.msra.mxu0 0.0
          %2178 = vmatprep.subr.mxu0 0.0
          %2179 = vmatpush1.msra.mxu0 0.0
          %2180 = vmatprep.subr.mxu0 0.0
          %2181 = vmatpush1.msra.mxu0 0.0
          %2182 = vmatprep.subr.mxu0 0.0
          %2183 = vmatpush1.msra.mxu0 0.0
          %2184 = vmatprep.subr.mxu0 0.0
          %2185 = vmatpush1.msra.mxu0 0.0
          %2186 = vmatprep.subr.mxu0 0.0
          %2187 = vmatpush1.msra.mxu0 0.0
          %2188 = vmatprep.subr.mxu0 0.0
          %2189 = vmatpush1.msra.mxu0 0.0
          %2190 = vmatprep.subr.mxu0 0.0
          %2191 = vmatpush1.msra.mxu0 0.0
          %2192 = vmatprep.subr.mxu0 0.0
          %2193 = vmatpush1.msra.mxu0 0.0
          %2194 = vmatprep.subr.mxu0 0.0
          %2195 = vmatpush1.msra.mxu0 0.0
          %2196 = vmatprep.subr.mxu0 0.0
          %2197 = vmatpush1.msra.mxu0 0.0
          %2198 = vmatprep.subr.mxu0 0.0
          %2199 = vmatpush1.msra.mxu0 0.0
          %2200 = vmatprep.subr.mxu0 0.0
          %2201 = vmatpush1.msra.mxu0 0.0
          %2202 = vmatprep.subr.mxu0 0.0
          %2203 = vmatpush1.msra.mxu0 0.0
          %2204 = vmatprep.subr.mxu0 0.0
          %2205 = vmatpush1.msra.mxu0 0.0
          %2206 = vmatprep.subr.mxu0 0.0
          %2207 = vmatpush1.msra.mxu0 0.0
          %2208 = vmatprep.subr.mxu0 0.0
          %2209 = vmatpush1.msra.mxu0 0.0
          %2210 = vmatprep.subr.mxu0 0.0
          %2211 = vmatpush1.msra.mxu0 0.0
          %2212 = vmatprep.subr.mxu0 0.0
          %2213 = vmatpush1.msra.mxu0 0.0
          %2214 = vmatprep.subr.mxu0 0.0
          %2215 = vmatpush1.msra.mxu0 0.0
          %2216 = vmatprep.subr.mxu0 0.0
          %2217 = vmatpush1.msra.mxu0 0.0
          %2218 = vmatprep.subr.mxu0 0.0
          %2219 = vmatpush1.msra.mxu0 0.0
          %2220 = vmatprep.subr.mxu0 0.0
          %2221 = vmatpush1.msra.mxu0 0.0
          %2222 = vmatprep.subr.mxu0 0.0
          %2223 = vmatpush1.msra.mxu0 0.0
          %2224 = vmatprep.subr.mxu0 0.0
          %2225 = vmatpush1.msra.mxu0 0.0
          %2226 = vmatprep.subr.mxu0 0.0
          %2227 = vmatpush1.msra.mxu0 0.0
          %2228 = vmatprep.subr.mxu0 0.0
          %2229 = vmatpush1.msra.mxu0 0.0
          %2230 = vmatprep.mubr.f32.mxu0 0.0
          %2231 = vmatmul.mubr.f32.gmra.mrb[0].mxu0 %v1447
          %v2232 = vpop.f32.mrb[0].mxu0
          %v2233 = vadd.f32 0.0, %v2232
          %v2234 = vpop.f32.mrb[0].mxu0
          %2235 = vdwg.mxu0
          %v2236 = vlog2.pop %v2233
          %v2237 = vmul.f32 %v2236, 0.6931472
          %v2238 = vadd.f32 %v2237, %v2159
          %v2239 = vadd.f32 %v2238, %v1529
          %v2240 = vadd.f32 %v2239, %v2132
          %v2241 = vsel %vm2151, 1, 0
          %v2242 = vlaneseq
          %v2243 = vshrl.u32 %v2242, 7
          %v2244 = vsub.s32 0, %v2243
          %v2245 = vrot.slane %v2241, %v2244
          %vm2246 = vcmp.eq.s32.totalorder %v2245, 1
          %v2247 = vsel %vm2246, %v2240, %v2129
          %v2248 = vld [vmem:[%s391 + $0x7] sm:$0x1]
          %s2249 = scalar_lea.vmem %s376, 56
          %v2250 = vld [vmem:[%s2249] sm:$0x1f]
          %v2251 = vld [vmem:[%s384 + $0x7] sm:$0x1]
          %v2252 = vlaneseq
          %v2253 = vshrl.u32 %v2252, 7
          %v2254 = vsub.s32 0, %v2253
          %v2255 = vrot.slane %v2251, %v2254
          %vm2256 = vcmp.eq.s32.totalorder %v2255, %v396
          %v2257 = vsel %vm2256, 1, 0
          %v2258 = vcvt.s32.f32 %v2257
          %v2259 = vmul.f32 %v2258, %v2250
          %v2260 = vsel %vm1423, %v2259, 0.0
          %v2261 = vrot.slane %v2260, 4
          %v2262 = vadd.f32 %v2260, %v2261
          %v2263 = vrot.slane %v2262, 2
          %v2264 = vadd.f32 %v2262, %v2263
          %v2265 = vrot.slane %v2264, 1
          %v2266 = vadd.f32 %v2264, %v2265
          %v2267 = vmul.f32 %v2266, %v2248
          %v2268 = vadd.f32 %v2150, %v2267
          %vm2269 = vcmp.gt.f32.partialorder %v2248, 0.0
          %v2270 = vsel %vm2269, %v2251, %v2152
          %v2271 = vsel %vm1423, %v2247, -inf
          %v2272 = vrot.slane %v2271, 4
          %v2273 = vmax.f32 %v2271, %v2272
          %v2274 = vrot.slane %v2273, 2
          %v2275 = vmax.f32 %v2273, %v2274
          %v2276 = vrot.slane %v2275, 1
          %v2277 = vmax.f32 %v2275, %v2276
          %v2278 = vsub.f32 %v2247, %v2277
          %v2279 = vmul.f32 %v2278, 1.442695
          %v2280 = vpow.pop %v2279
          %v2282 = vsel %vm1449, %v2280, 0
          %2284 = vmatprep.subr.mxu0 0.0
          %2285 = vmatpush1.msra.mxu0 %v2282
          %2286 = vmatprep.subr.mxu0 0.0
          %2287 = vmatpush1.msra.mxu0 0.0
          %2288 = vmatprep.subr.mxu0 0.0
          %2289 = vmatpush1.msra.mxu0 0.0
          %2290 = vmatprep.subr.mxu0 0.0
          %2291 = vmatpush1.msra.mxu0 0.0
          %2292 = vmatprep.subr.mxu0 0.0
          %2293 = vmatpush1.msra.mxu0 0.0
          %2294 = vmatprep.subr.mxu0 0.0
          %2295 = vmatpush1.msra.mxu0 0.0
          %2296 = vmatprep.subr.mxu0 0.0
          %2297 = vmatpush1.msra.mxu0 0.0
          %2298 = vmatprep.subr.mxu0 0.0
          %2299 = vmatpush1.msra.mxu0 0.0
          %2300 = vmatprep.subr.mxu0 0.0
          %2301 = vmatpush1.msra.mxu0 0.0
          %2302 = vmatprep.subr.mxu0 0.0
          %2303 = vmatpush1.msra.mxu0 0.0
          %2304 = vmatprep.subr.mxu0 0.0
          %2305 = vmatpush1.msra.mxu0 0.0
          %2306 = vmatprep.subr.mxu0 0.0
          %2307 = vmatpush1.msra.mxu0 0.0
          %2308 = vmatprep.subr.mxu0 0.0
          %2309 = vmatpush1.msra.mxu0 0.0
          %2310 = vmatprep.subr.mxu0 0.0
          %2311 = vmatpush1.msra.mxu0 0.0
          %2312 = vmatprep.subr.mxu0 0.0
          %2313 = vmatpush1.msra.mxu0 0.0
          %2314 = vmatprep.subr.mxu0 0.0
          %2315 = vmatpush1.msra.mxu0 0.0
          %2316 = vmatprep.subr.mxu0 0.0
          %2317 = vmatpush1.msra.mxu0 0.0
          %2318 = vmatprep.subr.mxu0 0.0
          %2319 = vmatpush1.msra.mxu0 0.0
          %2320 = vmatprep.subr.mxu0 0.0
          %2321 = vmatpush1.msra.mxu0 0.0
          %2322 = vmatprep.subr.mxu0 0.0
          %2323 = vmatpush1.msra.mxu0 0.0
          %2324 = vmatprep.subr.mxu0 0.0
          %2325 = vmatpush1.msra.mxu0 0.0
          %2326 = vmatprep.subr.mxu0 0.0
          %2327 = vmatpush1.msra.mxu0 0.0
          %2328 = vmatprep.subr.mxu0 0.0
          %2329 = vmatpush1.msra.mxu0 0.0
          %2330 = vmatprep.subr.mxu0 0.0
          %2331 = vmatpush1.msra.mxu0 0.0
          %2332 = vmatprep.subr.mxu0 0.0
          %2333 = vmatpush1.msra.mxu0 0.0
          %2334 = vmatprep.subr.mxu0 0.0
          %2335 = vmatpush1.msra.mxu0 0.0
          %2336 = vmatprep.subr.mxu0 0.0
          %2337 = vmatpush1.msra.mxu0 0.0
          %2338 = vmatprep.subr.mxu0 0.0
          %2339 = vmatpush1.msra.mxu0 0.0
          %2340 = vmatprep.subr.mxu0 0.0
          %2341 = vmatpush1.msra.mxu0 0.0
          %2342 = vmatprep.subr.mxu0 0.0
          %2343 = vmatpush1.msra.mxu0 0.0
          %2344 = vmatprep.subr.mxu0 0.0
          %2345 = vmatpush1.msra.mxu0 0.0
          %2346 = vmatprep.subr.mxu0 0.0
          %2347 = vmatpush1.msra.mxu0 0.0
          %2348 = vmatprep.mubr.f32.mxu0 0.0
          %2349 = vmatmul.mubr.f32.gmra.mrb[0].mxu0 %v1447
          %v2350 = vpop.f32.mrb[0].mxu0
          %v2351 = vadd.f32 0.0, %v2350
          %v2352 = vpop.f32.mrb[0].mxu0
          %2353 = vdwg.mxu0
          %v2354 = vlog2.pop %v2351
          %v2355 = vmul.f32 %v2354, 0.6931472
          %v2356 = vadd.f32 %v2355, %v2277
          %v2357 = vadd.f32 %v2356, %v1529
          %v2358 = vadd.f32 %v2357, %v2250
          %v2359 = vsel %vm2269, 1, 0
          %v2360 = vlaneseq
          %v2361 = vshrl.u32 %v2360, 7
          %v2362 = vsub.s32 0, %v2361
          %v2363 = vrot.slane %v2359, %v2362
          %vm2364 = vcmp.eq.s32.totalorder %v2363, 1
          %v2365 = vsel %vm2364, %v2358, %v2247
          %2366 = vst.msk [vmem:[#allocation2] sm:$0x1f] %vm1423, %v2365
          %vm2367 = vcmask 24576
          %2368 = vst.msk [vmem:[#allocation3] sm:$0x1] %vm2367, %v2268
          %2369 = vst.msk [vmem:[#allocation4] sm:$0x1] %vm2367, %v2270
        $region68: #{tpu_custom_call.1} parent=51 // pred_fallthru
          _
        %v2370 = vld [vmem:[%s384 + $0x7] sm:$0x1]
        %vm2371 = vcmask 24576
        %2372 = vst.msk [vmem:[#allocation5] sm:$0x1] %vm2371, %v2370
        %p2373 = scmp.eq.s32.totalorder %s26, 2
        // Predicated region
        $region69: #{tpu_custom_call.1} parent=51 // pred_check
          %p2374 = pneg %p2373
        $region70: #{tpu_custom_call.1} parent=51 // pred_check_branch
          %2376 = sbr.rel (%p2374) target = $region72
        $region71: #{tpu_custom_call.1} parent=51 // pred_region
          %v2377 = vld [vmem:[%s4] sm:$0x1f]
          %v2378 = vld [vmem:[#allocation4] sm:$0x1]
          %v2379 = vlaneseq
          %v2380 = vshrl.u32 %v2379, 7
          %v2381 = vsub.s32 0, %v2380
          %v2382 = vrot.slane %v2378, %v2381
          %vm2383 = vcmp.eq.s32.totalorder %v2382, %v396
          %v2384 = vsel %vm2383, 1, 0
          %v2385 = vcvt.s32.f32 %v2384
          %v2386 = vld [vmem:[#allocation3] sm:$0x1]
          %2388 = vset.pattern.permute.xlu0 0
          %2389 = vperm.xlu0 %2388, %v2377
          %v2390 = vpop.permute.xlu0 %2389
          %v2392 = vmul.f32 %v2390, %v2385
          %vm2393 = vcmask 28672
          %v2394 = vsel %vm2393, %v2392, 0.0
          %v2395 = vrot.slane %v2394, 4
          %v2396 = vadd.f32 %v2394, %v2395
          %v2397 = vrot.slane %v2396, 2
          %v2398 = vadd.f32 %v2396, %v2397
          %v2399 = vrot.slane %v2398, 1
          %v2400 = vadd.f32 %v2398, %v2399
          %v2401 = vadd.f32 %v2386, %v2400
          %v2402 = vld [vmem:[#allocation2] sm:$0x1f]
          %v2403 = vadd.f32 %v2402, %v2390
          %v2404 = vsel %vm2393, %v2403, -inf
          %v2405 = vrot.slane %v2404, 4
          %v2406 = vmax.f32 %v2404, %v2405
          %v2407 = vrot.slane %v2406, 2
          %v2408 = vmax.f32 %v2406, %v2407
          %v2409 = vrot.slane %v2408, 1
          %v2410 = vmax.f32 %v2408, %v2409
          %v2411 = vsub.f32 %v2403, %v2410
          %v2412 = vmul.f32 %v2411, 1.442695
          %v2413 = vpow.pop %v2412
          %v2414 = vsel %vm2393, %v2413, 0.0
          %v2415 = vrot.slane %v2414, 4
          %v2416 = vadd.f32 %v2414, %v2415
          %v2417 = vrot.slane %v2416, 2
          %v2418 = vadd.f32 %v2416, %v2417
          %v2419 = vrot.slane %v2418, 1
          %v2420 = vadd.f32 %v2418, %v2419
          %v2421 = vlog2.pop %v2420
          %v2422 = vmul.f32 %v2421, 0.6931472
          %v2423 = vadd.f32 %v2410, %v2422
          %v2424 = vsub.f32 %v2401, %v2423
          %2425 = vst.msk [vmem:[#allocation9] sm:$0x1] %vm2371, %v2424
        $region72: #{tpu_custom_call.1} parent=51 // pred_fallthru
          _
        // Predicated region
        $region73: #{tpu_custom_call.1} parent=51 // pred_check
          %p2426 = pneg %p240
        $region74: #{tpu_custom_call.1} parent=51 // pred_check_branch
          %2428 = sbr.rel (%p2426) target = $region76
        $region75: #{tpu_custom_call.1} parent=51 // pred_region
          %s2430 = ssub.s32 16, 16
          %2431 = vsyncadd [#allocation7], %s2430
          %s2432 = smul.addr %s25, 16
          %s2433 = scalar_lea.hbm %s8, %s2432
          %s2435 = sshll.u32 [#allocation9], 4
          %s2436 = int_to_ptr.vmem [resolvable:$true] %s2435
          %2438 = dma.vmem_to_hbm [thread:$0]  %s2436, 16, %s2433, [#allocation7]
        $region76: #{tpu_custom_call.1} parent=51 // pred_fallthru
          _
        // Predicated region
        $region77: #{tpu_custom_call.1} parent=51 // pred_check
          %p2439 = pneg %p240
        $region78: #{tpu_custom_call.1} parent=51 // pred_check_branch
          %2441 = sbr.rel (%p2439) target = $region80
        $region79: #{tpu_custom_call.1} parent=51 // pred_region
          %2442 = dma.done [#allocation7], 16
        $region80: #{tpu_custom_call.1} parent=51 // pred_fallthru
          _
      $region52: #{tpu_custom_call.1} parent=5 // pred_fallthru
        _
      %p2443 = scmp.le.s32.totalorder 2, %s16
      // Predicated region
      $region81: #{tpu_custom_call.1} parent=5 // pred_check
        %p2444 = pneg %p2443
      $region82: #{tpu_custom_call.1} parent=5 // pred_check_branch
        %2446 = sbr.rel (%p2444) target = $region84
      $region83: #{tpu_custom_call.1} parent=5 // pred_region
        %s2447 = ssub.s32 %s16, 2
      $region84: #{tpu_custom_call.1} parent=5 // pred_fallthru
        _
    $region6: #{tpu_custom_call.1} parent=1 // loop_footer
      %s20 = sadd.s32 1, %s16
    $region7: #{tpu_custom_call.1} parent=1 // loop_footer_branch
      %15 = sbr.rel target = $region3
    $region8: #{tpu_custom_call.1} parent=1 // loop_exit
      _
    %2448 = vsyncpa [#allocation7], 1
    %s2449 = scalar_lea.sflag [#allocation7], 1
    %2450 = vsyncpa %s2449, 1
    %2451 = vsyncpa [#allocation8], 1
    %s2452 = scalar_lea.sflag [#allocation8], 1
    %2453 = vsyncpa %s2452, 1

</llo_original>
